<compile_context>
chip_gen: v7x
topology: tpu7x:2x2x1
jax: 0.10.0
libtpu: 0.0.40
codegen_flags: <defaults>
</compile_context>

<pallas_src>
import functools

import jax
import jax.numpy as jnp
from jax.experimental import pallas as pl
from jax.experimental.pallas import tpu as pltpu

TILE = 32
LATENT_DIM = 256
NEG_SLOPE = 0.2
TM_MAX = 512            # row-tile cap for the matmul grid


def _round_up(x, m):
    return (x + m - 1) // m * m


def _apply_act(x, act):
    if act == "leaky_relu":
        return jnp.where(x >= 0, x, NEG_SLOPE * x)
    if act == "sigmoid":
        xc = jnp.clip(x, -30.0, 30.0)                         # no exp overflow
        s = pl.reciprocal(1.0 + jnp.exp(-xc), approx=True)    # EUP exp + EUP recip
        return jnp.clip(s, 0.0, 1.0)
    return x


# ----------------------------------------------------------------------------
# Pallas kernels: fused matmul + bias + activation (bf16 MXU, f32 accumulate)
# ----------------------------------------------------------------------------
def _mm_bias_act_kernel(a_ref, w_ref, b_ref, o_ref, *, act):
    acc = jnp.dot(a_ref[...], w_ref[...], preferred_element_type=jnp.float32)
    o_ref[...] = _apply_act(acc + b_ref[...], act).astype(o_ref.dtype)


def _mm2_bias_act_kernel(a_ref, w1_ref, b1_ref, w2_ref, b2_ref, o_ref, *,
                         act1, act2):
    # Two chained matmuls fused in one kernel; the intermediate activation never
    # leaves VMEM/vregs (no HBM round-trip, one launch instead of two).
    h = jnp.dot(a_ref[...], w1_ref[...], preferred_element_type=jnp.float32)
    h = _apply_act(h + b1_ref[...], act1)
    acc = jnp.dot(h.astype(jnp.bfloat16), w2_ref[...],
                  preferred_element_type=jnp.float32)
    o_ref[...] = _apply_act(acc + b2_ref[...], act2).astype(o_ref.dtype)


# ----------------------------------------------------------------------------
# Wrappers: M-tiled grid (exact divisor -> no pad copy, >=2 points when possible),
# weights/bias VMEM-resident full-extent blocks (no K/N padding), bf16 outputs.
# ----------------------------------------------------------------------------
def _pick_tiling(M, tm_max=TM_MAX):
    """Return (tm, Mp). Prefer tm | M (no pad copy) and >=2 grid points (2 TCs)."""
    cap = min(tm_max, M)
    cap -= cap % 8
    for tm in range(cap, 7, -8):
        if M % tm == 0 and M // tm >= 2:
            return tm, M
    if M <= tm_max:
        return M, M                       # single full-extent block (exempt from 8-rule)
    tm = max(cap, 8)
    return tm, _round_up(M, tm)           # fallback: pad rows


def matmul_bias_act(a, w, b, act="none", out_dtype=jnp.bfloat16):
    """(M,K) @ (K,N) + b with fused activation.  a is cast to bf16."""
    a = a.astype(jnp.bfloat16)
    M, K = a.shape
    N = w.shape[1]
    tm, Mp = _pick_tiling(M)
    if Mp != M:
        a = jnp.pad(a, ((0, Mp - M), (0, 0)))
    out = pl.pallas_call(
        functools.partial(_mm_bias_act_kernel, act=act),
        out_shape=jax.ShapeDtypeStruct((Mp, N), out_dtype),
        grid=(Mp // tm,),
        in_specs=[
            pl.BlockSpec((tm, K), lambda i: (i, 0)),
            pl.BlockSpec((K, N), lambda i: (0, 0)),
            pl.BlockSpec((1, N), lambda i: (0, 0)),
        ],
        out_specs=pl.BlockSpec((tm, N), lambda i: (i, 0)),
        compiler_params=pltpu.CompilerParams(
            dimension_semantics=("parallel",)),
    )(a, w, b)
    return out if Mp == M else out[:M]


def matmul2_bias_act(a, w1, b1, w2, b2, act1, act2, out_dtype=jnp.bfloat16):
    """Fused ((a @ w1 + b1).act1 @ w2 + b2).act2 in a single pallas_call."""
    a = a.astype(jnp.bfloat16)
    M, K = a.shape
    N1 = w1.shape[1]
    N2 = w2.shape[1]
    tm, Mp = _pick_tiling(M)
    if Mp != M:
        a = jnp.pad(a, ((0, Mp - M), (0, 0)))
    out = pl.pallas_call(
        functools.partial(_mm2_bias_act_kernel, act1=act1, act2=act2),
        out_shape=jax.ShapeDtypeStruct((Mp, N2), out_dtype),
        grid=(Mp // tm,),
        in_specs=[
            pl.BlockSpec((tm, K), lambda i: (i, 0)),
            pl.BlockSpec((K, N1), lambda i: (0, 0)),
            pl.BlockSpec((1, N1), lambda i: (0, 0)),
            pl.BlockSpec((N1, N2), lambda i: (0, 0)),
            pl.BlockSpec((1, N2), lambda i: (0, 0)),
        ],
        out_specs=pl.BlockSpec((tm, N2), lambda i: (i, 0)),
        compiler_params=pltpu.CompilerParams(
            dimension_semantics=("parallel",)),
    )(a, w1, b1, w2, b2)
    return out if Mp == M else out[:M]


# ----------------------------------------------------------------------------
# XLA-side patch builders (thin bf16 glue; activations here are tiny)
# TODO(synk): move the k=3 tap-shift (im2col) into the kernel via in-VMEM shifted
#             slices to kill the remaining 9x/4x patches HBM amplification.
# ----------------------------------------------------------------------------
def _im2col_s2(x, k, pad):
    """Stride-2 im2col for NHWC x; returns (N*OH*OW, k*k*Cin) with (kh,kw,ci) order."""
    N, H, W, C = x.shape
    OH = (H + 2 * pad - k) // 2 + 1
    OW = (W + 2 * pad - k) // 2 + 1
    xp = jnp.pad(x, ((0, 0), (pad, pad), (pad, pad), (0, 0)))
    cols = []
    for kh in range(k):
        for kw in range(k):
            cols.append(xp[:, kh:kh + 2 * OH:2, kw:kw + 2 * OW:2, :])
    return jnp.concatenate(cols, axis=-1).reshape(N * OH * OW, k * k * C)


def _convt_phase_patches(x):
    """2x2 real-data neighborhood taps for the phase-decomposed stride-2 ConvT."""
    N, H, W, C = x.shape
    xp = jnp.pad(x, ((0, 0), (0, 1), (0, 1), (0, 0)))     # bottom/right zero pad
    taps = [xp[:, di:di + H, dj:dj + W, :] for di in (0, 1) for dj in (0, 1)]
    return jnp.concatenate(taps, axis=-1).reshape(N * H * W, 4 * C)


def _phase_merge(o, n, H, cout):
    """(n*H*H, 4*cout) phase-major ConvT output -> (n, 2H, 2H, cout) NHWC."""
    o = o.reshape(n, H, H, 2, 2, cout)                    # (n, i, j, a, b, co)
    o = jnp.transpose(o, (0, 1, 3, 2, 4, 5))              # (n, i, a, j, b, co)
    return o.reshape(n, 2 * H, 2 * H, cout)


# ----------------------------------------------------------------------------
# Parameters (deterministic synthetic init, PyTorch-default-style uniform)
# ----------------------------------------------------------------------------
def init_params(key):
    ks = jax.random.split(key, 16)

    def u(k, shape, fan_in):
        bound = 1.0 / float(fan_in) ** 0.5
        return jax.random.uniform(k, shape, jnp.float32, -bound, bound)

    p = {}
    p["enc_c1_w"] = u(ks[0], (16, 1, 3, 3), 1 * 9)
    p["enc_c1_b"] = u(ks[1], (16,), 1 * 9)
    p["enc_c2_w"] = u(ks[2], (32, 16, 3, 3), 16 * 9)
    p["enc_c2_b"] = u(ks[3], (32,), 16 * 9)
    p["enc_c3_w"] = u(ks[4], (64, 32, 8, 8), 32 * 64)
    p["enc_c3_b"] = u(ks[5], (64,), 32 * 64)
    p["enc_fc_w"] = u(ks[6], (LATENT_DIM, 64), 64)        # torch Linear: (out, in)
    p["enc_fc_b"] = u(ks[7], (LATENT_DIM,), 64)
    p["dec_fc_w"] = u(ks[8], (64, LATENT_DIM), LATENT_DIM)
    p["dec_fc_b"] = u(ks[9], (64,), LATENT_DIM)
    p["dec_ct1_w"] = u(ks[10], (64, 32, 8, 8), 32 * 64)   # torch ConvT: (in,out,k,k)
    p["dec_ct1_b"] = u(ks[11], (32,), 32 * 64)
    p["dec_ct2_w"] = u(ks[12], (32, 16, 3, 3), 16 * 9)
    p["dec_ct2_b"] = u(ks[13], (16,), 16 * 9)
    p["dec_ct3_w"] = u(ks[14], (16, 1, 3, 3), 1 * 9)
    p["dec_ct3_b"] = u(ks[15], (1,), 1 * 9)
    return p


def _pack_convt_phase(w, b):
    """Torch ConvT weight (Cin,Cout,3,3), s=2,p=1,op=1 -> (4*Cin, 4*Cout) phase matrix.

    Patch rows: tap t = 2*di + dj over the 2x2 neighborhood x[i+di, j+dj].
    Output cols: phase ph = 2*a + b for output pixel (2i+a, 2j+b).
    Tap (di,dj) contributes to phase (a,b) with kernel index kh=a+1-2*di, kw=b+1-2*dj.
    """
    cin, cout = int(w.shape[0]), int(w.shape[1])
    wm = jnp.zeros((4 * cin, 4 * cout), jnp.float32)
    for a in (0, 1):
        for bb in (0, 1):
            ph = 2 * a + bb
            for di in (0, 1):
                for dj in (0, 1):
                    kh = a + 1 - 2 * di
                    kw = bb + 1 - 2 * dj
                    if 0 <= kh < 3 and 0 <= kw < 3:
                        t = 2 * di + dj
                        wm = wm.at[t * cin:(t + 1) * cin,
                                   ph * cout:(ph + 1) * cout].set(w[:, :, kh, kw])
    bias = jnp.tile(b, 4).reshape(1, -1).astype(jnp.float32)
    return wm.astype(jnp.bfloat16), bias


def pack_params(p):
    """One-time layout/dtype packing: matmul-ready bf16 weights, f32 (1,N) biases."""
    bf, f32 = jnp.bfloat16, jnp.float32

    def as_bias(b):
        return b.reshape(1, -1).astype(f32)

    pk = {}
    # Encoder convs: torch (Cout,Cin,k,k) -> (kh,kw,Cin,Cout) -> (k*k*Cin, Cout)
    pk["c1_w"] = jnp.transpose(p["enc_c1_w"], (2, 3, 1, 0)).reshape(9, 16).astype(bf)
    pk["c1_b"] = as_bias(p["enc_c1_b"])
    pk["c2_w"] = jnp.transpose(p["enc_c2_w"], (2, 3, 1, 0)).reshape(9 * 16, 32).astype(bf)
    pk["c2_b"] = as_bias(p["enc_c2_b"])
    # enc_c3 (8x8 -> 1x1) is a plain matmul over the flattened NHWC activation.
    pk["c3_w"] = jnp.transpose(p["enc_c3_w"], (2, 3, 1, 0)).reshape(8 * 8 * 32, 64).astype(bf)
    pk["c3_b"] = as_bias(p["enc_c3_b"])
    # Linears: torch (out,in) -> (in,out)
    pk["fc_w"] = p["enc_fc_w"].T.astype(bf)
    pk["fc_b"] = as_bias(p["enc_fc_b"])
    pk["dfc_w"] = p["dec_fc_w"].T.astype(bf)
    pk["dfc_b"] = as_bias(p["dec_fc_b"])
    # dec_ct1 (1x1 -> 8x8) is a plain matmul: (Cin,Cout,kh,kw)->(Cin,kh,kw,Cout)
    pk["ct1_w"] = jnp.transpose(p["dec_ct1_w"], (0, 2, 3, 1)).reshape(64, 8 * 8 * 32).astype(bf)
    pk["ct1_b"] = jnp.tile(p["dec_ct1_b"], 8 * 8).reshape(1, -1).astype(f32)
    # dec_ct2 / dec_ct3: 4-output-phase sub-pixel decomposition matrices
    pk["ct2_w"], pk["ct2_b"] = _pack_convt_phase(p["dec_ct2_w"], p["dec_ct2_b"])
    pk["ct3_w"], pk["ct3_b"] = _pack_convt_phase(p["dec_ct3_w"], p["dec_ct3_b"])
    return pk


# ----------------------------------------------------------------------------
# Full forward pass (mirrors Autoencoder.forward)
# ----------------------------------------------------------------------------
def autoencoder_forward(pk, x):
    # x: (batch, height, width)  ->  torch: x.view(-1, 1, 32, 32)
    batch_size = x.shape[0]
    xt = x.reshape(-1, 1, TILE, TILE)                 # NCHW (torch view semantics)
    h = jnp.transpose(xt, (0, 2, 3, 1)).astype(jnp.bfloat16)   # -> NHWC bf16
    n_tiles = h.shape[0]

    # ---- encoder ----
    # TODO(synk): conv1's K=9 A operand under-utilizes MXU lanes; fold into conv2
    #             once in-kernel im2col lands.
    p1 = _im2col_s2(h, k=3, pad=1)                    # (n*256, 9)
    h1 = matmul_bias_act(p1, pk["c1_w"], pk["c1_b"], "leaky_relu")       # bf16
    h1 = h1.reshape(n_tiles, 16, 16, 16)
    p2 = _im2col_s2(h1, k=3, pad=1)                   # (n*64, 144)
    h2 = matmul_bias_act(p2, pk["c2_w"], pk["c2_b"], "leaky_relu")       # bf16
    # enc_c3(+LReLU) + Flatten + enc_fc fused into one Pallas kernel.
    h2 = h2.reshape(n_tiles, 8 * 8 * 32)
    z = matmul2_bias_act(h2, pk["c3_w"], pk["c3_b"], pk["fc_w"], pk["fc_b"],
                         act1="leaky_relu", act2="none")                 # (n, 256)

    # ---- decoder ----
    # dec_fc(+LReLU) + Unflatten + dec_ct1(+LReLU) fused into one Pallas kernel.
    d = matmul2_bias_act(z, pk["dfc_w"], pk["dfc_b"], pk["ct1_w"], pk["ct1_b"],
                         act1="leaky_relu", act2="leaky_relu")           # (n, 2048)
    d = d.reshape(n_tiles, 8, 8, 32)                  # NHWC
    # dec_ct2: phase-decomposed stride-2 ConvT (real-data 2x2 taps only)
    q2 = _convt_phase_patches(d)                      # (n*64, 128)
    o2 = matmul_bias_act(q2, pk["ct2_w"], pk["ct2_b"], "leaky_relu")     # (n*64, 64)
    o2 = _phase_merge(o2, n_tiles, 8, 16)             # (n, 16, 16, 16)
    # dec_ct3 + Sigmoid: phase-decomposed, final output emitted in f32
    q3 = _convt_phase_patches(o2)                     # (n*256, 64)
    o3 = matmul_bias_act(q3, pk["ct3_w"], pk["ct3_b"], "sigmoid",
                         out_dtype=jnp.float32)       # (n*256, 4)
    o3 = _phase_merge(o3, n_tiles, 16, 1)             # (n, 32, 32, 1)

    out = jnp.transpose(o3, (0, 3, 1, 2))             # back to NCHW
    return out.reshape(batch_size, -1, TILE, TILE)


if __name__ == "__main__":
    key = jax.random.PRNGKey(0)
    pkey, xkey = jax.random.split(key)
    params = init_params(pkey)
    packed = pack_params(params)                      # one-time weight packing
    x = jax.random.normal(xkey, (2, TILE, TILE), dtype=jnp.float32)

    fwd = jax.jit(autoencoder_forward)
    y = jax.block_until_ready(fwd(packed, x))

    assert y.shape == (2, 1, TILE, TILE), y.shape
    assert y.dtype == jnp.float32
    assert bool(jnp.all(jnp.isfinite(y)))
    assert bool(jnp.all((y >= 0.0) & (y <= 1.0)))     # sigmoid output range
    print("KERNEL_OK")
</pallas_src>

<mosaic_0001>
module attributes {stable_mosaic.version = 11 : i64} {
  func.func @_mm_bias_act_kernel(%arg0: i32, %arg1: memref<256x9xbf16, #tpu.memory_space<vmem>>, %arg2: memref<9x16xbf16, #tpu.memory_space<vmem>>, %arg3: memref<1x16xf32, #tpu.memory_space<vmem>>, %arg4: memref<256x16xbf16, #tpu.memory_space<vmem>>) attributes {dimension_semantics = [#tpu.dimension_semantics<parallel>], iteration_bounds = array<i64: 2>, scalar_prefetch = 0 : i64, scratch_operands = 0 : i64, tpu.core_type = #tpu.core_type<tc>, window_params = [{transform_indices = @transform_0, window_bounds = array<i64: 256, 9>}, {pipeline_mode = #tpu.pipeline_mode<synchronous>, transform_indices = @transform_1, window_bounds = array<i64: 9, 16>}, {pipeline_mode = #tpu.pipeline_mode<synchronous>, transform_indices = @transform_2, window_bounds = array<i64: 1, 16>}, {transform_indices = @transform_3, window_bounds = array<i64: 256, 16>}]} {
    %c0 = arith.constant 0 : index
    %c0_0 = arith.constant 0 : index
    %0 = vector.load %arg1[%c0, %c0_0] : memref<256x9xbf16, #tpu.memory_space<vmem>>, vector<256x9xbf16>
    %c0_1 = arith.constant 0 : index
    %c0_2 = arith.constant 0 : index
    %1 = vector.load %arg2[%c0_1, %c0_2] : memref<9x16xbf16, #tpu.memory_space<vmem>>, vector<9x16xbf16>
    %cst = arith.constant dense<0.000000e+00> : vector<256x16xf32>
    %2 = tpu.matmul %0, %1, %cst {dimension_numbers = #tpu.dot_dimension_numbers<[1], [0], [0], [1], [0, 0, 1, 1], [], []>} : vector<256x9xbf16>, vector<9x16xbf16>, vector<256x16xf32> -> vector<256x16xf32>
    %c0_3 = arith.constant 0 : index
    %c0_4 = arith.constant 0 : index
    %3 = vector.load %arg3[%c0_3, %c0_4] : memref<1x16xf32, #tpu.memory_space<vmem>>, vector<1x16xf32>
    %4 = vector.broadcast %3 : vector<1x16xf32> to vector<256x16xf32>
    %5 = arith.addf %2, %4 : vector<256x16xf32>
    %cst_5 = arith.constant 0.000000e+00 : f32
    %6 = vector.broadcast %cst_5 : f32 to vector<256x16xf32>
    %7 = arith.cmpf oge, %5, %6 : vector<256x16xf32>
    %cst_6 = arith.constant 2.000000e-01 : f32
    %8 = vector.broadcast %cst_6 : f32 to vector<256x16xf32>
    %9 = arith.mulf %8, %5 : vector<256x16xf32>
    %10 = arith.select %7, %5, %9 : vector<256x16xi1>, vector<256x16xf32>
    %11 = arith.truncf %10 : vector<256x16xf32> to vector<256x16xbf16>
    %c0_7 = arith.constant 0 : index
    %c0_8 = arith.constant 0 : index
    %12 = vector.load %arg4[%c0_7, %c0_8] : memref<256x16xbf16, #tpu.memory_space<vmem>>, vector<256x16xbf16>
    tpu.vector_store %arg4[%c0_7, %c0_8], %11 {strides = array<i32>} : memref<256x16xbf16, #tpu.memory_space<vmem>>, vector<256x16xbf16>,
    return
  }
  func.func @transform_0(%arg0: i32) -> (i32, i32) {
    %c0_i32 = arith.constant 0 : i32
    %c0_i32_0 = arith.constant 0 : i32
    return %arg0, %c0_i32 : i32, i32
  }
  func.func @transform_1(%arg0: i32) -> (i32, i32) {
    %c0_i32 = arith.constant 0 : i32
    %c0_i32_0 = arith.constant 0 : i32
    %c0_i32_1 = arith.constant 0 : i32
    return %c0_i32, %c0_i32_0 : i32, i32
  }
  func.func @transform_2(%arg0: i32) -> (i32, i32) {
    %c0_i32 = arith.constant 0 : i32
    %c0_i32_0 = arith.constant 0 : i32
    %c0_i32_1 = arith.constant 0 : i32
    return %c0_i32, %c0_i32_0 : i32, i32
  }
  func.func @transform_3(%arg0: i32) -> (i32, i32) {
    %c0_i32 = arith.constant 0 : i32
    %c0_i32_0 = arith.constant 0 : i32
    return %arg0, %c0_i32 : i32, i32
  }
}

module attributes {stable_mosaic.version = 11 : i64} {
  func.func @_mm_bias_act_kernel(%arg0: i32, %arg1: memref<64x144xbf16, #tpu.memory_space<vmem>>, %arg2: memref<144x32xbf16, #tpu.memory_space<vmem>>, %arg3: memref<1x32xf32, #tpu.memory_space<vmem>>, %arg4: memref<64x32xbf16, #tpu.memory_space<vmem>>) attributes {dimension_semantics = [#tpu.dimension_semantics<parallel>], iteration_bounds = array<i64: 2>, scalar_prefetch = 0 : i64, scratch_operands = 0 : i64, tpu.core_type = #tpu.core_type<tc>, window_params = [{transform_indices = @transform_0, window_bounds = array<i64: 64, 144>}, {pipeline_mode = #tpu.pipeline_mode<synchronous>, transform_indices = @transform_1, window_bounds = array<i64: 144, 32>}, {pipeline_mode = #tpu.pipeline_mode<synchronous>, transform_indices = @transform_2, window_bounds = array<i64: 1, 32>}, {transform_indices = @transform_3, window_bounds = array<i64: 64, 32>}]} {
    %c0 = arith.constant 0 : index
    %c0_0 = arith.constant 0 : index
    %0 = vector.load %arg1[%c0, %c0_0] : memref<64x144xbf16, #tpu.memory_space<vmem>>, vector<64x144xbf16>
    %c0_1 = arith.constant 0 : index
    %c0_2 = arith.constant 0 : index
    %1 = vector.load %arg2[%c0_1, %c0_2] : memref<144x32xbf16, #tpu.memory_space<vmem>>, vector<144x32xbf16>
    %cst = arith.constant dense<0.000000e+00> : vector<64x32xf32>
    %2 = tpu.matmul %0, %1, %cst {dimension_numbers = #tpu.dot_dimension_numbers<[1], [0], [0], [1], [0, 0, 1, 1], [], []>} : vector<64x144xbf16>, vector<144x32xbf16>, vector<64x32xf32> -> vector<64x32xf32>
    %c0_3 = arith.constant 0 : index
    %c0_4 = arith.constant 0 : index
    %3 = vector.load %arg3[%c0_3, %c0_4] : memref<1x32xf32, #tpu.memory_space<vmem>>, vector<1x32xf32>
    %4 = vector.broadcast %3 : vector<1x32xf32> to vector<64x32xf32>
    %5 = arith.addf %2, %4 : vector<64x32xf32>
    %cst_5 = arith.constant 0.000000e+00 : f32
    %6 = vector.broadcast %cst_5 : f32 to vector<64x32xf32>
    %7 = arith.cmpf oge, %5, %6 : vector<64x32xf32>
    %cst_6 = arith.constant 2.000000e-01 : f32
    %8 = vector.broadcast %cst_6 : f32 to vector<64x32xf32>
    %9 = arith.mulf %8, %5 : vector<64x32xf32>
    %10 = arith.select %7, %5, %9 : vector<64x32xi1>, vector<64x32xf32>
    %11 = arith.truncf %10 : vector<64x32xf32> to vector<64x32xbf16>
    %c0_7 = arith.constant 0 : index
    %c0_8 = arith.constant 0 : index
    %12 = vector.load %arg4[%c0_7, %c0_8] : memref<64x32xbf16, #tpu.memory_space<vmem>>, vector<64x32xbf16>
    tpu.vector_store %arg4[%c0_7, %c0_8], %11 {strides = array<i32>} : memref<64x32xbf16, #tpu.memory_space<vmem>>, vector<64x32xbf16>,
    return
  }
  func.func @transform_0(%arg0: i32) -> (i32, i32) {
    %c0_i32 = arith.constant 0 : i32
    %c0_i32_0 = arith.constant 0 : i32
    return %arg0, %c0_i32 : i32, i32
  }
  func.func @transform_1(%arg0: i32) -> (i32, i32) {
    %c0_i32 = arith.constant 0 : i32
    %c0_i32_0 = arith.constant 0 : i32
    %c0_i32_1 = arith.constant 0 : i32
    return %c0_i32, %c0_i32_0 : i32, i32
  }
  func.func @transform_2(%arg0: i32) -> (i32, i32) {
    %c0_i32 = arith.constant 0 : i32
    %c0_i32_0 = arith.constant 0 : i32
    %c0_i32_1 = arith.constant 0 : i32
    return %c0_i32, %c0_i32_0 : i32, i32
  }
  func.func @transform_3(%arg0: i32) -> (i32, i32) {
    %c0_i32 = arith.constant 0 : i32
    %c0_i32_0 = arith.constant 0 : i32
    return %arg0, %c0_i32 : i32, i32
  }
}

module attributes {stable_mosaic.version = 11 : i64} {
  func.func @_mm2_bias_act_kernel(%arg0: i32, %arg1: memref<2x2048xbf16, #tpu.memory_space<vmem>>, %arg2: memref<2048x64xbf16, #tpu.memory_space<vmem>>, %arg3: memref<1x64xf32, #tpu.memory_space<vmem>>, %arg4: memref<64x256xbf16, #tpu.memory_space<vmem>>, %arg5: memref<1x256xf32, #tpu.memory_space<vmem>>, %arg6: memref<2x256xbf16, #tpu.memory_space<vmem>>) attributes {dimension_semantics = [#tpu.dimension_semantics<parallel>], iteration_bounds = array<i64: 1>, scalar_prefetch = 0 : i64, scratch_operands = 0 : i64, tpu.core_type = #tpu.core_type<tc>, window_params = [{transform_indices = @transform_0, window_bounds = array<i64: 2, 2048>}, {pipeline_mode = #tpu.pipeline_mode<synchronous>, transform_indices = @transform_1, window_bounds = array<i64: 2048, 64>}, {pipeline_mode = #tpu.pipeline_mode<synchronous>, transform_indices = @transform_2, window_bounds = array<i64: 1, 64>}, {pipeline_mode = #tpu.pipeline_mode<synchronous>, transform_indices = @transform_3, window_bounds = array<i64: 64, 256>}, {pipeline_mode = #tpu.pipeline_mode<synchronous>, transform_indices = @transform_4, window_bounds = array<i64: 1, 256>}, {transform_indices = @transform_5, window_bounds = array<i64: 2, 256>}]} {
    %c0 = arith.constant 0 : index
    %c0_0 = arith.constant 0 : index
    %0 = vector.load %arg1[%c0, %c0_0] : memref<2x2048xbf16, #tpu.memory_space<vmem>>, vector<2x2048xbf16>
    %c0_1 = arith.constant 0 : index
    %c0_2 = arith.constant 0 : index
    %1 = vector.load %arg2[%c0_1, %c0_2] : memref<2048x64xbf16, #tpu.memory_space<vmem>>, vector<2048x64xbf16>
    %cst = arith.constant dense<0.000000e+00> : vector<2x64xf32>
    %2 = tpu.matmul %0, %1, %cst {dimension_numbers = #tpu.dot_dimension_numbers<[1], [0], [0], [1], [0, 0, 1, 1], [], []>} : vector<2x2048xbf16>, vector<2048x64xbf16>, vector<2x64xf32> -> vector<2x64xf32>
    %c0_3 = arith.constant 0 : index
    %c0_4 = arith.constant 0 : index
    %3 = vector.load %arg3[%c0_3, %c0_4] : memref<1x64xf32, #tpu.memory_space<vmem>>, vector<1x64xf32>
    %4 = vector.broadcast %3 : vector<1x64xf32> to vector<2x64xf32>
    %5 = arith.addf %2, %4 : vector<2x64xf32>
    %cst_5 = arith.constant 0.000000e+00 : f32
    %6 = vector.broadcast %cst_5 : f32 to vector<2x64xf32>
    %7 = arith.cmpf oge, %5, %6 : vector<2x64xf32>
    %cst_6 = arith.constant 2.000000e-01 : f32
    %8 = vector.broadcast %cst_6 : f32 to vector<2x64xf32>
    %9 = arith.mulf %8, %5 : vector<2x64xf32>
    %10 = arith.select %7, %5, %9 : vector<2x64xi1>, vector<2x64xf32>
    %11 = arith.truncf %10 : vector<2x64xf32> to vector<2x64xbf16>
    %c0_7 = arith.constant 0 : index
    %c0_8 = arith.constant 0 : index
    %12 = vector.load %arg4[%c0_7, %c0_8] : memref<64x256xbf16, #tpu.memory_space<vmem>>, vector<64x256xbf16>
    %cst_9 = arith.constant dense<0.000000e+00> : vector<2x256xf32>
    %13 = tpu.matmul %11, %12, %cst_9 {dimension_numbers = #tpu.dot_dimension_numbers<[1], [0], [0], [1], [0, 0, 1, 1], [], []>} : vector<2x64xbf16>, vector<64x256xbf16>, vector<2x256xf32> -> vector<2x256xf32>
    %c0_10 = arith.constant 0 : index
    %c0_11 = arith.constant 0 : index
    %14 = vector.load %arg5[%c0_10, %c0_11] : memref<1x256xf32, #tpu.memory_space<vmem>>, vector<1x256xf32>
    %15 = vector.broadcast %14 : vector<1x256xf32> to vector<2x256xf32>
    %16 = arith.addf %13, %15 : vector<2x256xf32>
    %17 = arith.truncf %16 : vector<2x256xf32> to vector<2x256xbf16>
    %c0_12 = arith.constant 0 : index
    %c0_13 = arith.constant 0 : index
    %18 = vector.load %arg6[%c0_12, %c0_13] : memref<2x256xbf16, #tpu.memory_space<vmem>>, vector<2x256xbf16>
    tpu.vector_store %arg6[%c0_12, %c0_13], %17 {strides = array<i32>} : memref<2x256xbf16, #tpu.memory_space<vmem>>, vector<2x256xbf16>,
    return
  }
  func.func @transform_0(%arg0: i32) -> (i32, i32) {
    %c0_i32 = arith.constant 0 : i32
    %c0_i32_0 = arith.constant 0 : i32
    return %arg0, %c0_i32 : i32, i32
  }
  func.func @transform_1(%arg0: i32) -> (i32, i32) {
    %c0_i32 = arith.constant 0 : i32
    %c0_i32_0 = arith.constant 0 : i32
    %c0_i32_1 = arith.constant 0 : i32
    return %c0_i32, %c0_i32_0 : i32, i32
  }
  func.func @transform_2(%arg0: i32) -> (i32, i32) {
    %c0_i32 = arith.constant 0 : i32
    %c0_i32_0 = arith.constant 0 : i32
    %c0_i32_1 = arith.constant 0 : i32
    return %c0_i32, %c0_i32_0 : i32, i32
  }
  func.func @transform_3(%arg0: i32) -> (i32, i32) {
    %c0_i32 = arith.constant 0 : i32
    %c0_i32_0 = arith.constant 0 : i32
    %c0_i32_1 = arith.constant 0 : i32
    return %c0_i32, %c0_i32_0 : i32, i32
  }
  func.func @transform_4(%arg0: i32) -> (i32, i32) {
    %c0_i32 = arith.constant 0 : i32
    %c0_i32_0 = arith.constant 0 : i32
    %c0_i32_1 = arith.constant 0 : i32
    return %c0_i32, %c0_i32_0 : i32, i32
  }
  func.func @transform_5(%arg0: i32) -> (i32, i32) {
    %c0_i32 = arith.constant 0 : i32
    %c0_i32_0 = arith.constant 0 : i32
    return %arg0, %c0_i32 : i32, i32
  }
}

module attributes {stable_mosaic.version = 11 : i64} {
  func.func @_mm2_bias_act_kernel(%arg0: i32, %arg1: memref<2x256xbf16, #tpu.memory_space<vmem>>, %arg2: memref<256x64xbf16, #tpu.memory_space<vmem>>, %arg3: memref<1x64xf32, #tpu.memory_space<vmem>>, %arg4: memref<64x2048xbf16, #tpu.memory_space<vmem>>, %arg5: memref<1x2048xf32, #tpu.memory_space<vmem>>, %arg6: memref<2x2048xbf16, #tpu.memory_space<vmem>>) attributes {dimension_semantics = [#tpu.dimension_semantics<parallel>], iteration_bounds = array<i64: 1>, scalar_prefetch = 0 : i64, scratch_operands = 0 : i64, tpu.core_type = #tpu.core_type<tc>, window_params = [{transform_indices = @transform_0, window_bounds = array<i64: 2, 256>}, {pipeline_mode = #tpu.pipeline_mode<synchronous>, transform_indices = @transform_1, window_bounds = array<i64: 256, 64>}, {pipeline_mode = #tpu.pipeline_mode<synchronous>, transform_indices = @transform_2, window_bounds = array<i64: 1, 64>}, {pipeline_mode = #tpu.pipeline_mode<synchronous>, transform_indices = @transform_3, window_bounds = array<i64: 64, 2048>}, {pipeline_mode = #tpu.pipeline_mode<synchronous>, transform_indices = @transform_4, window_bounds = array<i64: 1, 2048>}, {transform_indices = @transform_5, window_bounds = array<i64: 2, 2048>}]} {
    %c0 = arith.constant 0 : index
    %c0_0 = arith.constant 0 : index
    %0 = vector.load %arg1[%c0, %c0_0] : memref<2x256xbf16, #tpu.memory_space<vmem>>, vector<2x256xbf16>
    %c0_1 = arith.constant 0 : index
    %c0_2 = arith.constant 0 : index
    %1 = vector.load %arg2[%c0_1, %c0_2] : memref<256x64xbf16, #tpu.memory_space<vmem>>, vector<256x64xbf16>
    %cst = arith.constant dense<0.000000e+00> : vector<2x64xf32>
    %2 = tpu.matmul %0, %1, %cst {dimension_numbers = #tpu.dot_dimension_numbers<[1], [0], [0], [1], [0, 0, 1, 1], [], []>} : vector<2x256xbf16>, vector<256x64xbf16>, vector<2x64xf32> -> vector<2x64xf32>
    %c0_3 = arith.constant 0 : index
    %c0_4 = arith.constant 0 : index
    %3 = vector.load %arg3[%c0_3, %c0_4] : memref<1x64xf32, #tpu.memory_space<vmem>>, vector<1x64xf32>
    %4 = vector.broadcast %3 : vector<1x64xf32> to vector<2x64xf32>
    %5 = arith.addf %2, %4 : vector<2x64xf32>
    %cst_5 = arith.constant 0.000000e+00 : f32
    %6 = vector.broadcast %cst_5 : f32 to vector<2x64xf32>
    %7 = arith.cmpf oge, %5, %6 : vector<2x64xf32>
    %cst_6 = arith.constant 2.000000e-01 : f32
    %8 = vector.broadcast %cst_6 : f32 to vector<2x64xf32>
    %9 = arith.mulf %8, %5 : vector<2x64xf32>
    %10 = arith.select %7, %5, %9 : vector<2x64xi1>, vector<2x64xf32>
    %11 = arith.truncf %10 : vector<2x64xf32> to vector<2x64xbf16>
    %c0_7 = arith.constant 0 : index
    %c0_8 = arith.constant 0 : index
    %12 = vector.load %arg4[%c0_7, %c0_8] : memref<64x2048xbf16, #tpu.memory_space<vmem>>, vector<64x2048xbf16>
    %cst_9 = arith.constant dense<0.000000e+00> : vector<2x2048xf32>
    %13 = tpu.matmul %11, %12, %cst_9 {dimension_numbers = #tpu.dot_dimension_numbers<[1], [0], [0], [1], [0, 0, 1, 1], [], []>} : vector<2x64xbf16>, vector<64x2048xbf16>, vector<2x2048xf32> -> vector<2x2048xf32>
    %c0_10 = arith.constant 0 : index
    %c0_11 = arith.constant 0 : index
    %14 = vector.load %arg5[%c0_10, %c0_11] : memref<1x2048xf32, #tpu.memory_space<vmem>>, vector<1x2048xf32>
    %15 = vector.broadcast %14 : vector<1x2048xf32> to vector<2x2048xf32>
    %16 = arith.addf %13, %15 : vector<2x2048xf32>
    %cst_12 = arith.constant 0.000000e+00 : f32
    %17 = vector.broadcast %cst_12 : f32 to vector<2x2048xf32>
    %18 = arith.cmpf oge, %16, %17 : vector<2x2048xf32>
    %cst_13 = arith.constant 2.000000e-01 : f32
    %19 = vector.broadcast %cst_13 : f32 to vector<2x2048xf32>
    %20 = arith.mulf %19, %16 : vector<2x2048xf32>
    %21 = arith.select %18, %16, %20 : vector<2x2048xi1>, vector<2x2048xf32>
    %22 = arith.truncf %21 : vector<2x2048xf32> to vector<2x2048xbf16>
    %c0_14 = arith.constant 0 : index
    %c0_15 = arith.constant 0 : index
    %23 = vector.load %arg6[%c0_14, %c0_15] : memref<2x2048xbf16, #tpu.memory_space<vmem>>, vector<2x2048xbf16>
    tpu.vector_store %arg6[%c0_14, %c0_15], %22 {strides = array<i32>} : memref<2x2048xbf16, #tpu.memory_space<vmem>>, vector<2x2048xbf16>,
    return
  }
  func.func @transform_0(%arg0: i32) -> (i32, i32) {
    %c0_i32 = arith.constant 0 : i32
    %c0_i32_0 = arith.constant 0 : i32
    return %arg0, %c0_i32 : i32, i32
  }
  func.func @transform_1(%arg0: i32) -> (i32, i32) {
    %c0_i32 = arith.constant 0 : i32
    %c0_i32_0 = arith.constant 0 : i32
    %c0_i32_1 = arith.constant 0 : i32
    return %c0_i32, %c0_i32_0 : i32, i32
  }
  func.func @transform_2(%arg0: i32) -> (i32, i32) {
    %c0_i32 = arith.constant 0 : i32
    %c0_i32_0 = arith.constant 0 : i32
    %c0_i32_1 = arith.constant 0 : i32
    return %c0_i32, %c0_i32_0 : i32, i32
  }
  func.func @transform_3(%arg0: i32) -> (i32, i32) {
    %c0_i32 = arith.constant 0 : i32
    %c0_i32_0 = arith.constant 0 : i32
    %c0_i32_1 = arith.constant 0 : i32
    return %c0_i32, %c0_i32_0 : i32, i32
  }
  func.func @transform_4(%arg0: i32) -> (i32, i32) {
    %c0_i32 = arith.constant 0 : i32
    %c0_i32_0 = arith.constant 0 : i32
    %c0_i32_1 = arith.constant 0 : i32
    return %c0_i32, %c0_i32_0 : i32, i32
  }
  func.func @transform_5(%arg0: i32) -> (i32, i32) {
    %c0_i32 = arith.constant 0 : i32
    %c0_i32_0 = arith.constant 0 : i32
    return %arg0, %c0_i32 : i32, i32
  }
}

module attributes {stable_mosaic.version = 11 : i64} {
  func.func @_mm_bias_act_kernel(%arg0: i32, %arg1: memref<64x128xbf16, #tpu.memory_space<vmem>>, %arg2: memref<128x64xbf16, #tpu.memory_space<vmem>>, %arg3: memref<1x64xf32, #tpu.memory_space<vmem>>, %arg4: memref<64x64xbf16, #tpu.memory_space<vmem>>) attributes {dimension_semantics = [#tpu.dimension_semantics<parallel>], iteration_bounds = array<i64: 2>, scalar_prefetch = 0 : i64, scratch_operands = 0 : i64, tpu.core_type = #tpu.core_type<tc>, window_params = [{transform_indices = @transform_0, window_bounds = array<i64: 64, 128>}, {pipeline_mode = #tpu.pipeline_mode<synchronous>, transform_indices = @transform_1, window_bounds = array<i64: 128, 64>}, {pipeline_mode = #tpu.pipeline_mode<synchronous>, transform_indices = @transform_2, window_bounds = array<i64: 1, 64>}, {transform_indices = @transform_3, window_bounds = array<i64: 64, 64>}]} {
    %c0 = arith.constant 0 : index
    %c0_0 = arith.constant 0 : index
    %0 = vector.load %arg1[%c0, %c0_0] : memref<64x128xbf16, #tpu.memory_space<vmem>>, vector<64x128xbf16>
    %c0_1 = arith.constant 0 : index
    %c0_2 = arith.constant 0 : index
    %1 = vector.load %arg2[%c0_1, %c0_2] : memref<128x64xbf16, #tpu.memory_space<vmem>>, vector<128x64xbf16>
    %cst = arith.constant dense<0.000000e+00> : vector<64x64xf32>
    %2 = tpu.matmul %0, %1, %cst {dimension_numbers = #tpu.dot_dimension_numbers<[1], [0], [0], [1], [0, 0, 1, 1], [], []>} : vector<64x128xbf16>, vector<128x64xbf16>, vector<64x64xf32> -> vector<64x64xf32>
    %c0_3 = arith.constant 0 : index
    %c0_4 = arith.constant 0 : index
    %3 = vector.load %arg3[%c0_3, %c0_4] : memref<1x64xf32, #tpu.memory_space<vmem>>, vector<1x64xf32>
    %4 = vector.broadcast %3 : vector<1x64xf32> to vector<64x64xf32>
    %5 = arith.addf %2, %4 : vector<64x64xf32>
    %cst_5 = arith.constant 0.000000e+00 : f32
    %6 = vector.broadcast %cst_5 : f32 to vector<64x64xf32>
    %7 = arith.cmpf oge, %5, %6 : vector<64x64xf32>
    %cst_6 = arith.constant 2.000000e-01 : f32
    %8 = vector.broadcast %cst_6 : f32 to vector<64x64xf32>
    %9 = arith.mulf %8, %5 : vector<64x64xf32>
    %10 = arith.select %7, %5, %9 : vector<64x64xi1>, vector<64x64xf32>
    %11 = arith.truncf %10 : vector<64x64xf32> to vector<64x64xbf16>
    %c0_7 = arith.constant 0 : index
    %c0_8 = arith.constant 0 : index
    %12 = vector.load %arg4[%c0_7, %c0_8] : memref<64x64xbf16, #tpu.memory_space<vmem>>, vector<64x64xbf16>
    tpu.vector_store %arg4[%c0_7, %c0_8], %11 {strides = array<i32>} : memref<64x64xbf16, #tpu.memory_space<vmem>>, vector<64x64xbf16>,
    return
  }
  func.func @transform_0(%arg0: i32) -> (i32, i32) {
    %c0_i32 = arith.constant 0 : i32
    %c0_i32_0 = arith.constant 0 : i32
    return %arg0, %c0_i32 : i32, i32
  }
  func.func @transform_1(%arg0: i32) -> (i32, i32) {
    %c0_i32 = arith.constant 0 : i32
    %c0_i32_0 = arith.constant 0 : i32
    %c0_i32_1 = arith.constant 0 : i32
    return %c0_i32, %c0_i32_0 : i32, i32
  }
  func.func @transform_2(%arg0: i32) -> (i32, i32) {
    %c0_i32 = arith.constant 0 : i32
    %c0_i32_0 = arith.constant 0 : i32
    %c0_i32_1 = arith.constant 0 : i32
    return %c0_i32, %c0_i32_0 : i32, i32
  }
  func.func @transform_3(%arg0: i32) -> (i32, i32) {
    %c0_i32 = arith.constant 0 : i32
    %c0_i32_0 = arith.constant 0 : i32
    return %arg0, %c0_i32 : i32, i32
  }
}

module attributes {stable_mosaic.version = 11 : i64} {
  func.func @_mm_bias_act_kernel(%arg0: i32, %arg1: memref<256x64xbf16, #tpu.memory_space<vmem>>, %arg2: memref<64x4xbf16, #tpu.memory_space<vmem>>, %arg3: memref<1x4xf32, #tpu.memory_space<vmem>>, %arg4: memref<256x4xf32, #tpu.memory_space<vmem>>) attributes {dimension_semantics = [#tpu.dimension_semantics<parallel>], iteration_bounds = array<i64: 2>, scalar_prefetch = 0 : i64, scratch_operands = 0 : i64, tpu.core_type = #tpu.core_type<tc>, window_params = [{transform_indices = @transform_0, window_bounds = array<i64: 256, 64>}, {pipeline_mode = #tpu.pipeline_mode<synchronous>, transform_indices = @transform_1, window_bounds = array<i64: 64, 4>}, {pipeline_mode = #tpu.pipeline_mode<synchronous>, transform_indices = @transform_2, window_bounds = array<i64: 1, 4>}, {transform_indices = @transform_3, window_bounds = array<i64: 256, 4>}]} {
    %c0 = arith.constant 0 : index
    %c0_0 = arith.constant 0 : index
    %0 = vector.load %arg1[%c0, %c0_0] : memref<256x64xbf16, #tpu.memory_space<vmem>>, vector<256x64xbf16>
    %c0_1 = arith.constant 0 : index
    %c0_2 = arith.constant 0 : index
    %1 = vector.load %arg2[%c0_1, %c0_2] : memref<64x4xbf16, #tpu.memory_space<vmem>>, vector<64x4xbf16>
    %cst = arith.constant dense<0.000000e+00> : vector<256x4xf32>
    %2 = tpu.matmul %0, %1, %cst {dimension_numbers = #tpu.dot_dimension_numbers<[1], [0], [0], [1], [0, 0, 1, 1], [], []>} : vector<256x64xbf16>, vector<64x4xbf16>, vector<256x4xf32> -> vector<256x4xf32>
    %c0_3 = arith.constant 0 : index
    %c0_4 = arith.constant 0 : index
    %3 = vector.load %arg3[%c0_3, %c0_4] : memref<1x4xf32, #tpu.memory_space<vmem>>, vector<1x4xf32>
    %4 = vector.broadcast %3 : vector<1x4xf32> to vector<256x4xf32>
    %5 = arith.addf %2, %4 : vector<256x4xf32>
    %cst_5 = arith.constant -3.000000e+01 : f32
    %cst_6 = arith.constant 3.000000e+01 : f32
    %6 = vector.broadcast %cst_5 : f32 to vector<256x4xf32>
    %7 = arith.maximumf %6, %5 : vector<256x4xf32>
    %8 = vector.broadcast %cst_6 : f32 to vector<256x4xf32>
    %9 = arith.minimumf %8, %7 : vector<256x4xf32>
    %cst_7 = arith.constant 0.000000e+00 : f32
    %10 = vector.broadcast %cst_7 : f32 to vector<256x4xf32>
    %11 = arith.subf %10, %9 : vector<256x4xf32>
    %12 = math.exp %11 : vector<256x4xf32>
    %cst_8 = arith.constant 1.000000e+00 : f32
    %13 = vector.broadcast %cst_8 : f32 to vector<256x4xf32>
    %14 = arith.addf %13, %12 : vector<256x4xf32>
    %15 = tpu.reciprocal %14 {approx = true} : vector<256x4xf32> -> vector<256x4xf32>
    %cst_9 = arith.constant 0.000000e+00 : f32
    %cst_10 = arith.constant 1.000000e+00 : f32
    %16 = vector.broadcast %cst_9 : f32 to vector<256x4xf32>
    %17 = arith.maximumf %16, %15 : vector<256x4xf32>
    %18 = vector.broadcast %cst_10 : f32 to vector<256x4xf32>
    %19 = arith.minimumf %18, %17 : vector<256x4xf32>
    %c0_11 = arith.constant 0 : index
    %c0_12 = arith.constant 0 : index
    %20 = vector.load %arg4[%c0_11, %c0_12] : memref<256x4xf32, #tpu.memory_space<vmem>>, vector<256x4xf32>
    tpu.vector_store %arg4[%c0_11, %c0_12], %19 {strides = array<i32>} : memref<256x4xf32, #tpu.memory_space<vmem>>, vector<256x4xf32>,
    return
  }
  func.func @transform_0(%arg0: i32) -> (i32, i32) {
    %c0_i32 = arith.constant 0 : i32
    %c0_i32_0 = arith.constant 0 : i32
    return %arg0, %c0_i32 : i32, i32
  }
  func.func @transform_1(%arg0: i32) -> (i32, i32) {
    %c0_i32 = arith.constant 0 : i32
    %c0_i32_0 = arith.constant 0 : i32
    %c0_i32_1 = arith.constant 0 : i32
    return %c0_i32, %c0_i32_0 : i32, i32
  }
  func.func @transform_2(%arg0: i32) -> (i32, i32) {
    %c0_i32 = arith.constant 0 : i32
    %c0_i32_0 = arith.constant 0 : i32
    %c0_i32_1 = arith.constant 0 : i32
    return %c0_i32, %c0_i32_0 : i32, i32
  }
  func.func @transform_3(%arg0: i32) -> (i32, i32) {
    %c0_i32 = arith.constant 0 : i32
    %c0_i32_0 = arith.constant 0 : i32
    return %arg0, %c0_i32 : i32, i32
  }
}

</mosaic_0001>

<llo_original>
// kernel: autoencoder_forward.6
$region0: #{autoencoder_forward.6}
  #allocation0 [shape = 'u32[]', space=smem, size = 0x4, offset = 0x4, fixed_abs, tag = 'smem constant byte address 0x4 - core index']
  #allocation1 [shape = 'u32[144,128]{1,0:T(1,128)}', space=vmem, size = 0x12000, scoped, tag = 'internal scratch']
  %s0 = inlined_call_operand.vmem [shape: bf16[512,9], index: 0, kind: input, shape index: {}]
  %s1 = inlined_call_operand.vmem [shape: bf16[9,16], index: 1, kind: input, shape index: {}]
  %s2 = inlined_call_operand.vmem [shape: f32[1,16], index: 2, kind: input, shape index: {}]
  %s3 = inlined_call_operand.vmem [shape: bf16[512,16], index: 3, kind: output, shape index: {}]
  %s4 = sld [smem:[#allocation0]]
  $region45: #{autoencoder_forward.6} parent=0
    _
  %s6 = ssub.s32 1, %s4
  %s7 = scalar_select 0, %s6, %s4
  loop: start=0, step=1, limit=4
  $region2: #{autoencoder_forward.6} parent=0 // loop_pre_header
    _
  $region3: #{autoencoder_forward.6} parent=0 // loop_header
    %s9 = sphi 0, %s13
    %p10 = scmp.ge.s32.totalorder %s9, 4
    %s19 = sphi 0, %s21
    %s22 = sphi 0, %s19
    %s23 = sphi 0, %s22
    %s39 = sphi 0, %s23
    %s43 = sphi 0, %s43
    %s45 = sphi 0, %s43
    %s46 = sphi 0, %s45
    %s60 = sphi 0, %s46
    %s64 = sphi 0, %s64
    %s66 = sphi 0, %s64
    %s67 = sphi 0, %s66
    %s81 = sphi 0, %s67
    %s87 = sphi 0, %s89
    %s90 = sphi 0, %s87
    %s91 = sphi 0, %s90
    %s107 = sphi 0, %s91
  $region4: #{autoencoder_forward.6} parent=0 // loop_header_branch
    %12 = sbr.rel (%p10) target = $region8
  $region5: #{autoencoder_forward.6} parent=0 // loop_body
    %s14 = ssub.s32 %s9, 1
    %s15 = ssub.s32 %s9, 2
    %s16 = sadd.s32 %s9, 1
    %s17 = ssub.s32 %s9, %s16
    %p18 = scmp.eq.s32.totalorder %s17, 0
    %s20 = sadd.s32 %s19, 1
    %s21 = scalar_select %p18, %s19, %s20
    %p24 = pneg %p18
    %p25 = scmp.eq.s32.totalorder %s9, 1
    %p26 = por %p24, %p25
    %p27 = scmp.ne.s32.totalorder %s19, %s22
    %p28 = scmp.eq.s32.totalorder %s9, 0
    %p29 = por %p27, %p28
    %p30 = scmp.ne.s32.totalorder %s19, %s22
    %p31 = scmp.eq.s32.totalorder %s14, 1
    %p32 = por %p30, %p31
    %p33 = scmp.ne.s32.totalorder %s22, %s23
    %p34 = scmp.eq.s32.totalorder %s14, 0
    %p35 = por %p33, %p34
    %p36 = scmp.ne.s32.totalorder %s22, %s23
    %p37 = scmp.eq.s32.totalorder %s15, 1
    %p38 = por %p36, %p37
    %p40 = scmp.ne.s32.totalorder %s23, %s39
    %p41 = scmp.eq.s32.totalorder %s15, 0
    %p42 = por %p40, %p41
    %s44 = sadd.s32 %s43, 1
    %p47 = scmp.eq.s32.totalorder %s9, 1
    %p48 = scmp.ne.s32.totalorder %s43, %s45
    %p49 = scmp.eq.s32.totalorder %s9, 0
    %p50 = por %p48, %p49
    %p51 = scmp.ne.s32.totalorder %s43, %s45
    %p52 = scmp.eq.s32.totalorder %s14, 1
    %p53 = por %p51, %p52
    %p54 = scmp.ne.s32.totalorder %s45, %s46
    %p55 = scmp.eq.s32.totalorder %s14, 0
    %p56 = por %p54, %p55
    %p57 = scmp.ne.s32.totalorder %s45, %s46
    %p58 = scmp.eq.s32.totalorder %s15, 1
    %p59 = por %p57, %p58
    %p61 = scmp.ne.s32.totalorder %s46, %s60
    %p62 = scmp.eq.s32.totalorder %s15, 0
    %p63 = por %p61, %p62
    %s65 = sadd.s32 %s64, 1
    %p68 = scmp.eq.s32.totalorder %s9, 1
    %p69 = scmp.ne.s32.totalorder %s64, %s66
    %p70 = scmp.eq.s32.totalorder %s9, 0
    %p71 = por %p69, %p70
    %p72 = scmp.ne.s32.totalorder %s64, %s66
    %p73 = scmp.eq.s32.totalorder %s14, 1
    %p74 = por %p72, %p73
    %p75 = scmp.ne.s32.totalorder %s66, %s67
    %p76 = scmp.eq.s32.totalorder %s14, 0
    %p77 = por %p75, %p76
    %p78 = scmp.ne.s32.totalorder %s66, %s67
    %p79 = scmp.eq.s32.totalorder %s15, 1
    %p80 = por %p78, %p79
    %p82 = scmp.ne.s32.totalorder %s67, %s81
    %p83 = scmp.eq.s32.totalorder %s15, 0
    %p84 = por %p82, %p83
    %s85 = ssub.s32 %s9, %s16
    %p86 = scmp.eq.s32.totalorder %s85, 0
    %s88 = sadd.s32 %s87, 1
    %s89 = scalar_select %p86, %s87, %s88
    %p92 = pneg %p86
    %p93 = scmp.eq.s32.totalorder %s9, 1
    %p94 = por %p92, %p93
    %p95 = scmp.ne.s32.totalorder %s87, %s90
    %p96 = scmp.eq.s32.totalorder %s9, 0
    %p97 = por %p95, %p96
    %p98 = scmp.ne.s32.totalorder %s87, %s90
    %p99 = scmp.eq.s32.totalorder %s14, 1
    %p100 = por %p98, %p99
    %p101 = scmp.ne.s32.totalorder %s90, %s91
    %p102 = scmp.eq.s32.totalorder %s14, 0
    %p103 = por %p101, %p102
    %p104 = scmp.ne.s32.totalorder %s90, %s91
    %p105 = scmp.eq.s32.totalorder %s15, 1
    %p106 = por %p104, %p105
    %p108 = scmp.ne.s32.totalorder %s91, %s107
    %p109 = scmp.eq.s32.totalorder %s15, 0
    %p110 = por %p108, %p109
    %p111 = scmp.le.s32.totalorder 1, %s9
    %p112 = scmp.lt.s32.totalorder %s9, 3
    %p113 = pnand %p111, %p112
    %p114 = pneg %p113
    // Predicated region
    $region9: #{autoencoder_forward.6} parent=5 // pred_check
      _
    $region10: #{autoencoder_forward.6} parent=5 // pred_check_branch
      %116 = sbr.rel (%p113) target = $region12
    $region11: #{autoencoder_forward.6} parent=5 // pred_region
      %s117 = ssub.s32 %s9, 1
      // Predicated region
      $region13: #{autoencoder_forward.6} parent=11 // pred_check
        %p118 = pneg %p56
      $region14: #{autoencoder_forward.6} parent=11 // pred_check_branch
        %120 = sbr.rel (%p118) target = $region16
      $region15: #{autoencoder_forward.6} parent=11 // pred_region
        _
      $region16: #{autoencoder_forward.6} parent=11 // pred_fallthru
        _
      // Predicated region
      $region17: #{autoencoder_forward.6} parent=11 // pred_check
        %p121 = pneg %p77
      $region18: #{autoencoder_forward.6} parent=11 // pred_check_branch
        %123 = sbr.rel (%p121) target = $region20
      $region19: #{autoencoder_forward.6} parent=11 // pred_region
        _
      $region20: #{autoencoder_forward.6} parent=11 // pred_fallthru
        _
    $region12: #{autoencoder_forward.6} parent=5 // pred_fallthru
      _
    %p124 = scmp.lt.s32.totalorder %s9, 2
    // Predicated region
    $region21: #{autoencoder_forward.6} parent=5 // pred_check
      %p125 = pneg %p124
    $region22: #{autoencoder_forward.6} parent=5 // pred_check_branch
      %127 = sbr.rel (%p125) target = $region24
    $region23: #{autoencoder_forward.6} parent=5 // pred_region
      // Predicated region
      $region25: #{autoencoder_forward.6} parent=23 // pred_check
        %p128 = pneg %p29
      $region26: #{autoencoder_forward.6} parent=23 // pred_check_branch
        %130 = sbr.rel (%p128) target = $region28
      $region27: #{autoencoder_forward.6} parent=23 // pred_region
        %s131 = smul.u32 32, %s9
        %p132 = scmp.lt.s32.totalorder %s131, 63
        %s133 = scalar_select %p132, %s131, 63
        %s134 = smul.addr %s133, 4
        %s135 = scalar_lea.vmem %s0, %s134
        %s136 = smul.u32 32, %s9
      $region28: #{autoencoder_forward.6} parent=23 // pred_fallthru
        _
    $region24: #{autoencoder_forward.6} parent=5 // pred_fallthru
      _
    %p137 = scmp.le.s32.totalorder 1, %s9
    %p138 = scmp.lt.s32.totalorder %s9, 3
    %p139 = pnand %p137, %p138
    %p140 = pneg %p139
    // Predicated region
    $region29: #{autoencoder_forward.6} parent=5 // pred_check
      _
    $region30: #{autoencoder_forward.6} parent=5 // pred_check_branch
      %142 = sbr.rel (%p139) target = $region32
    $region31: #{autoencoder_forward.6} parent=5 // pred_region
      %s143 = ssub.s32 %s9, 1
      %s144 = smul.u32 32, %s14
      %p145 = scmp.lt.s32.totalorder %s144, 63
      %s146 = scalar_select %p145, %s144, 63
      %s147 = smul.addr %s146, 4
      %s148 = scalar_lea.vmem %s0, %s147
      %p149 = pneg %p35
      %p150 = pneg %p32
      %p151 = pneg %p56
      %p152 = pneg %p53
      %p153 = pneg %p77
      %p154 = pneg %p74
      %p155 = pneg %p103
      %p156 = pneg %p100
      %s157 = smul.u32 32, %s14
      %p158 = scmp.lt.s32.totalorder %s157, 63
      %s159 = scalar_select %p158, %s157, 63
      %s160 = smul.addr %s159, 4
      %s161 = scalar_lea.vmem %s3, %s160
      %s162 = smul.u32 32, %s14
      %p163 = scmp.lt.s32.totalorder %s162, 63
      %s164 = scalar_select %p163, %s162, 63
      %s165 = smul.addr %s164, 4
      %s166 = scalar_lea.vmem %s0, %s165
      %s167 = smul.u32 32, %s14
      %s168 = smul.u32 32, %s14
      %p169 = scmp.lt.s32.totalorder %s168, 63
      %s170 = scalar_select %p169, %s168, 63
      %s171 = smul.addr %s170, 4
      %s172 = scalar_lea.vmem %s3, %s171
      %s173 = smul.u32 32, %s14
      %v175 = vld [vmem:[%s166] sm:$0xf]
      %v176 = vld [vmem:[%s166 + $0x4] sm:$0xf]
      %v177 = vld [vmem:[%s166 + $0x8] sm:$0xf]
      %v178 = vld [vmem:[%s166 + $0xc] sm:$0xf]
      %v179 = vld [vmem:[%s166 + $0x10] sm:$0xf]
      %v180 = vld [vmem:[%s166 + $0x14] sm:$0xf]
      %v181 = vld [vmem:[%s166 + $0x18] sm:$0xf]
      %v182 = vld [vmem:[%s166 + $0x1c] sm:$0xf]
      %v183 = vld [vmem:[%s166 + $0x20] sm:$0xf]
      %v184 = vld [vmem:[%s166 + $0x24] sm:$0xf]
      %v185 = vld [vmem:[%s166 + $0x28] sm:$0xf]
      %v186 = vld [vmem:[%s166 + $0x2c] sm:$0xf]
      %v187 = vld [vmem:[%s166 + $0x30] sm:$0xf]
      %v188 = vld [vmem:[%s166 + $0x34] sm:$0xf]
      %v189 = vld [vmem:[%s166 + $0x38] sm:$0xf]
      %v190 = vld [vmem:[%s166 + $0x3c] sm:$0xf]
      %v191 = vld [vmem:[%s166 + $0x40] sm:$0xf]
      %v192 = vld [vmem:[%s166 + $0x44] sm:$0xf]
      %v193 = vld [vmem:[%s166 + $0x48] sm:$0xf]
      %v194 = vld [vmem:[%s166 + $0x4c] sm:$0xf]
      %v195 = vld [vmem:[%s166 + $0x50] sm:$0xf]
      %v196 = vld [vmem:[%s166 + $0x54] sm:$0xf]
      %v197 = vld [vmem:[%s166 + $0x58] sm:$0xf]
      %v198 = vld [vmem:[%s166 + $0x5c] sm:$0xf]
      %v199 = vld [vmem:[%s166 + $0x60] sm:$0xf]
      %v200 = vld [vmem:[%s166 + $0x64] sm:$0xf]
      %v201 = vld [vmem:[%s166 + $0x68] sm:$0xf]
      %v202 = vld [vmem:[%s166 + $0x6c] sm:$0xf]
      %v203 = vld [vmem:[%s166 + $0x70] sm:$0xf]
      %v204 = vld [vmem:[%s166 + $0x74] sm:$0xf]
      %v205 = vld [vmem:[%s166 + $0x78] sm:$0xf]
      %v206 = vld [vmem:[%s166 + $0x7c] sm:$0xf]
      %v207 = vld [vmem:[%s1] sm:$0xf]
      %v208 = vld [vmem:[%s1 + $0x4] sm:$0x1]
      %v209 = vld [vmem:[%s2] sm:$0x1]
      %v211 = vlaneseq
      %v212 = vshrl.u32 %v211, 7
      %v213 = vsub.s32 0, %v212
      %v214 = vrot.slane %v209, %v213
      %v248 = vunpack.c.l.b16 %v175
      %v249 = vunpack.c.l.b16 %v176
      %v250 = vunpack.c.l.b16 %v177
      %v251 = vunpack.c.l.b16 %v178
      %v252 = vunpack.c.l.b16 %v179
      %v253 = vunpack.c.l.b16 %v180
      %v254 = vunpack.c.l.b16 %v181
      %v255 = vunpack.c.l.b16 %v182
      %v256 = vunpack.c.l.b16 %v183
      %v257 = vunpack.c.l.b16 %v184
      %v258 = vunpack.c.l.b16 %v185
      %v259 = vunpack.c.l.b16 %v186
      %v260 = vunpack.c.l.b16 %v187
      %v261 = vunpack.c.l.b16 %v188
      %v262 = vunpack.c.l.b16 %v189
      %v263 = vunpack.c.l.b16 %v190
      %v264 = vunpack.c.l.b16 %v191
      %v265 = vunpack.c.l.b16 %v192
      %v266 = vunpack.c.l.b16 %v193
      %v267 = vunpack.c.l.b16 %v194
      %v268 = vunpack.c.l.b16 %v195
      %v269 = vunpack.c.l.b16 %v196
      %v270 = vunpack.c.l.b16 %v197
      %v271 = vunpack.c.l.b16 %v198
      %v272 = vunpack.c.l.b16 %v199
      %v273 = vunpack.c.l.b16 %v200
      %v274 = vunpack.c.l.b16 %v201
      %v275 = vunpack.c.l.b16 %v202
      %v276 = vunpack.c.l.b16 %v203
      %v277 = vunpack.c.l.b16 %v204
      %v278 = vunpack.c.l.b16 %v205
      %v279 = vunpack.c.l.b16 %v206
      %v280 = vpack.c.b16 %v249, %v248
      %v281 = vpack.c.b16 %v251, %v250
      %v282 = vpack.c.b16 %v253, %v252
      %v283 = vpack.c.b16 %v255, %v254
      %v284 = vpack.c.b16 %v257, %v256
      %v285 = vpack.c.b16 %v259, %v258
      %v286 = vpack.c.b16 %v261, %v260
      %v287 = vpack.c.b16 %v263, %v262
      %v288 = vpack.c.b16 %v265, %v264
      %v289 = vpack.c.b16 %v267, %v266
      %v290 = vpack.c.b16 %v269, %v268
      %v291 = vpack.c.b16 %v271, %v270
      %v292 = vpack.c.b16 %v273, %v272
      %v293 = vpack.c.b16 %v275, %v274
      %v294 = vpack.c.b16 %v277, %v276
      %v295 = vpack.c.b16 %v279, %v278
      %v298 = vunpack.c.l.b16 %v207
      %v299 = vunpack.c.l.b16 %v208
      %v300 = vpack.c.b16 %v299, %v298
      %vm301 = vcmask 72704
      %v303 = vsel %vm301, %v280, 0
      %v306 = vsel %vm301, %v281, 0
      %v309 = vsel %vm301, %v282, 0
      %v312 = vsel %vm301, %v283, 0
      %v315 = vsel %vm301, %v284, 0
      %v318 = vsel %vm301, %v285, 0
      %v321 = vsel %vm301, %v286, 0
      %v324 = vsel %vm301, %v287, 0
      %v327 = vsel %vm301, %v288, 0
      %v330 = vsel %vm301, %v289, 0
      %v333 = vsel %vm301, %v290, 0
      %v336 = vsel %vm301, %v291, 0
      %v339 = vsel %vm301, %v292, 0
      %v342 = vsel %vm301, %v293, 0
      %v345 = vsel %vm301, %v294, 0
      %v348 = vsel %vm301, %v295, 0
      %vm350 = vcmask 1043456
      %vm351 = vcmask 1044480
      %v352 = vsel %vm350, 4294967295, 65535
      %v353 = vsel %vm351, %v352, 0
      %v355 = vand.u32 %v300, %v353
      %357 = vmatprep.subr.bf16.mxu0 0
      %358 = vmatpush1.bf16.msra.mxu0 %v355
      %359 = vmatprep.subr.bf16.mxu0 0
      %360 = vmatpush1.bf16.msra.mxu0 0
      %361 = vmatprep.subr.bf16.mxu0 0
      %362 = vmatpush1.bf16.msra.mxu0 0
      %363 = vmatprep.subr.bf16.mxu0 0
      %364 = vmatpush1.bf16.msra.mxu0 0
      %365 = vmatprep.subr.bf16.mxu0 0
      %366 = vmatpush1.bf16.msra.mxu0 0
      %367 = vmatprep.subr.bf16.mxu0 0
      %368 = vmatpush1.bf16.msra.mxu0 0
      %369 = vmatprep.subr.bf16.mxu0 0
      %370 = vmatpush1.bf16.msra.mxu0 0
      %371 = vmatprep.subr.bf16.mxu0 0
      %372 = vmatpush1.bf16.msra.mxu0 0
      %373 = vmatprep.subr.bf16.mxu0 0
      %374 = vmatpush1.bf16.msra.mxu0 0
      %375 = vmatprep.subr.bf16.mxu0 0
      %376 = vmatpush1.bf16.msra.mxu0 0
      %377 = vmatprep.subr.bf16.mxu0 0
      %378 = vmatpush1.bf16.msra.mxu0 0
      %379 = vmatprep.subr.bf16.mxu0 0
      %380 = vmatpush1.bf16.msra.mxu0 0
      %381 = vmatprep.subr.bf16.mxu0 0
      %382 = vmatpush1.bf16.msra.mxu0 0
      %383 = vmatprep.subr.bf16.mxu0 0
      %384 = vmatpush1.bf16.msra.mxu0 0
      %385 = vmatprep.subr.bf16.mxu0 0
      %386 = vmatpush1.bf16.msra.mxu0 0
      %387 = vmatprep.subr.bf16.mxu0 0
      %388 = vmatpush1.bf16.msra.mxu0 0
      %389 = vmatprep.mubr.bf16.mxu0 0
      %390 = vmatmul.mubr.bf16.gmra.mrb[0].mxu0 %v303
      %v391 = vpop.f32.mrb[0].mxu0
      %v392 = vadd.f32 %v214, %v391
      %v393 = vpop.f32.mrb[0].mxu0
      %v394 = vpop.f32.mrb[0].mxu0
      %v395 = vadd.f32 %v214, %v394
      %v396 = vpop.f32.mrb[0].mxu0
      %397 = vmatprep.mubr.bf16.mxu0 0
      %398 = vmatmul.mubr.bf16.gmra.mrb[0].mxu0 %v306
      %v399 = vpop.f32.mrb[0].mxu0
      %v400 = vadd.f32 %v214, %v399
      %v401 = vpop.f32.mrb[0].mxu0
      %v402 = vpop.f32.mrb[0].mxu0
      %v403 = vadd.f32 %v214, %v402
      %v404 = vpop.f32.mrb[0].mxu0
      %405 = vmatprep.mubr.bf16.mxu0 0
      %406 = vmatmul.mubr.bf16.gmra.mrb[0].mxu0 %v309
      %v407 = vpop.f32.mrb[0].mxu0
      %v408 = vadd.f32 %v214, %v407
      %v409 = vpop.f32.mrb[0].mxu0
      %v410 = vpop.f32.mrb[0].mxu0
      %v411 = vadd.f32 %v214, %v410
      %v412 = vpop.f32.mrb[0].mxu0
      %413 = vmatprep.mubr.bf16.mxu0 0
      %414 = vmatmul.mubr.bf16.gmra.mrb[0].mxu0 %v312
      %v415 = vpop.f32.mrb[0].mxu0
      %v416 = vadd.f32 %v214, %v415
      %v417 = vpop.f32.mrb[0].mxu0
      %v418 = vpop.f32.mrb[0].mxu0
      %v419 = vadd.f32 %v214, %v418
      %v420 = vpop.f32.mrb[0].mxu0
      %421 = vmatprep.mubr.bf16.mxu0 0
      %422 = vmatmul.mubr.bf16.gmra.mrb[0].mxu0 %v315
      %v423 = vpop.f32.mrb[0].mxu0
      %v424 = vadd.f32 %v214, %v423
      %v425 = vpop.f32.mrb[0].mxu0
      %v426 = vpop.f32.mrb[0].mxu0
      %v427 = vadd.f32 %v214, %v426
      %v428 = vpop.f32.mrb[0].mxu0
      %429 = vmatprep.mubr.bf16.mxu0 0
      %430 = vmatmul.mubr.bf16.gmra.mrb[0].mxu0 %v318
      %v431 = vpop.f32.mrb[0].mxu0
      %v432 = vadd.f32 %v214, %v431
      %v433 = vpop.f32.mrb[0].mxu0
      %v434 = vpop.f32.mrb[0].mxu0
      %v435 = vadd.f32 %v214, %v434
      %v436 = vpop.f32.mrb[0].mxu0
      %437 = vmatprep.mubr.bf16.mxu0 0
      %438 = vmatmul.mubr.bf16.gmra.mrb[0].mxu0 %v321
      %v439 = vpop.f32.mrb[0].mxu0
      %v440 = vadd.f32 %v214, %v439
      %v441 = vpop.f32.mrb[0].mxu0
      %v442 = vpop.f32.mrb[0].mxu0
      %v443 = vadd.f32 %v214, %v442
      %v444 = vpop.f32.mrb[0].mxu0
      %445 = vmatprep.mubr.bf16.mxu0 0
      %446 = vmatmul.mubr.bf16.gmra.mrb[0].mxu0 %v324
      %v447 = vpop.f32.mrb[0].mxu0
      %v448 = vadd.f32 %v214, %v447
      %v449 = vpop.f32.mrb[0].mxu0
      %v450 = vpop.f32.mrb[0].mxu0
      %v451 = vadd.f32 %v214, %v450
      %v452 = vpop.f32.mrb[0].mxu0
      %453 = vmatprep.mubr.bf16.mxu0 0
      %454 = vmatmul.mubr.bf16.gmra.mrb[0].mxu0 %v327
      %v455 = vpop.f32.mrb[0].mxu0
      %v456 = vadd.f32 %v214, %v455
      %v457 = vpop.f32.mrb[0].mxu0
      %v458 = vpop.f32.mrb[0].mxu0
      %v459 = vadd.f32 %v214, %v458
      %v460 = vpop.f32.mrb[0].mxu0
      %461 = vmatprep.mubr.bf16.mxu0 0
      %462 = vmatmul.mubr.bf16.gmra.mrb[0].mxu0 %v330
      %v463 = vpop.f32.mrb[0].mxu0
      %v464 = vadd.f32 %v214, %v463
      %v465 = vpop.f32.mrb[0].mxu0
      %v466 = vpop.f32.mrb[0].mxu0
      %v467 = vadd.f32 %v214, %v466
      %v468 = vpop.f32.mrb[0].mxu0
      %469 = vmatprep.mubr.bf16.mxu0 0
      %470 = vmatmul.mubr.bf16.gmra.mrb[0].mxu0 %v333
      %v471 = vpop.f32.mrb[0].mxu0
      %v472 = vadd.f32 %v214, %v471
      %v473 = vpop.f32.mrb[0].mxu0
      %v474 = vpop.f32.mrb[0].mxu0
      %v475 = vadd.f32 %v214, %v474
      %v476 = vpop.f32.mrb[0].mxu0
      %477 = vmatprep.mubr.bf16.mxu0 0
      %478 = vmatmul.mubr.bf16.gmra.mrb[0].mxu0 %v336
      %v479 = vpop.f32.mrb[0].mxu0
      %v480 = vadd.f32 %v214, %v479
      %v481 = vpop.f32.mrb[0].mxu0
      %v482 = vpop.f32.mrb[0].mxu0
      %v483 = vadd.f32 %v214, %v482
      %v484 = vpop.f32.mrb[0].mxu0
      %485 = vmatprep.mubr.bf16.mxu0 0
      %486 = vmatmul.mubr.bf16.gmra.mrb[0].mxu0 %v339
      %v487 = vpop.f32.mrb[0].mxu0
      %v488 = vadd.f32 %v214, %v487
      %v489 = vpop.f32.mrb[0].mxu0
      %v490 = vpop.f32.mrb[0].mxu0
      %v491 = vadd.f32 %v214, %v490
      %v492 = vpop.f32.mrb[0].mxu0
      %493 = vmatprep.mubr.bf16.mxu0 0
      %494 = vmatmul.mubr.bf16.gmra.mrb[0].mxu0 %v342
      %v495 = vpop.f32.mrb[0].mxu0
      %v496 = vadd.f32 %v214, %v495
      %v497 = vpop.f32.mrb[0].mxu0
      %v498 = vpop.f32.mrb[0].mxu0
      %v499 = vadd.f32 %v214, %v498
      %v500 = vpop.f32.mrb[0].mxu0
      %501 = vmatprep.mubr.bf16.mxu0 0
      %502 = vmatmul.mubr.bf16.gmra.mrb[0].mxu0 %v345
      %v503 = vpop.f32.mrb[0].mxu0
      %v504 = vadd.f32 %v214, %v503
      %v505 = vpop.f32.mrb[0].mxu0
      %v506 = vpop.f32.mrb[0].mxu0
      %v507 = vadd.f32 %v214, %v506
      %v508 = vpop.f32.mrb[0].mxu0
      %509 = vmatprep.mubr.bf16.mxu0 0
      %510 = vmatmul.mubr.bf16.gmra.mrb[0].mxu0 %v348
      %v511 = vpop.f32.mrb[0].mxu0
      %v512 = vadd.f32 %v214, %v511
      %v513 = vpop.f32.mrb[0].mxu0
      %v514 = vpop.f32.mrb[0].mxu0
      %v515 = vadd.f32 %v214, %v514
      %v516 = vpop.f32.mrb[0].mxu0
      %517 = vdwg.mxu0
      %vm518 = vcmp.ge.f32.partialorder %v392, 0.0
      %vm519 = vcmp.ge.f32.partialorder %v395, 0.0
      %vm520 = vcmp.ge.f32.partialorder %v400, 0.0
      %vm521 = vcmp.ge.f32.partialorder %v403, 0.0
      %vm522 = vcmp.ge.f32.partialorder %v408, 0.0
      %vm523 = vcmp.ge.f32.partialorder %v411, 0.0
      %vm524 = vcmp.ge.f32.partialorder %v416, 0.0
      %vm525 = vcmp.ge.f32.partialorder %v419, 0.0
      %vm526 = vcmp.ge.f32.partialorder %v424, 0.0
      %vm527 = vcmp.ge.f32.partialorder %v427, 0.0
      %vm528 = vcmp.ge.f32.partialorder %v432, 0.0
      %vm529 = vcmp.ge.f32.partialorder %v435, 0.0
      %vm530 = vcmp.ge.f32.partialorder %v440, 0.0
      %vm531 = vcmp.ge.f32.partialorder %v443, 0.0
      %vm532 = vcmp.ge.f32.partialorder %v448, 0.0
      %vm533 = vcmp.ge.f32.partialorder %v451, 0.0
      %vm534 = vcmp.ge.f32.partialorder %v456, 0.0
      %vm535 = vcmp.ge.f32.partialorder %v459, 0.0
      %vm536 = vcmp.ge.f32.partialorder %v464, 0.0
      %vm537 = vcmp.ge.f32.partialorder %v467, 0.0
      %vm538 = vcmp.ge.f32.partialorder %v472, 0.0
      %vm539 = vcmp.ge.f32.partialorder %v475, 0.0
      %vm540 = vcmp.ge.f32.partialorder %v480, 0.0
      %vm541 = vcmp.ge.f32.partialorder %v483, 0.0
      %vm542 = vcmp.ge.f32.partialorder %v488, 0.0
      %vm543 = vcmp.ge.f32.partialorder %v491, 0.0
      %vm544 = vcmp.ge.f32.partialorder %v496, 0.0
      %vm545 = vcmp.ge.f32.partialorder %v499, 0.0
      %vm546 = vcmp.ge.f32.partialorder %v504, 0.0
      %vm547 = vcmp.ge.f32.partialorder %v507, 0.0
      %vm548 = vcmp.ge.f32.partialorder %v512, 0.0
      %vm549 = vcmp.ge.f32.partialorder %v515, 0.0
      %v550 = vmul.f32 %v392, 0.2
      %v551 = vmul.f32 %v395, 0.2
      %v552 = vmul.f32 %v400, 0.2
      %v553 = vmul.f32 %v403, 0.2
      %v554 = vmul.f32 %v408, 0.2
      %v555 = vmul.f32 %v411, 0.2
      %v556 = vmul.f32 %v416, 0.2
      %v557 = vmul.f32 %v419, 0.2
      %v558 = vmul.f32 %v424, 0.2
      %v559 = vmul.f32 %v427, 0.2
      %v560 = vmul.f32 %v432, 0.2
      %v561 = vmul.f32 %v435, 0.2
      %v562 = vmul.f32 %v440, 0.2
      %v563 = vmul.f32 %v443, 0.2
      %v564 = vmul.f32 %v448, 0.2
      %v565 = vmul.f32 %v451, 0.2
      %v566 = vmul.f32 %v456, 0.2
      %v567 = vmul.f32 %v459, 0.2
      %v568 = vmul.f32 %v464, 0.2
      %v569 = vmul.f32 %v467, 0.2
      %v570 = vmul.f32 %v472, 0.2
      %v571 = vmul.f32 %v475, 0.2
      %v572 = vmul.f32 %v480, 0.2
      %v573 = vmul.f32 %v483, 0.2
      %v574 = vmul.f32 %v488, 0.2
      %v575 = vmul.f32 %v491, 0.2
      %v576 = vmul.f32 %v496, 0.2
      %v577 = vmul.f32 %v499, 0.2
      %v578 = vmul.f32 %v504, 0.2
      %v579 = vmul.f32 %v507, 0.2
      %v580 = vmul.f32 %v512, 0.2
      %v581 = vmul.f32 %v515, 0.2
      %v582 = vsel %vm518, %v392, %v550
      %v583 = vsel %vm519, %v395, %v551
      %v584 = vsel %vm520, %v400, %v552
      %v585 = vsel %vm521, %v403, %v553
      %v586 = vsel %vm522, %v408, %v554
      %v587 = vsel %vm523, %v411, %v555
      %v588 = vsel %vm524, %v416, %v556
      %v589 = vsel %vm525, %v419, %v557
      %v590 = vsel %vm526, %v424, %v558
      %v591 = vsel %vm527, %v427, %v559
      %v592 = vsel %vm528, %v432, %v560
      %v593 = vsel %vm529, %v435, %v561
      %v594 = vsel %vm530, %v440, %v562
      %v595 = vsel %vm531, %v443, %v563
      %v596 = vsel %vm532, %v448, %v564
      %v597 = vsel %vm533, %v451, %v565
      %v598 = vsel %vm534, %v456, %v566
      %v599 = vsel %vm535, %v459, %v567
      %v600 = vsel %vm536, %v464, %v568
      %v601 = vsel %vm537, %v467, %v569
      %v602 = vsel %vm538, %v472, %v570
      %v603 = vsel %vm539, %v475, %v571
      %v604 = vsel %vm540, %v480, %v572
      %v605 = vsel %vm541, %v483, %v573
      %v606 = vsel %vm542, %v488, %v574
      %v607 = vsel %vm543, %v491, %v575
      %v608 = vsel %vm544, %v496, %v576
      %v609 = vsel %vm545, %v499, %v577
      %v610 = vsel %vm546, %v504, %v578
      %v611 = vsel %vm547, %v507, %v579
      %v612 = vsel %vm548, %v512, %v580
      %v613 = vsel %vm549, %v515, %v581
      %v614 = vpack.c.bf16 %v583, %v582
      %v615 = vpack.c.bf16 %v585, %v584
      %v616 = vpack.c.bf16 %v587, %v586
      %v617 = vpack.c.bf16 %v589, %v588
      %v618 = vpack.c.bf16 %v591, %v590
      %v619 = vpack.c.bf16 %v593, %v592
      %v620 = vpack.c.bf16 %v595, %v594
      %v621 = vpack.c.bf16 %v597, %v596
      %v622 = vpack.c.bf16 %v599, %v598
      %v623 = vpack.c.bf16 %v601, %v600
      %v624 = vpack.c.bf16 %v603, %v602
      %v625 = vpack.c.bf16 %v605, %v604
      %v626 = vpack.c.bf16 %v607, %v606
      %v627 = vpack.c.bf16 %v609, %v608
      %v628 = vpack.c.bf16 %v611, %v610
      %v629 = vpack.c.bf16 %v613, %v612
      %v646 = vunpack.c.l.b16 %v614
      %v647 = vunpack.c.h.b16 %v614
      %v648 = vunpack.c.l.b16 %v615
      %v649 = vunpack.c.h.b16 %v615
      %v650 = vunpack.c.l.b16 %v616
      %v651 = vunpack.c.h.b16 %v616
      %v652 = vunpack.c.l.b16 %v617
      %v653 = vunpack.c.h.b16 %v617
      %v654 = vunpack.c.l.b16 %v618
      %v655 = vunpack.c.h.b16 %v618
      %v656 = vunpack.c.l.b16 %v619
      %v657 = vunpack.c.h.b16 %v619
      %v658 = vunpack.c.l.b16 %v620
      %v659 = vunpack.c.h.b16 %v620
      %v660 = vunpack.c.l.b16 %v621
      %v661 = vunpack.c.h.b16 %v621
      %v662 = vunpack.c.l.b16 %v622
      %v663 = vunpack.c.h.b16 %v622
      %v664 = vunpack.c.l.b16 %v623
      %v665 = vunpack.c.h.b16 %v623
      %v666 = vunpack.c.l.b16 %v624
      %v667 = vunpack.c.h.b16 %v624
      %v668 = vunpack.c.l.b16 %v625
      %v669 = vunpack.c.h.b16 %v625
      %v670 = vunpack.c.l.b16 %v626
      %v671 = vunpack.c.h.b16 %v626
      %v672 = vunpack.c.l.b16 %v627
      %v673 = vunpack.c.h.b16 %v627
      %v674 = vunpack.c.l.b16 %v628
      %v675 = vunpack.c.h.b16 %v628
      %v676 = vunpack.c.l.b16 %v629
      %v677 = vunpack.c.h.b16 %v629
      %v678 = vpack.c.b16 %v646, %v646
      %v679 = vpack.c.b16 %v647, %v647
      %v680 = vpack.c.b16 %v648, %v648
      %v681 = vpack.c.b16 %v649, %v649
      %v682 = vpack.c.b16 %v650, %v650
      %v683 = vpack.c.b16 %v651, %v651
      %v684 = vpack.c.b16 %v652, %v652
      %v685 = vpack.c.b16 %v653, %v653
      %v686 = vpack.c.b16 %v654, %v654
      %v687 = vpack.c.b16 %v655, %v655
      %v688 = vpack.c.b16 %v656, %v656
      %v689 = vpack.c.b16 %v657, %v657
      %v690 = vpack.c.b16 %v658, %v658
      %v691 = vpack.c.b16 %v659, %v659
      %v692 = vpack.c.b16 %v660, %v660
      %v693 = vpack.c.b16 %v661, %v661
      %v694 = vpack.c.b16 %v662, %v662
      %v695 = vpack.c.b16 %v663, %v663
      %v696 = vpack.c.b16 %v664, %v664
      %v697 = vpack.c.b16 %v665, %v665
      %v698 = vpack.c.b16 %v666, %v666
      %v699 = vpack.c.b16 %v667, %v667
      %v700 = vpack.c.b16 %v668, %v668
      %v701 = vpack.c.b16 %v669, %v669
      %v702 = vpack.c.b16 %v670, %v670
      %v703 = vpack.c.b16 %v671, %v671
      %v704 = vpack.c.b16 %v672, %v672
      %v705 = vpack.c.b16 %v673, %v673
      %v706 = vpack.c.b16 %v674, %v674
      %v707 = vpack.c.b16 %v675, %v675
      %v708 = vpack.c.b16 %v676, %v676
      %v709 = vpack.c.b16 %v677, %v677
      %vm742 = vcmask 125952
      %743 = vst.msk [vmem:[%s172] sm:$0xf] %vm742, %v678
      %744 = vst.msk [vmem:[%s172 + $0x4] sm:$0xf] %vm742, %v679
      %745 = vst.msk [vmem:[%s172 + $0x8] sm:$0xf] %vm742, %v680
      %746 = vst.msk [vmem:[%s172 + $0xc] sm:$0xf] %vm742, %v681
      %747 = vst.msk [vmem:[%s172 + $0x10] sm:$0xf] %vm742, %v682
      %748 = vst.msk [vmem:[%s172 + $0x14] sm:$0xf] %vm742, %v683
      %749 = vst.msk [vmem:[%s172 + $0x18] sm:$0xf] %vm742, %v684
      %750 = vst.msk [vmem:[%s172 + $0x1c] sm:$0xf] %vm742, %v685
      %751 = vst.msk [vmem:[%s172 + $0x20] sm:$0xf] %vm742, %v686
      %752 = vst.msk [vmem:[%s172 + $0x24] sm:$0xf] %vm742, %v687
      %753 = vst.msk [vmem:[%s172 + $0x28] sm:$0xf] %vm742, %v688
      %754 = vst.msk [vmem:[%s172 + $0x2c] sm:$0xf] %vm742, %v689
      %755 = vst.msk [vmem:[%s172 + $0x30] sm:$0xf] %vm742, %v690
      %756 = vst.msk [vmem:[%s172 + $0x34] sm:$0xf] %vm742, %v691
      %757 = vst.msk [vmem:[%s172 + $0x38] sm:$0xf] %vm742, %v692
      %758 = vst.msk [vmem:[%s172 + $0x3c] sm:$0xf] %vm742, %v693
      %759 = vst.msk [vmem:[%s172 + $0x40] sm:$0xf] %vm742, %v694
      %760 = vst.msk [vmem:[%s172 + $0x44] sm:$0xf] %vm742, %v695
      %761 = vst.msk [vmem:[%s172 + $0x48] sm:$0xf] %vm742, %v696
      %762 = vst.msk [vmem:[%s172 + $0x4c] sm:$0xf] %vm742, %v697
      %763 = vst.msk [vmem:[%s172 + $0x50] sm:$0xf] %vm742, %v698
      %764 = vst.msk [vmem:[%s172 + $0x54] sm:$0xf] %vm742, %v699
      %765 = vst.msk [vmem:[%s172 + $0x58] sm:$0xf] %vm742, %v700
      %766 = vst.msk [vmem:[%s172 + $0x5c] sm:$0xf] %vm742, %v701
      %767 = vst.msk [vmem:[%s172 + $0x60] sm:$0xf] %vm742, %v702
      %768 = vst.msk [vmem:[%s172 + $0x64] sm:$0xf] %vm742, %v703
      %769 = vst.msk [vmem:[%s172 + $0x68] sm:$0xf] %vm742, %v704
      %770 = vst.msk [vmem:[%s172 + $0x6c] sm:$0xf] %vm742, %v705
      %771 = vst.msk [vmem:[%s172 + $0x70] sm:$0xf] %vm742, %v706
      %772 = vst.msk [vmem:[%s172 + $0x74] sm:$0xf] %vm742, %v707
      %773 = vst.msk [vmem:[%s172 + $0x78] sm:$0xf] %vm742, %v708
      %774 = vst.msk [vmem:[%s172 + $0x7c] sm:$0xf] %vm742, %v709
      %s775 = smul.u32 32, %s14
      %p776 = scmp.lt.s32.totalorder %s775, 63
      %s777 = scalar_select %p776, %s775, 63
      %s778 = smul.addr %s777, 4
      %s779 = scalar_lea.vmem %s3, %s778
      // Predicated region
      $region33: #{autoencoder_forward.6} parent=31 // pred_check
        %p780 = pneg %p100
      $region34: #{autoencoder_forward.6} parent=31 // pred_check_branch
        %782 = sbr.rel (%p780) target = $region36
      $region35: #{autoencoder_forward.6} parent=31 // pred_region
        %s783 = smul.u32 32, %s14
      $region36: #{autoencoder_forward.6} parent=31 // pred_fallthru
        _
    $region32: #{autoencoder_forward.6} parent=5 // pred_fallthru
      _
    %p784 = scmp.le.s32.totalorder 2, %s9
    // Predicated region
    $region37: #{autoencoder_forward.6} parent=5 // pred_check
      %p785 = pneg %p784
    $region38: #{autoencoder_forward.6} parent=5 // pred_check_branch
      %787 = sbr.rel (%p785) target = $region40
    $region39: #{autoencoder_forward.6} parent=5 // pred_region
      %s788 = ssub.s32 %s9, 2
      // Predicated region
      $region41: #{autoencoder_forward.6} parent=39 // pred_check
        %p789 = pneg %p106
      $region42: #{autoencoder_forward.6} parent=39 // pred_check_branch
        %791 = sbr.rel (%p789) target = $region44
      $region43: #{autoencoder_forward.6} parent=39 // pred_region
        %s792 = smul.u32 32, %s15
        %p793 = scmp.lt.s32.totalorder %s792, 63
        %s794 = scalar_select %p793, %s792, 63
        %s795 = smul.addr %s794, 4
        %s796 = scalar_lea.vmem %s3, %s795
      $region44: #{autoencoder_forward.6} parent=39 // pred_fallthru
        _
    $region40: #{autoencoder_forward.6} parent=5 // pred_fallthru
      _
  $region6: #{autoencoder_forward.6} parent=0 // loop_footer
    %s13 = sadd.s32 1, %s9
  $region7: #{autoencoder_forward.6} parent=0 // loop_footer_branch
    %8 = sbr.rel target = $region3
  $region8: #{autoencoder_forward.6} parent=0 // loop_exit
    _

// kernel: autoencoder_forward.7
$region0: #{autoencoder_forward.7}
  #allocation0 [shape = 'u32[]', space=smem, size = 0x4, offset = 0x4, fixed_abs, tag = 'smem constant byte address 0x4 - core index']
  #allocation1 [shape = 'u32[144,128]{1,0:T(1,128)}', space=vmem, size = 0x12000, scoped, tag = 'internal scratch']
  %s0 = inlined_call_operand.vmem [shape: bf16[128,144], index: 0, kind: input, shape index: {}]
  %s1 = inlined_call_operand.vmem [shape: bf16[144,32], index: 1, kind: input, shape index: {}]
  %s2 = inlined_call_operand.vmem [shape: f32[1,32], index: 2, kind: input, shape index: {}]
  %s3 = inlined_call_operand.vmem [shape: bf16[128,32], index: 3, kind: output, shape index: {}]
  %s4 = sld [smem:[#allocation0]]
  $region45: #{autoencoder_forward.7} parent=0
    _
  %s6 = ssub.s32 1, %s4
  %s7 = scalar_select 0, %s6, %s4
  loop: start=0, step=1, limit=4
  $region2: #{autoencoder_forward.7} parent=0 // loop_pre_header
    _
  $region3: #{autoencoder_forward.7} parent=0 // loop_header
    %s9 = sphi 0, %s13
    %p10 = scmp.ge.s32.totalorder %s9, 4
    %s19 = sphi 0, %s21
    %s22 = sphi 0, %s19
    %s23 = sphi 0, %s22
    %s39 = sphi 0, %s23
    %s43 = sphi 0, %s43
    %s45 = sphi 0, %s43
    %s46 = sphi 0, %s45
    %s60 = sphi 0, %s46
    %s64 = sphi 0, %s64
    %s66 = sphi 0, %s64
    %s67 = sphi 0, %s66
    %s81 = sphi 0, %s67
    %s87 = sphi 0, %s89
    %s90 = sphi 0, %s87
    %s91 = sphi 0, %s90
    %s107 = sphi 0, %s91
  $region4: #{autoencoder_forward.7} parent=0 // loop_header_branch
    %12 = sbr.rel (%p10) target = $region8
  $region5: #{autoencoder_forward.7} parent=0 // loop_body
    %s14 = ssub.s32 %s9, 1
    %s15 = ssub.s32 %s9, 2
    %s16 = sadd.s32 %s9, 1
    %s17 = ssub.s32 %s9, %s16
    %p18 = scmp.eq.s32.totalorder %s17, 0
    %s20 = sadd.s32 %s19, 1
    %s21 = scalar_select %p18, %s19, %s20
    %p24 = pneg %p18
    %p25 = scmp.eq.s32.totalorder %s9, 1
    %p26 = por %p24, %p25
    %p27 = scmp.ne.s32.totalorder %s19, %s22
    %p28 = scmp.eq.s32.totalorder %s9, 0
    %p29 = por %p27, %p28
    %p30 = scmp.ne.s32.totalorder %s19, %s22
    %p31 = scmp.eq.s32.totalorder %s14, 1
    %p32 = por %p30, %p31
    %p33 = scmp.ne.s32.totalorder %s22, %s23
    %p34 = scmp.eq.s32.totalorder %s14, 0
    %p35 = por %p33, %p34
    %p36 = scmp.ne.s32.totalorder %s22, %s23
    %p37 = scmp.eq.s32.totalorder %s15, 1
    %p38 = por %p36, %p37
    %p40 = scmp.ne.s32.totalorder %s23, %s39
    %p41 = scmp.eq.s32.totalorder %s15, 0
    %p42 = por %p40, %p41
    %s44 = sadd.s32 %s43, 1
    %p47 = scmp.eq.s32.totalorder %s9, 1
    %p48 = scmp.ne.s32.totalorder %s43, %s45
    %p49 = scmp.eq.s32.totalorder %s9, 0
    %p50 = por %p48, %p49
    %p51 = scmp.ne.s32.totalorder %s43, %s45
    %p52 = scmp.eq.s32.totalorder %s14, 1
    %p53 = por %p51, %p52
    %p54 = scmp.ne.s32.totalorder %s45, %s46
    %p55 = scmp.eq.s32.totalorder %s14, 0
    %p56 = por %p54, %p55
    %p57 = scmp.ne.s32.totalorder %s45, %s46
    %p58 = scmp.eq.s32.totalorder %s15, 1
    %p59 = por %p57, %p58
    %p61 = scmp.ne.s32.totalorder %s46, %s60
    %p62 = scmp.eq.s32.totalorder %s15, 0
    %p63 = por %p61, %p62
    %s65 = sadd.s32 %s64, 1
    %p68 = scmp.eq.s32.totalorder %s9, 1
    %p69 = scmp.ne.s32.totalorder %s64, %s66
    %p70 = scmp.eq.s32.totalorder %s9, 0
    %p71 = por %p69, %p70
    %p72 = scmp.ne.s32.totalorder %s64, %s66
    %p73 = scmp.eq.s32.totalorder %s14, 1
    %p74 = por %p72, %p73
    %p75 = scmp.ne.s32.totalorder %s66, %s67
    %p76 = scmp.eq.s32.totalorder %s14, 0
    %p77 = por %p75, %p76
    %p78 = scmp.ne.s32.totalorder %s66, %s67
    %p79 = scmp.eq.s32.totalorder %s15, 1
    %p80 = por %p78, %p79
    %p82 = scmp.ne.s32.totalorder %s67, %s81
    %p83 = scmp.eq.s32.totalorder %s15, 0
    %p84 = por %p82, %p83
    %s85 = ssub.s32 %s9, %s16
    %p86 = scmp.eq.s32.totalorder %s85, 0
    %s88 = sadd.s32 %s87, 1
    %s89 = scalar_select %p86, %s87, %s88
    %p92 = pneg %p86
    %p93 = scmp.eq.s32.totalorder %s9, 1
    %p94 = por %p92, %p93
    %p95 = scmp.ne.s32.totalorder %s87, %s90
    %p96 = scmp.eq.s32.totalorder %s9, 0
    %p97 = por %p95, %p96
    %p98 = scmp.ne.s32.totalorder %s87, %s90
    %p99 = scmp.eq.s32.totalorder %s14, 1
    %p100 = por %p98, %p99
    %p101 = scmp.ne.s32.totalorder %s90, %s91
    %p102 = scmp.eq.s32.totalorder %s14, 0
    %p103 = por %p101, %p102
    %p104 = scmp.ne.s32.totalorder %s90, %s91
    %p105 = scmp.eq.s32.totalorder %s15, 1
    %p106 = por %p104, %p105
    %p108 = scmp.ne.s32.totalorder %s91, %s107
    %p109 = scmp.eq.s32.totalorder %s15, 0
    %p110 = por %p108, %p109
    %p111 = scmp.le.s32.totalorder 1, %s9
    %p112 = scmp.lt.s32.totalorder %s9, 3
    %p113 = pnand %p111, %p112
    %p114 = pneg %p113
    // Predicated region
    $region9: #{autoencoder_forward.7} parent=5 // pred_check
      _
    $region10: #{autoencoder_forward.7} parent=5 // pred_check_branch
      %116 = sbr.rel (%p113) target = $region12
    $region11: #{autoencoder_forward.7} parent=5 // pred_region
      %s117 = ssub.s32 %s9, 1
      // Predicated region
      $region13: #{autoencoder_forward.7} parent=11 // pred_check
        %p118 = pneg %p56
      $region14: #{autoencoder_forward.7} parent=11 // pred_check_branch
        %120 = sbr.rel (%p118) target = $region16
      $region15: #{autoencoder_forward.7} parent=11 // pred_region
        _
      $region16: #{autoencoder_forward.7} parent=11 // pred_fallthru
        _
      // Predicated region
      $region17: #{autoencoder_forward.7} parent=11 // pred_check
        %p121 = pneg %p77
      $region18: #{autoencoder_forward.7} parent=11 // pred_check_branch
        %123 = sbr.rel (%p121) target = $region20
      $region19: #{autoencoder_forward.7} parent=11 // pred_region
        _
      $region20: #{autoencoder_forward.7} parent=11 // pred_fallthru
        _
    $region12: #{autoencoder_forward.7} parent=5 // pred_fallthru
      _
    %p124 = scmp.lt.s32.totalorder %s9, 2
    // Predicated region
    $region21: #{autoencoder_forward.7} parent=5 // pred_check
      %p125 = pneg %p124
    $region22: #{autoencoder_forward.7} parent=5 // pred_check_branch
      %127 = sbr.rel (%p125) target = $region24
    $region23: #{autoencoder_forward.7} parent=5 // pred_region
      // Predicated region
      $region25: #{autoencoder_forward.7} parent=23 // pred_check
        %p128 = pneg %p29
      $region26: #{autoencoder_forward.7} parent=23 // pred_check_branch
        %130 = sbr.rel (%p128) target = $region28
      $region27: #{autoencoder_forward.7} parent=23 // pred_region
        %s131 = smul.u32 8, %s9
        %p132 = scmp.lt.s32.totalorder %s131, 15
        %s133 = scalar_select %p132, %s131, 15
        %s134 = smul.addr %s133, 2
        %s135 = smul.addr %s134, 4
        %s136 = scalar_lea.vmem %s0, %s135
        %s137 = smul.u32 8, %s9
      $region28: #{autoencoder_forward.7} parent=23 // pred_fallthru
        _
    $region24: #{autoencoder_forward.7} parent=5 // pred_fallthru
      _
    %p138 = scmp.le.s32.totalorder 1, %s9
    %p139 = scmp.lt.s32.totalorder %s9, 3
    %p140 = pnand %p138, %p139
    %p141 = pneg %p140
    // Predicated region
    $region29: #{autoencoder_forward.7} parent=5 // pred_check
      _
    $region30: #{autoencoder_forward.7} parent=5 // pred_check_branch
      %143 = sbr.rel (%p140) target = $region32
    $region31: #{autoencoder_forward.7} parent=5 // pred_region
      %s144 = ssub.s32 %s9, 1
      %s145 = smul.u32 8, %s14
      %p146 = scmp.lt.s32.totalorder %s145, 15
      %s147 = scalar_select %p146, %s145, 15
      %s148 = smul.addr %s147, 2
      %s149 = smul.addr %s148, 4
      %s150 = scalar_lea.vmem %s0, %s149
      %p151 = pneg %p35
      %p152 = pneg %p32
      %p153 = pneg %p56
      %p154 = pneg %p53
      %p155 = pneg %p77
      %p156 = pneg %p74
      %p157 = pneg %p103
      %p158 = pneg %p100
      %s159 = smul.u32 8, %s14
      %p160 = scmp.lt.s32.totalorder %s159, 15
      %s161 = scalar_select %p160, %s159, 15
      %s162 = smul.addr %s161, 4
      %s163 = scalar_lea.vmem %s3, %s162
      %s164 = smul.u32 8, %s14
      %p165 = scmp.lt.s32.totalorder %s164, 15
      %s166 = scalar_select %p165, %s164, 15
      %s167 = smul.addr %s166, 2
      %s168 = smul.addr %s167, 4
      %s169 = scalar_lea.vmem %s0, %s168
      %s170 = smul.u32 8, %s14
      %s171 = smul.u32 8, %s14
      %p172 = scmp.lt.s32.totalorder %s171, 15
      %s173 = scalar_select %p172, %s171, 15
      %s174 = smul.addr %s173, 4
      %s175 = scalar_lea.vmem %s3, %s174
      %s176 = smul.u32 8, %s14
      %v178 = vld [vmem:[%s169] sm:$0xff]
      %v179 = vld [vmem:[%s169 + $0x8] sm:$0xff]
      %v180 = vld [vmem:[%s169 + $0x10] sm:$0xff]
      %v181 = vld [vmem:[%s169 + $0x18] sm:$0xff]
      %v182 = vld [vmem:[%s169 + $0x20] sm:$0xff]
      %v183 = vld [vmem:[%s169 + $0x28] sm:$0xff]
      %v184 = vld [vmem:[%s169 + $0x30] sm:$0xff]
      %v185 = vld [vmem:[%s169 + $0x38] sm:$0xff]
      %v186 = vld [vmem:[%s1] sm:$0xf]
      %v187 = vld [vmem:[%s1 + $0x4] sm:$0xf]
      %v188 = vld [vmem:[%s1 + $0x8] sm:$0xf]
      %v189 = vld [vmem:[%s1 + $0xc] sm:$0xf]
      %v190 = vld [vmem:[%s1 + $0x10] sm:$0xf]
      %v191 = vld [vmem:[%s1 + $0x14] sm:$0xf]
      %v192 = vld [vmem:[%s1 + $0x18] sm:$0xf]
      %v193 = vld [vmem:[%s1 + $0x1c] sm:$0xf]
      %v194 = vld [vmem:[%s1 + $0x20] sm:$0xf]
      %v195 = vld [vmem:[%s1 + $0x24] sm:$0xf]
      %v196 = vld [vmem:[%s1 + $0x28] sm:$0xf]
      %v197 = vld [vmem:[%s1 + $0x2c] sm:$0xf]
      %v198 = vld [vmem:[%s1 + $0x30] sm:$0xf]
      %v199 = vld [vmem:[%s1 + $0x34] sm:$0xf]
      %v200 = vld [vmem:[%s1 + $0x38] sm:$0xf]
      %v201 = vld [vmem:[%s1 + $0x3c] sm:$0xf]
      %v202 = vld [vmem:[%s1 + $0x40] sm:$0xf]
      %v203 = vld [vmem:[%s1 + $0x44] sm:$0xf]
      %v204 = vld [vmem:[%s2] sm:$0x1]
      %v206 = vlaneseq
      %v207 = vshrl.u32 %v206, 7
      %v208 = vsub.s32 0, %v207
      %v209 = vrot.slane %v204, %v208
      %v219 = vunpack.c.l.b16 %v178
      %v220 = vunpack.c.h.b16 %v178
      %v221 = vunpack.c.l.b16 %v179
      %v222 = vunpack.c.h.b16 %v179
      %v223 = vunpack.c.l.b16 %v180
      %v224 = vunpack.c.h.b16 %v180
      %v225 = vunpack.c.l.b16 %v181
      %v226 = vunpack.c.h.b16 %v181
      %v227 = vunpack.c.l.b16 %v182
      %v228 = vunpack.c.h.b16 %v182
      %v229 = vunpack.c.l.b16 %v183
      %v230 = vunpack.c.h.b16 %v183
      %v231 = vunpack.c.l.b16 %v184
      %v232 = vunpack.c.h.b16 %v184
      %v233 = vunpack.c.l.b16 %v185
      %v234 = vunpack.c.h.b16 %v185
      %v235 = vpack.c.b16 %v221, %v219
      %v236 = vpack.c.b16 %v222, %v220
      %v237 = vpack.c.b16 %v225, %v223
      %v238 = vpack.c.b16 %v226, %v224
      %v239 = vpack.c.b16 %v229, %v227
      %v240 = vpack.c.b16 %v230, %v228
      %v241 = vpack.c.b16 %v233, %v231
      %v242 = vpack.c.b16 %v234, %v232
      %v265 = vunpack.c.l.b16 %v186
      %v266 = vunpack.c.l.b16 %v187
      %v267 = vunpack.c.l.b16 %v188
      %v268 = vunpack.c.l.b16 %v189
      %v269 = vunpack.c.l.b16 %v190
      %v270 = vunpack.c.l.b16 %v191
      %v271 = vunpack.c.l.b16 %v192
      %v272 = vunpack.c.l.b16 %v193
      %v273 = vunpack.c.l.b16 %v194
      %v274 = vunpack.c.l.b16 %v195
      %v275 = vunpack.c.l.b16 %v196
      %v276 = vunpack.c.l.b16 %v197
      %v277 = vunpack.c.l.b16 %v198
      %v278 = vunpack.c.l.b16 %v199
      %v279 = vunpack.c.l.b16 %v200
      %v280 = vunpack.c.l.b16 %v201
      %v281 = vunpack.c.l.b16 %v202
      %v282 = vunpack.c.l.b16 %v203
      %v283 = vpack.c.b16 %v266, %v265
      %v284 = vpack.c.b16 %v268, %v267
      %v285 = vpack.c.b16 %v270, %v269
      %v286 = vpack.c.b16 %v272, %v271
      %v287 = vpack.c.b16 %v274, %v273
      %v288 = vpack.c.b16 %v276, %v275
      %v289 = vpack.c.b16 %v278, %v277
      %v290 = vpack.c.b16 %v280, %v279
      %v291 = vpack.c.b16 %v282, %v281
      %vm301 = vcmask 130048
      %v303 = vsel %vm301, %v236, 0
      %v306 = vsel %vm301, %v238, 0
      %v309 = vsel %vm301, %v240, 0
      %v312 = vsel %vm301, %v242, 0
      %314 = vmatprep.subr.bf16.mxu0 0
      %315 = vmatpush1.bf16.msra.mxu0 %v283
      %316 = vmatprep.subr.bf16.mxu0 0
      %317 = vmatpush1.bf16.msra.mxu0 %v284
      %318 = vmatprep.subr.bf16.mxu0 0
      %319 = vmatpush1.bf16.msra.mxu0 %v285
      %320 = vmatprep.subr.bf16.mxu0 0
      %321 = vmatpush1.bf16.msra.mxu0 %v286
      %322 = vmatprep.subr.bf16.mxu0 0
      %323 = vmatpush1.bf16.msra.mxu0 %v287
      %324 = vmatprep.subr.bf16.mxu0 0
      %325 = vmatpush1.bf16.msra.mxu0 %v288
      %326 = vmatprep.subr.bf16.mxu0 0
      %327 = vmatpush1.bf16.msra.mxu0 %v289
      %328 = vmatprep.subr.bf16.mxu0 0
      %329 = vmatpush1.bf16.msra.mxu0 %v290
      %330 = vmatprep.subr.bf16.mxu0 0
      %331 = vmatpush1.bf16.msra.mxu0 %v291
      %332 = vmatprep.subr.bf16.mxu0 0
      %333 = vmatpush1.bf16.msra.mxu0 0
      %334 = vmatprep.subr.bf16.mxu0 0
      %335 = vmatpush1.bf16.msra.mxu0 0
      %336 = vmatprep.subr.bf16.mxu0 0
      %337 = vmatpush1.bf16.msra.mxu0 0
      %338 = vmatprep.subr.bf16.mxu0 0
      %339 = vmatpush1.bf16.msra.mxu0 0
      %340 = vmatprep.subr.bf16.mxu0 0
      %341 = vmatpush1.bf16.msra.mxu0 0
      %342 = vmatprep.subr.bf16.mxu0 0
      %343 = vmatpush1.bf16.msra.mxu0 0
      %344 = vmatprep.subr.bf16.mxu0 0
      %345 = vmatpush1.bf16.msra.mxu0 0
      %346 = vmatprep.mubr.bf16.mxu0 %v303
      %347 = vmatmul.mubr.bf16.gmra.mrb[0].mxu0 %v235
      %v348 = vpop.f32.mrb[0].mxu0
      %v349 = vadd.f32 %v209, %v348
      %v350 = vpop.f32.mrb[0].mxu0
      %v351 = vpop.f32.mrb[0].mxu0
      %v352 = vadd.f32 %v209, %v351
      %v353 = vpop.f32.mrb[0].mxu0
      %354 = vmatprep.mubr.bf16.mxu0 %v306
      %355 = vmatmul.mubr.bf16.gmra.mrb[0].mxu0 %v237
      %v356 = vpop.f32.mrb[0].mxu0
      %v357 = vadd.f32 %v209, %v356
      %v358 = vpop.f32.mrb[0].mxu0
      %v359 = vpop.f32.mrb[0].mxu0
      %v360 = vadd.f32 %v209, %v359
      %v361 = vpop.f32.mrb[0].mxu0
      %362 = vmatprep.mubr.bf16.mxu0 %v309
      %363 = vmatmul.mubr.bf16.gmra.mrb[0].mxu0 %v239
      %v364 = vpop.f32.mrb[0].mxu0
      %v365 = vadd.f32 %v209, %v364
      %v366 = vpop.f32.mrb[0].mxu0
      %v367 = vpop.f32.mrb[0].mxu0
      %v368 = vadd.f32 %v209, %v367
      %v369 = vpop.f32.mrb[0].mxu0
      %370 = vmatprep.mubr.bf16.mxu0 %v312
      %371 = vmatmul.mubr.bf16.gmra.mrb[0].mxu0 %v241
      %v372 = vpop.f32.mrb[0].mxu0
      %v373 = vadd.f32 %v209, %v372
      %v374 = vpop.f32.mrb[0].mxu0
      %v375 = vpop.f32.mrb[0].mxu0
      %v376 = vadd.f32 %v209, %v375
      %v377 = vpop.f32.mrb[0].mxu0
      %378 = vdwg.mxu0
      %vm379 = vcmp.ge.f32.partialorder %v349, 0.0
      %vm380 = vcmp.ge.f32.partialorder %v352, 0.0
      %vm381 = vcmp.ge.f32.partialorder %v357, 0.0
      %vm382 = vcmp.ge.f32.partialorder %v360, 0.0
      %vm383 = vcmp.ge.f32.partialorder %v365, 0.0
      %vm384 = vcmp.ge.f32.partialorder %v368, 0.0
      %vm385 = vcmp.ge.f32.partialorder %v373, 0.0
      %vm386 = vcmp.ge.f32.partialorder %v376, 0.0
      %v387 = vmul.f32 %v349, 0.2
      %v388 = vmul.f32 %v352, 0.2
      %v389 = vmul.f32 %v357, 0.2
      %v390 = vmul.f32 %v360, 0.2
      %v391 = vmul.f32 %v365, 0.2
      %v392 = vmul.f32 %v368, 0.2
      %v393 = vmul.f32 %v373, 0.2
      %v394 = vmul.f32 %v376, 0.2
      %v395 = vsel %vm379, %v349, %v387
      %v396 = vsel %vm380, %v352, %v388
      %v397 = vsel %vm381, %v357, %v389
      %v398 = vsel %vm382, %v360, %v390
      %v399 = vsel %vm383, %v365, %v391
      %v400 = vsel %vm384, %v368, %v392
      %v401 = vsel %vm385, %v373, %v393
      %v402 = vsel %vm386, %v376, %v394
      %v403 = vpack.c.bf16 %v396, %v395
      %v404 = vpack.c.bf16 %v398, %v397
      %v405 = vpack.c.bf16 %v400, %v399
      %v406 = vpack.c.bf16 %v402, %v401
      %v411 = vunpack.c.l.b16 %v403
      %v412 = vunpack.c.h.b16 %v403
      %v413 = vunpack.c.l.b16 %v404
      %v414 = vunpack.c.h.b16 %v404
      %v415 = vunpack.c.l.b16 %v405
      %v416 = vunpack.c.h.b16 %v405
      %v417 = vunpack.c.l.b16 %v406
      %v418 = vunpack.c.h.b16 %v406
      %v419 = vpack.c.b16 %v411, %v411
      %v420 = vpack.c.b16 %v412, %v412
      %v421 = vpack.c.b16 %v413, %v413
      %v422 = vpack.c.b16 %v414, %v414
      %v423 = vpack.c.b16 %v415, %v415
      %v424 = vpack.c.b16 %v416, %v416
      %v425 = vpack.c.b16 %v417, %v417
      %v426 = vpack.c.b16 %v418, %v418
      %vm435 = vcmask 257024
      %436 = vst.msk [vmem:[%s175] sm:$0xf] %vm435, %v419
      %437 = vst.msk [vmem:[%s175 + $0x4] sm:$0xf] %vm435, %v420
      %438 = vst.msk [vmem:[%s175 + $0x8] sm:$0xf] %vm435, %v421
      %439 = vst.msk [vmem:[%s175 + $0xc] sm:$0xf] %vm435, %v422
      %440 = vst.msk [vmem:[%s175 + $0x10] sm:$0xf] %vm435, %v423
      %441 = vst.msk [vmem:[%s175 + $0x14] sm:$0xf] %vm435, %v424
      %442 = vst.msk [vmem:[%s175 + $0x18] sm:$0xf] %vm435, %v425
      %443 = vst.msk [vmem:[%s175 + $0x1c] sm:$0xf] %vm435, %v426
      %s444 = smul.u32 8, %s14
      %p445 = scmp.lt.s32.totalorder %s444, 15
      %s446 = scalar_select %p445, %s444, 15
      %s447 = smul.addr %s446, 4
      %s448 = scalar_lea.vmem %s3, %s447
      // Predicated region
      $region33: #{autoencoder_forward.7} parent=31 // pred_check
        %p449 = pneg %p100
      $region34: #{autoencoder_forward.7} parent=31 // pred_check_branch
        %451 = sbr.rel (%p449) target = $region36
      $region35: #{autoencoder_forward.7} parent=31 // pred_region
        %s452 = smul.u32 8, %s14
      $region36: #{autoencoder_forward.7} parent=31 // pred_fallthru
        _
    $region32: #{autoencoder_forward.7} parent=5 // pred_fallthru
      _
    %p453 = scmp.le.s32.totalorder 2, %s9
    // Predicated region
    $region37: #{autoencoder_forward.7} parent=5 // pred_check
      %p454 = pneg %p453
    $region38: #{autoencoder_forward.7} parent=5 // pred_check_branch
      %456 = sbr.rel (%p454) target = $region40
    $region39: #{autoencoder_forward.7} parent=5 // pred_region
      %s457 = ssub.s32 %s9, 2
      // Predicated region
      $region41: #{autoencoder_forward.7} parent=39 // pred_check
        %p458 = pneg %p106
      $region42: #{autoencoder_forward.7} parent=39 // pred_check_branch
        %460 = sbr.rel (%p458) target = $region44
      $region43: #{autoencoder_forward.7} parent=39 // pred_region
        %s461 = smul.u32 8, %s15
        %p462 = scmp.lt.s32.totalorder %s461, 15
        %s463 = scalar_select %p462, %s461, 15
        %s464 = smul.addr %s463, 4
        %s465 = scalar_lea.vmem %s3, %s464
      $region44: #{autoencoder_forward.7} parent=39 // pred_fallthru
        _
    $region40: #{autoencoder_forward.7} parent=5 // pred_fallthru
      _
  $region6: #{autoencoder_forward.7} parent=0 // loop_footer
    %s13 = sadd.s32 1, %s9
  $region7: #{autoencoder_forward.7} parent=0 // loop_footer_branch
    %8 = sbr.rel target = $region3
  $region8: #{autoencoder_forward.7} parent=0 // loop_exit
    _

// kernel: autoencoder_forward.8
$region0: #{autoencoder_forward.8}
  #allocation0 [shape = 'u32[]', space=smem, size = 0x4, offset = 0x4, fixed_abs, tag = 'smem constant byte address 0x4 - core index']
  #allocation1 [shape = 'u32[144,128]{1,0:T(1,128)}', space=vmem, size = 0x12000, scoped, tag = 'internal scratch']
  %s0 = inlined_call_operand.vmem [shape: bf16[2,2048], index: 0, kind: input, shape index: {}]
  %s1 = inlined_call_operand.vmem [shape: bf16[2048,64], index: 1, kind: input, shape index: {}]
  %s2 = inlined_call_operand.vmem [shape: f32[1,64], index: 2, kind: input, shape index: {}]
  %s3 = inlined_call_operand.vmem [shape: bf16[64,256], index: 3, kind: input, shape index: {}]
  %s4 = inlined_call_operand.vmem [shape: f32[1,256], index: 4, kind: input, shape index: {}]
  %s5 = inlined_call_operand.vmem [shape: bf16[2,256], index: 5, kind: output, shape index: {}]
  %s6 = sld [smem:[#allocation0]]
  $region30: #{autoencoder_forward.8} parent=0
    _
  %s8 = ssub.s32 1, %s6
  %s9 = scalar_select 0, %s8, %s6
  // Predicated region
  $region2: #{autoencoder_forward.8} parent=0 // pred_check
    _
  $region3: #{autoencoder_forward.8} parent=0 // pred_check_branch
    %11 = sbr.rel (0) target = $region5
  $region4: #{autoencoder_forward.8} parent=0 // pred_region
    _
  $region5: #{autoencoder_forward.8} parent=0 // pred_fallthru
    _
  // Predicated region
  $region6: #{autoencoder_forward.8} parent=0 // pred_check
    _
  $region7: #{autoencoder_forward.8} parent=0 // pred_check_branch
    %13 = sbr.rel (0) target = $region9
  $region8: #{autoencoder_forward.8} parent=0 // pred_region
    _
  $region9: #{autoencoder_forward.8} parent=0 // pred_fallthru
    _
  // Predicated region
  $region10: #{autoencoder_forward.8} parent=0 // pred_check
    _
  $region11: #{autoencoder_forward.8} parent=0 // pred_check_branch
    %15 = sbr.rel (0) target = $region13
  $region12: #{autoencoder_forward.8} parent=0 // pred_region
    _
  $region13: #{autoencoder_forward.8} parent=0 // pred_fallthru
    _
  // Predicated region
  $region14: #{autoencoder_forward.8} parent=0 // pred_check
    _
  $region15: #{autoencoder_forward.8} parent=0 // pred_check_branch
    %17 = sbr.rel (0) target = $region17
  $region16: #{autoencoder_forward.8} parent=0 // pred_region
    _
  $region17: #{autoencoder_forward.8} parent=0 // pred_fallthru
    _
  // Predicated region
  $region18: #{autoencoder_forward.8} parent=0 // pred_check
    _
  $region19: #{autoencoder_forward.8} parent=0 // pred_check_branch
    %19 = sbr.rel (0) target = $region21
  $region20: #{autoencoder_forward.8} parent=0 // pred_region
    _
  $region21: #{autoencoder_forward.8} parent=0 // pred_fallthru
    _
  %v21 = vld [vmem:[%s0] sm:$0xff]
  %v22 = vld [vmem:[%s0 + $0x8] sm:$0xff]
  %v23 = vld [vmem:[%s1] sm:$0xf]
  %v24 = vld [vmem:[%s1 + $0x4] sm:$0xf]
  %v25 = vld [vmem:[%s1 + $0x8] sm:$0xf]
  %v26 = vld [vmem:[%s1 + $0xc] sm:$0xf]
  %v27 = vld [vmem:[%s1 + $0x10] sm:$0xf]
  %v28 = vld [vmem:[%s1 + $0x14] sm:$0xf]
  %v29 = vld [vmem:[%s1 + $0x18] sm:$0xf]
  %v30 = vld [vmem:[%s1 + $0x1c] sm:$0xf]
  %v31 = vld [vmem:[%s1 + $0x20] sm:$0xf]
  %v32 = vld [vmem:[%s1 + $0x24] sm:$0xf]
  %v33 = vld [vmem:[%s1 + $0x28] sm:$0xf]
  %v34 = vld [vmem:[%s1 + $0x2c] sm:$0xf]
  %v35 = vld [vmem:[%s1 + $0x30] sm:$0xf]
  %v36 = vld [vmem:[%s1 + $0x34] sm:$0xf]
  %v37 = vld [vmem:[%s1 + $0x38] sm:$0xf]
  %v38 = vld [vmem:[%s1 + $0x3c] sm:$0xf]
  %v39 = vld [vmem:[%s1 + $0x40] sm:$0xf]
  %v40 = vld [vmem:[%s1 + $0x44] sm:$0xf]
  %v41 = vld [vmem:[%s1 + $0x48] sm:$0xf]
  %v42 = vld [vmem:[%s1 + $0x4c] sm:$0xf]
  %v43 = vld [vmem:[%s1 + $0x50] sm:$0xf]
  %v44 = vld [vmem:[%s1 + $0x54] sm:$0xf]
  %v45 = vld [vmem:[%s1 + $0x58] sm:$0xf]
  %v46 = vld [vmem:[%s1 + $0x5c] sm:$0xf]
  %v47 = vld [vmem:[%s1 + $0x60] sm:$0xf]
  %v48 = vld [vmem:[%s1 + $0x64] sm:$0xf]
  %v49 = vld [vmem:[%s1 + $0x68] sm:$0xf]
  %v50 = vld [vmem:[%s1 + $0x6c] sm:$0xf]
  %v51 = vld [vmem:[%s1 + $0x70] sm:$0xf]
  %v52 = vld [vmem:[%s1 + $0x74] sm:$0xf]
  %v53 = vld [vmem:[%s1 + $0x78] sm:$0xf]
  %v54 = vld [vmem:[%s1 + $0x7c] sm:$0xf]
  %v55 = vld [vmem:[%s1 + $0x80] sm:$0xf]
  %v56 = vld [vmem:[%s1 + $0x84] sm:$0xf]
  %v57 = vld [vmem:[%s1 + $0x88] sm:$0xf]
  %v58 = vld [vmem:[%s1 + $0x8c] sm:$0xf]
  %v59 = vld [vmem:[%s1 + $0x90] sm:$0xf]
  %v60 = vld [vmem:[%s1 + $0x94] sm:$0xf]
  %v61 = vld [vmem:[%s1 + $0x98] sm:$0xf]
  %v62 = vld [vmem:[%s1 + $0x9c] sm:$0xf]
  %v63 = vld [vmem:[%s1 + $0xa0] sm:$0xf]
  %v64 = vld [vmem:[%s1 + $0xa4] sm:$0xf]
  %v65 = vld [vmem:[%s1 + $0xa8] sm:$0xf]
  %v66 = vld [vmem:[%s1 + $0xac] sm:$0xf]
  %v67 = vld [vmem:[%s1 + $0xb0] sm:$0xf]
  %v68 = vld [vmem:[%s1 + $0xb4] sm:$0xf]
  %v69 = vld [vmem:[%s1 + $0xb8] sm:$0xf]
  %v70 = vld [vmem:[%s1 + $0xbc] sm:$0xf]
  %v71 = vld [vmem:[%s1 + $0xc0] sm:$0xf]
  %v72 = vld [vmem:[%s1 + $0xc4] sm:$0xf]
  %v73 = vld [vmem:[%s1 + $0xc8] sm:$0xf]
  %v74 = vld [vmem:[%s1 + $0xcc] sm:$0xf]
  %v75 = vld [vmem:[%s1 + $0xd0] sm:$0xf]
  %v76 = vld [vmem:[%s1 + $0xd4] sm:$0xf]
  %v77 = vld [vmem:[%s1 + $0xd8] sm:$0xf]
  %v78 = vld [vmem:[%s1 + $0xdc] sm:$0xf]
  %v79 = vld [vmem:[%s1 + $0xe0] sm:$0xf]
  %v80 = vld [vmem:[%s1 + $0xe4] sm:$0xf]
  %v81 = vld [vmem:[%s1 + $0xe8] sm:$0xf]
  %v82 = vld [vmem:[%s1 + $0xec] sm:$0xf]
  %v83 = vld [vmem:[%s1 + $0xf0] sm:$0xf]
  %v84 = vld [vmem:[%s1 + $0xf4] sm:$0xf]
  %v85 = vld [vmem:[%s1 + $0xf8] sm:$0xf]
  %v86 = vld [vmem:[%s1 + $0xfc] sm:$0xf]
  %v87 = vld [vmem:[%s1 + $0x100] sm:$0xf]
  %v88 = vld [vmem:[%s1 + $0x104] sm:$0xf]
  %v89 = vld [vmem:[%s1 + $0x108] sm:$0xf]
  %v90 = vld [vmem:[%s1 + $0x10c] sm:$0xf]
  %v91 = vld [vmem:[%s1 + $0x110] sm:$0xf]
  %v92 = vld [vmem:[%s1 + $0x114] sm:$0xf]
  %v93 = vld [vmem:[%s1 + $0x118] sm:$0xf]
  %v94 = vld [vmem:[%s1 + $0x11c] sm:$0xf]
  %v95 = vld [vmem:[%s1 + $0x120] sm:$0xf]
  %v96 = vld [vmem:[%s1 + $0x124] sm:$0xf]
  %v97 = vld [vmem:[%s1 + $0x128] sm:$0xf]
  %v98 = vld [vmem:[%s1 + $0x12c] sm:$0xf]
  %v99 = vld [vmem:[%s1 + $0x130] sm:$0xf]
  %v100 = vld [vmem:[%s1 + $0x134] sm:$0xf]
  %v101 = vld [vmem:[%s1 + $0x138] sm:$0xf]
  %v102 = vld [vmem:[%s1 + $0x13c] sm:$0xf]
  %v103 = vld [vmem:[%s1 + $0x140] sm:$0xf]
  %v104 = vld [vmem:[%s1 + $0x144] sm:$0xf]
  %v105 = vld [vmem:[%s1 + $0x148] sm:$0xf]
  %v106 = vld [vmem:[%s1 + $0x14c] sm:$0xf]
  %v107 = vld [vmem:[%s1 + $0x150] sm:$0xf]
  %v108 = vld [vmem:[%s1 + $0x154] sm:$0xf]
  %v109 = vld [vmem:[%s1 + $0x158] sm:$0xf]
  %v110 = vld [vmem:[%s1 + $0x15c] sm:$0xf]
  %v111 = vld [vmem:[%s1 + $0x160] sm:$0xf]
  %v112 = vld [vmem:[%s1 + $0x164] sm:$0xf]
  %v113 = vld [vmem:[%s1 + $0x168] sm:$0xf]
  %v114 = vld [vmem:[%s1 + $0x16c] sm:$0xf]
  %v115 = vld [vmem:[%s1 + $0x170] sm:$0xf]
  %v116 = vld [vmem:[%s1 + $0x174] sm:$0xf]
  %v117 = vld [vmem:[%s1 + $0x178] sm:$0xf]
  %v118 = vld [vmem:[%s1 + $0x17c] sm:$0xf]
  %v119 = vld [vmem:[%s1 + $0x180] sm:$0xf]
  %v120 = vld [vmem:[%s1 + $0x184] sm:$0xf]
  %v121 = vld [vmem:[%s1 + $0x188] sm:$0xf]
  %v122 = vld [vmem:[%s1 + $0x18c] sm:$0xf]
  %v123 = vld [vmem:[%s1 + $0x190] sm:$0xf]
  %v124 = vld [vmem:[%s1 + $0x194] sm:$0xf]
  %v125 = vld [vmem:[%s1 + $0x198] sm:$0xf]
  %v126 = vld [vmem:[%s1 + $0x19c] sm:$0xf]
  %v127 = vld [vmem:[%s1 + $0x1a0] sm:$0xf]
  %v128 = vld [vmem:[%s1 + $0x1a4] sm:$0xf]
  %v129 = vld [vmem:[%s1 + $0x1a8] sm:$0xf]
  %v130 = vld [vmem:[%s1 + $0x1ac] sm:$0xf]
  %v131 = vld [vmem:[%s1 + $0x1b0] sm:$0xf]
  %v132 = vld [vmem:[%s1 + $0x1b4] sm:$0xf]
  %v133 = vld [vmem:[%s1 + $0x1b8] sm:$0xf]
  %v134 = vld [vmem:[%s1 + $0x1bc] sm:$0xf]
  %v135 = vld [vmem:[%s1 + $0x1c0] sm:$0xf]
  %v136 = vld [vmem:[%s1 + $0x1c4] sm:$0xf]
  %v137 = vld [vmem:[%s1 + $0x1c8] sm:$0xf]
  %v138 = vld [vmem:[%s1 + $0x1cc] sm:$0xf]
  %v139 = vld [vmem:[%s1 + $0x1d0] sm:$0xf]
  %v140 = vld [vmem:[%s1 + $0x1d4] sm:$0xf]
  %v141 = vld [vmem:[%s1 + $0x1d8] sm:$0xf]
  %v142 = vld [vmem:[%s1 + $0x1dc] sm:$0xf]
  %v143 = vld [vmem:[%s1 + $0x1e0] sm:$0xf]
  %v144 = vld [vmem:[%s1 + $0x1e4] sm:$0xf]
  %v145 = vld [vmem:[%s1 + $0x1e8] sm:$0xf]
  %v146 = vld [vmem:[%s1 + $0x1ec] sm:$0xf]
  %v147 = vld [vmem:[%s1 + $0x1f0] sm:$0xf]
  %v148 = vld [vmem:[%s1 + $0x1f4] sm:$0xf]
  %v149 = vld [vmem:[%s1 + $0x1f8] sm:$0xf]
  %v150 = vld [vmem:[%s1 + $0x1fc] sm:$0xf]
  %v151 = vld [vmem:[%s1 + $0x200] sm:$0xf]
  %v152 = vld [vmem:[%s1 + $0x204] sm:$0xf]
  %v153 = vld [vmem:[%s1 + $0x208] sm:$0xf]
  %v154 = vld [vmem:[%s1 + $0x20c] sm:$0xf]
  %v155 = vld [vmem:[%s1 + $0x210] sm:$0xf]
  %v156 = vld [vmem:[%s1 + $0x214] sm:$0xf]
  %v157 = vld [vmem:[%s1 + $0x218] sm:$0xf]
  %v158 = vld [vmem:[%s1 + $0x21c] sm:$0xf]
  %v159 = vld [vmem:[%s1 + $0x220] sm:$0xf]
  %v160 = vld [vmem:[%s1 + $0x224] sm:$0xf]
  %v161 = vld [vmem:[%s1 + $0x228] sm:$0xf]
  %v162 = vld [vmem:[%s1 + $0x22c] sm:$0xf]
  %v163 = vld [vmem:[%s1 + $0x230] sm:$0xf]
  %v164 = vld [vmem:[%s1 + $0x234] sm:$0xf]
  %v165 = vld [vmem:[%s1 + $0x238] sm:$0xf]
  %v166 = vld [vmem:[%s1 + $0x23c] sm:$0xf]
  %v167 = vld [vmem:[%s1 + $0x240] sm:$0xf]
  %v168 = vld [vmem:[%s1 + $0x244] sm:$0xf]
  %v169 = vld [vmem:[%s1 + $0x248] sm:$0xf]
  %v170 = vld [vmem:[%s1 + $0x24c] sm:$0xf]
  %v171 = vld [vmem:[%s1 + $0x250] sm:$0xf]
  %v172 = vld [vmem:[%s1 + $0x254] sm:$0xf]
  %v173 = vld [vmem:[%s1 + $0x258] sm:$0xf]
  %v174 = vld [vmem:[%s1 + $0x25c] sm:$0xf]
  %v175 = vld [vmem:[%s1 + $0x260] sm:$0xf]
  %v176 = vld [vmem:[%s1 + $0x264] sm:$0xf]
  %v177 = vld [vmem:[%s1 + $0x268] sm:$0xf]
  %v178 = vld [vmem:[%s1 + $0x26c] sm:$0xf]
  %v179 = vld [vmem:[%s1 + $0x270] sm:$0xf]
  %v180 = vld [vmem:[%s1 + $0x274] sm:$0xf]
  %v181 = vld [vmem:[%s1 + $0x278] sm:$0xf]
  %v182 = vld [vmem:[%s1 + $0x27c] sm:$0xf]
  %v183 = vld [vmem:[%s1 + $0x280] sm:$0xf]
  %v184 = vld [vmem:[%s1 + $0x284] sm:$0xf]
  %v185 = vld [vmem:[%s1 + $0x288] sm:$0xf]
  %v186 = vld [vmem:[%s1 + $0x28c] sm:$0xf]
  %v187 = vld [vmem:[%s1 + $0x290] sm:$0xf]
  %v188 = vld [vmem:[%s1 + $0x294] sm:$0xf]
  %v189 = vld [vmem:[%s1 + $0x298] sm:$0xf]
  %v190 = vld [vmem:[%s1 + $0x29c] sm:$0xf]
  %v191 = vld [vmem:[%s1 + $0x2a0] sm:$0xf]
  %v192 = vld [vmem:[%s1 + $0x2a4] sm:$0xf]
  %v193 = vld [vmem:[%s1 + $0x2a8] sm:$0xf]
  %v194 = vld [vmem:[%s1 + $0x2ac] sm:$0xf]
  %v195 = vld [vmem:[%s1 + $0x2b0] sm:$0xf]
  %v196 = vld [vmem:[%s1 + $0x2b4] sm:$0xf]
  %v197 = vld [vmem:[%s1 + $0x2b8] sm:$0xf]
  %v198 = vld [vmem:[%s1 + $0x2bc] sm:$0xf]
  %v199 = vld [vmem:[%s1 + $0x2c0] sm:$0xf]
  %v200 = vld [vmem:[%s1 + $0x2c4] sm:$0xf]
  %v201 = vld [vmem:[%s1 + $0x2c8] sm:$0xf]
  %v202 = vld [vmem:[%s1 + $0x2cc] sm:$0xf]
  %v203 = vld [vmem:[%s1 + $0x2d0] sm:$0xf]
  %v204 = vld [vmem:[%s1 + $0x2d4] sm:$0xf]
  %v205 = vld [vmem:[%s1 + $0x2d8] sm:$0xf]
  %v206 = vld [vmem:[%s1 + $0x2dc] sm:$0xf]
  %v207 = vld [vmem:[%s1 + $0x2e0] sm:$0xf]
  %v208 = vld [vmem:[%s1 + $0x2e4] sm:$0xf]
  %v209 = vld [vmem:[%s1 + $0x2e8] sm:$0xf]
  %v210 = vld [vmem:[%s1 + $0x2ec] sm:$0xf]
  %v211 = vld [vmem:[%s1 + $0x2f0] sm:$0xf]
  %v212 = vld [vmem:[%s1 + $0x2f4] sm:$0xf]
  %v213 = vld [vmem:[%s1 + $0x2f8] sm:$0xf]
  %v214 = vld [vmem:[%s1 + $0x2fc] sm:$0xf]
  %v215 = vld [vmem:[%s1 + $0x300] sm:$0xf]
  %v216 = vld [vmem:[%s1 + $0x304] sm:$0xf]
  %v217 = vld [vmem:[%s1 + $0x308] sm:$0xf]
  %v218 = vld [vmem:[%s1 + $0x30c] sm:$0xf]
  %v219 = vld [vmem:[%s1 + $0x310] sm:$0xf]
  %v220 = vld [vmem:[%s1 + $0x314] sm:$0xf]
  %v221 = vld [vmem:[%s1 + $0x318] sm:$0xf]
  %v222 = vld [vmem:[%s1 + $0x31c] sm:$0xf]
  %v223 = vld [vmem:[%s1 + $0x320] sm:$0xf]
  %v224 = vld [vmem:[%s1 + $0x324] sm:$0xf]
  %v225 = vld [vmem:[%s1 + $0x328] sm:$0xf]
  %v226 = vld [vmem:[%s1 + $0x32c] sm:$0xf]
  %v227 = vld [vmem:[%s1 + $0x330] sm:$0xf]
  %v228 = vld [vmem:[%s1 + $0x334] sm:$0xf]
  %v229 = vld [vmem:[%s1 + $0x338] sm:$0xf]
  %v230 = vld [vmem:[%s1 + $0x33c] sm:$0xf]
  %v231 = vld [vmem:[%s1 + $0x340] sm:$0xf]
  %v232 = vld [vmem:[%s1 + $0x344] sm:$0xf]
  %v233 = vld [vmem:[%s1 + $0x348] sm:$0xf]
  %v234 = vld [vmem:[%s1 + $0x34c] sm:$0xf]
  %v235 = vld [vmem:[%s1 + $0x350] sm:$0xf]
  %v236 = vld [vmem:[%s1 + $0x354] sm:$0xf]
  %v237 = vld [vmem:[%s1 + $0x358] sm:$0xf]
  %v238 = vld [vmem:[%s1 + $0x35c] sm:$0xf]
  %v239 = vld [vmem:[%s1 + $0x360] sm:$0xf]
  %v240 = vld [vmem:[%s1 + $0x364] sm:$0xf]
  %v241 = vld [vmem:[%s1 + $0x368] sm:$0xf]
  %v242 = vld [vmem:[%s1 + $0x36c] sm:$0xf]
  %v243 = vld [vmem:[%s1 + $0x370] sm:$0xf]
  %v244 = vld [vmem:[%s1 + $0x374] sm:$0xf]
  %v245 = vld [vmem:[%s1 + $0x378] sm:$0xf]
  %v246 = vld [vmem:[%s1 + $0x37c] sm:$0xf]
  %v247 = vld [vmem:[%s1 + $0x380] sm:$0xf]
  %v248 = vld [vmem:[%s1 + $0x384] sm:$0xf]
  %v249 = vld [vmem:[%s1 + $0x388] sm:$0xf]
  %v250 = vld [vmem:[%s1 + $0x38c] sm:$0xf]
  %v251 = vld [vmem:[%s1 + $0x390] sm:$0xf]
  %v252 = vld [vmem:[%s1 + $0x394] sm:$0xf]
  %v253 = vld [vmem:[%s1 + $0x398] sm:$0xf]
  %v254 = vld [vmem:[%s1 + $0x39c] sm:$0xf]
  %v255 = vld [vmem:[%s1 + $0x3a0] sm:$0xf]
  %v256 = vld [vmem:[%s1 + $0x3a4] sm:$0xf]
  %v257 = vld [vmem:[%s1 + $0x3a8] sm:$0xf]
  %v258 = vld [vmem:[%s1 + $0x3ac] sm:$0xf]
  %v259 = vld [vmem:[%s1 + $0x3b0] sm:$0xf]
  %v260 = vld [vmem:[%s1 + $0x3b4] sm:$0xf]
  %v261 = vld [vmem:[%s1 + $0x3b8] sm:$0xf]
  %v262 = vld [vmem:[%s1 + $0x3bc] sm:$0xf]
  %v263 = vld [vmem:[%s1 + $0x3c0] sm:$0xf]
  %v264 = vld [vmem:[%s1 + $0x3c4] sm:$0xf]
  %v265 = vld [vmem:[%s1 + $0x3c8] sm:$0xf]
  %v266 = vld [vmem:[%s1 + $0x3cc] sm:$0xf]
  %v267 = vld [vmem:[%s1 + $0x3d0] sm:$0xf]
  %v268 = vld [vmem:[%s1 + $0x3d4] sm:$0xf]
  %v269 = vld [vmem:[%s1 + $0x3d8] sm:$0xf]
  %v270 = vld [vmem:[%s1 + $0x3dc] sm:$0xf]
  %v271 = vld [vmem:[%s1 + $0x3e0] sm:$0xf]
  %v272 = vld [vmem:[%s1 + $0x3e4] sm:$0xf]
  %v273 = vld [vmem:[%s1 + $0x3e8] sm:$0xf]
  %v274 = vld [vmem:[%s1 + $0x3ec] sm:$0xf]
  %v275 = vld [vmem:[%s1 + $0x3f0] sm:$0xf]
  %v276 = vld [vmem:[%s1 + $0x3f4] sm:$0xf]
  %v277 = vld [vmem:[%s1 + $0x3f8] sm:$0xf]
  %v278 = vld [vmem:[%s1 + $0x3fc] sm:$0xf]
  %v279 = vld [vmem:[%s2] sm:$0x1]
  %v281 = vlaneseq
  %v282 = vshrl.u32 %v281, 7
  %v283 = vsub.s32 0, %v282
  %v284 = vrot.slane %v279, %v283
  %v288 = vcombine.high %v21, %v21
  %v290 = vunpack.c.l.s4 1966171168
  %v291 = vunpack.c.0.s8 %v290
  %v292 = vlaneseq
  %v293 = vshrl.u32 %v292, 7
  %v294 = vsub.s32 %v291, %v293
  %v295 = vrot.slane %v21, %v294
  %v297 = vunpack.c.l.s4 1966171168
  %v298 = vunpack.c.0.s8 %v297
  %v299 = vlaneseq
  %v300 = vshrl.u32 %v299, 7
  %v301 = vsub.s32 %v298, %v300
  %v302 = vrot.slane %v288, %v301
  %v303 = vcombine.high %v295, %v295
  %v304 = vcombine.high %v302, %v302
  %v306 = vunpack.c.l.s4 1966171168
  %v307 = vunpack.c.0.s8 %v306
  %v308 = vlaneseq
  %v309 = vshrl.u32 %v308, 7
  %v310 = vsub.s32 %v307, %v309
  %v311 = vrot.slane %v295, %v310
  %v313 = vunpack.c.l.s4 1966171168
  %v314 = vunpack.c.0.s8 %v313
  %v315 = vlaneseq
  %v316 = vshrl.u32 %v315, 7
  %v317 = vsub.s32 %v314, %v316
  %v318 = vrot.slane %v302, %v317
  %v320 = vunpack.c.l.s4 1966171168
  %v321 = vunpack.c.0.s8 %v320
  %v322 = vlaneseq
  %v323 = vshrl.u32 %v322, 7
  %v324 = vsub.s32 %v321, %v323
  %v325 = vrot.slane %v303, %v324
  %v327 = vunpack.c.l.s4 1966171168
  %v328 = vunpack.c.0.s8 %v327
  %v329 = vlaneseq
  %v330 = vshrl.u32 %v329, 7
  %v331 = vsub.s32 %v328, %v330
  %v332 = vrot.slane %v304, %v331
  %v333 = vcombine.high %v311, %v311
  %v334 = vcombine.high %v318, %v318
  %v335 = vcombine.high %v325, %v325
  %v336 = vcombine.high %v332, %v332
  %v337 = vcombine.high %v22, %v22
  %v339 = vunpack.c.l.s4 1966171168
  %v340 = vunpack.c.0.s8 %v339
  %v341 = vlaneseq
  %v342 = vshrl.u32 %v341, 7
  %v343 = vsub.s32 %v340, %v342
  %v344 = vrot.slane %v22, %v343
  %v346 = vunpack.c.l.s4 1966171168
  %v347 = vunpack.c.0.s8 %v346
  %v348 = vlaneseq
  %v349 = vshrl.u32 %v348, 7
  %v350 = vsub.s32 %v347, %v349
  %v351 = vrot.slane %v337, %v350
  %v352 = vcombine.high %v344, %v344
  %v353 = vcombine.high %v351, %v351
  %v355 = vunpack.c.l.s4 1966171168
  %v356 = vunpack.c.0.s8 %v355
  %v357 = vlaneseq
  %v358 = vshrl.u32 %v357, 7
  %v359 = vsub.s32 %v356, %v358
  %v360 = vrot.slane %v344, %v359
  %v362 = vunpack.c.l.s4 1966171168
  %v363 = vunpack.c.0.s8 %v362
  %v364 = vlaneseq
  %v365 = vshrl.u32 %v364, 7
  %v366 = vsub.s32 %v363, %v365
  %v367 = vrot.slane %v351, %v366
  %v369 = vunpack.c.l.s4 1966171168
  %v370 = vunpack.c.0.s8 %v369
  %v371 = vlaneseq
  %v372 = vshrl.u32 %v371, 7
  %v373 = vsub.s32 %v370, %v372
  %v374 = vrot.slane %v352, %v373
  %v376 = vunpack.c.l.s4 1966171168
  %v377 = vunpack.c.0.s8 %v376
  %v378 = vlaneseq
  %v379 = vshrl.u32 %v378, 7
  %v380 = vsub.s32 %v377, %v379
  %v381 = vrot.slane %v353, %v380
  %v382 = vcombine.high %v360, %v360
  %v383 = vcombine.high %v367, %v367
  %v384 = vcombine.high %v374, %v374
  %v385 = vcombine.high %v381, %v381
  %v658 = vunpack.c.l.b16 %v23
  %v659 = vunpack.c.l.b16 %v24
  %v660 = vunpack.c.l.b16 %v25
  %v661 = vunpack.c.l.b16 %v26
  %v662 = vunpack.c.l.b16 %v27
  %v663 = vunpack.c.l.b16 %v28
  %v664 = vunpack.c.l.b16 %v29
  %v665 = vunpack.c.l.b16 %v30
  %v666 = vunpack.c.l.b16 %v31
  %v667 = vunpack.c.l.b16 %v32
  %v668 = vunpack.c.l.b16 %v33
  %v669 = vunpack.c.l.b16 %v34
  %v670 = vunpack.c.l.b16 %v35
  %v671 = vunpack.c.l.b16 %v36
  %v672 = vunpack.c.l.b16 %v37
  %v673 = vunpack.c.l.b16 %v38
  %v674 = vunpack.c.l.b16 %v39
  %v675 = vunpack.c.l.b16 %v40
  %v676 = vunpack.c.l.b16 %v41
  %v677 = vunpack.c.l.b16 %v42
  %v678 = vunpack.c.l.b16 %v43
  %v679 = vunpack.c.l.b16 %v44
  %v680 = vunpack.c.l.b16 %v45
  %v681 = vunpack.c.l.b16 %v46
  %v682 = vunpack.c.l.b16 %v47
  %v683 = vunpack.c.l.b16 %v48
  %v684 = vunpack.c.l.b16 %v49
  %v685 = vunpack.c.l.b16 %v50
  %v686 = vunpack.c.l.b16 %v51
  %v687 = vunpack.c.l.b16 %v52
  %v688 = vunpack.c.l.b16 %v53
  %v689 = vunpack.c.l.b16 %v54
  %v690 = vunpack.c.l.b16 %v55
  %v691 = vunpack.c.l.b16 %v56
  %v692 = vunpack.c.l.b16 %v57
  %v693 = vunpack.c.l.b16 %v58
  %v694 = vunpack.c.l.b16 %v59
  %v695 = vunpack.c.l.b16 %v60
  %v696 = vunpack.c.l.b16 %v61
  %v697 = vunpack.c.l.b16 %v62
  %v698 = vunpack.c.l.b16 %v63
  %v699 = vunpack.c.l.b16 %v64
  %v700 = vunpack.c.l.b16 %v65
  %v701 = vunpack.c.l.b16 %v66
  %v702 = vunpack.c.l.b16 %v67
  %v703 = vunpack.c.l.b16 %v68
  %v704 = vunpack.c.l.b16 %v69
  %v705 = vunpack.c.l.b16 %v70
  %v706 = vunpack.c.l.b16 %v71
  %v707 = vunpack.c.l.b16 %v72
  %v708 = vunpack.c.l.b16 %v73
  %v709 = vunpack.c.l.b16 %v74
  %v710 = vunpack.c.l.b16 %v75
  %v711 = vunpack.c.l.b16 %v76
  %v712 = vunpack.c.l.b16 %v77
  %v713 = vunpack.c.l.b16 %v78
  %v714 = vunpack.c.l.b16 %v79
  %v715 = vunpack.c.l.b16 %v80
  %v716 = vunpack.c.l.b16 %v81
  %v717 = vunpack.c.l.b16 %v82
  %v718 = vunpack.c.l.b16 %v83
  %v719 = vunpack.c.l.b16 %v84
  %v720 = vunpack.c.l.b16 %v85
  %v721 = vunpack.c.l.b16 %v86
  %v722 = vunpack.c.l.b16 %v87
  %v723 = vunpack.c.l.b16 %v88
  %v724 = vunpack.c.l.b16 %v89
  %v725 = vunpack.c.l.b16 %v90
  %v726 = vunpack.c.l.b16 %v91
  %v727 = vunpack.c.l.b16 %v92
  %v728 = vunpack.c.l.b16 %v93
  %v729 = vunpack.c.l.b16 %v94
  %v730 = vunpack.c.l.b16 %v95
  %v731 = vunpack.c.l.b16 %v96
  %v732 = vunpack.c.l.b16 %v97
  %v733 = vunpack.c.l.b16 %v98
  %v734 = vunpack.c.l.b16 %v99
  %v735 = vunpack.c.l.b16 %v100
  %v736 = vunpack.c.l.b16 %v101
  %v737 = vunpack.c.l.b16 %v102
  %v738 = vunpack.c.l.b16 %v103
  %v739 = vunpack.c.l.b16 %v104
  %v740 = vunpack.c.l.b16 %v105
  %v741 = vunpack.c.l.b16 %v106
  %v742 = vunpack.c.l.b16 %v107
  %v743 = vunpack.c.l.b16 %v108
  %v744 = vunpack.c.l.b16 %v109
  %v745 = vunpack.c.l.b16 %v110
  %v746 = vunpack.c.l.b16 %v111
  %v747 = vunpack.c.l.b16 %v112
  %v748 = vunpack.c.l.b16 %v113
  %v749 = vunpack.c.l.b16 %v114
  %v750 = vunpack.c.l.b16 %v115
  %v751 = vunpack.c.l.b16 %v116
  %v752 = vunpack.c.l.b16 %v117
  %v753 = vunpack.c.l.b16 %v118
  %v754 = vunpack.c.l.b16 %v119
  %v755 = vunpack.c.l.b16 %v120
  %v756 = vunpack.c.l.b16 %v121
  %v757 = vunpack.c.l.b16 %v122
  %v758 = vunpack.c.l.b16 %v123
  %v759 = vunpack.c.l.b16 %v124
  %v760 = vunpack.c.l.b16 %v125
  %v761 = vunpack.c.l.b16 %v126
  %v762 = vunpack.c.l.b16 %v127
  %v763 = vunpack.c.l.b16 %v128
  %v764 = vunpack.c.l.b16 %v129
  %v765 = vunpack.c.l.b16 %v130
  %v766 = vunpack.c.l.b16 %v131
  %v767 = vunpack.c.l.b16 %v132
  %v768 = vunpack.c.l.b16 %v133
  %v769 = vunpack.c.l.b16 %v134
  %v770 = vunpack.c.l.b16 %v135
  %v771 = vunpack.c.l.b16 %v136
  %v772 = vunpack.c.l.b16 %v137
  %v773 = vunpack.c.l.b16 %v138
  %v774 = vunpack.c.l.b16 %v139
  %v775 = vunpack.c.l.b16 %v140
  %v776 = vunpack.c.l.b16 %v141
  %v777 = vunpack.c.l.b16 %v142
  %v778 = vunpack.c.l.b16 %v143
  %v779 = vunpack.c.l.b16 %v144
  %v780 = vunpack.c.l.b16 %v145
  %v781 = vunpack.c.l.b16 %v146
  %v782 = vunpack.c.l.b16 %v147
  %v783 = vunpack.c.l.b16 %v148
  %v784 = vunpack.c.l.b16 %v149
  %v785 = vunpack.c.l.b16 %v150
  %v786 = vunpack.c.l.b16 %v151
  %v787 = vunpack.c.l.b16 %v152
  %v788 = vunpack.c.l.b16 %v153
  %v789 = vunpack.c.l.b16 %v154
  %v790 = vunpack.c.l.b16 %v155
  %v791 = vunpack.c.l.b16 %v156
  %v792 = vunpack.c.l.b16 %v157
  %v793 = vunpack.c.l.b16 %v158
  %v794 = vunpack.c.l.b16 %v159
  %v795 = vunpack.c.l.b16 %v160
  %v796 = vunpack.c.l.b16 %v161
  %v797 = vunpack.c.l.b16 %v162
  %v798 = vunpack.c.l.b16 %v163
  %v799 = vunpack.c.l.b16 %v164
  %v800 = vunpack.c.l.b16 %v165
  %v801 = vunpack.c.l.b16 %v166
  %v802 = vunpack.c.l.b16 %v167
  %v803 = vunpack.c.l.b16 %v168
  %v804 = vunpack.c.l.b16 %v169
  %v805 = vunpack.c.l.b16 %v170
  %v806 = vunpack.c.l.b16 %v171
  %v807 = vunpack.c.l.b16 %v172
  %v808 = vunpack.c.l.b16 %v173
  %v809 = vunpack.c.l.b16 %v174
  %v810 = vunpack.c.l.b16 %v175
  %v811 = vunpack.c.l.b16 %v176
  %v812 = vunpack.c.l.b16 %v177
  %v813 = vunpack.c.l.b16 %v178
  %v814 = vunpack.c.l.b16 %v179
  %v815 = vunpack.c.l.b16 %v180
  %v816 = vunpack.c.l.b16 %v181
  %v817 = vunpack.c.l.b16 %v182
  %v818 = vunpack.c.l.b16 %v183
  %v819 = vunpack.c.l.b16 %v184
  %v820 = vunpack.c.l.b16 %v185
  %v821 = vunpack.c.l.b16 %v186
  %v822 = vunpack.c.l.b16 %v187
  %v823 = vunpack.c.l.b16 %v188
  %v824 = vunpack.c.l.b16 %v189
  %v825 = vunpack.c.l.b16 %v190
  %v826 = vunpack.c.l.b16 %v191
  %v827 = vunpack.c.l.b16 %v192
  %v828 = vunpack.c.l.b16 %v193
  %v829 = vunpack.c.l.b16 %v194
  %v830 = vunpack.c.l.b16 %v195
  %v831 = vunpack.c.l.b16 %v196
  %v832 = vunpack.c.l.b16 %v197
  %v833 = vunpack.c.l.b16 %v198
  %v834 = vunpack.c.l.b16 %v199
  %v835 = vunpack.c.l.b16 %v200
  %v836 = vunpack.c.l.b16 %v201
  %v837 = vunpack.c.l.b16 %v202
  %v838 = vunpack.c.l.b16 %v203
  %v839 = vunpack.c.l.b16 %v204
  %v840 = vunpack.c.l.b16 %v205
  %v841 = vunpack.c.l.b16 %v206
  %v842 = vunpack.c.l.b16 %v207
  %v843 = vunpack.c.l.b16 %v208
  %v844 = vunpack.c.l.b16 %v209
  %v845 = vunpack.c.l.b16 %v210
  %v846 = vunpack.c.l.b16 %v211
  %v847 = vunpack.c.l.b16 %v212
  %v848 = vunpack.c.l.b16 %v213
  %v849 = vunpack.c.l.b16 %v214
  %v850 = vunpack.c.l.b16 %v215
  %v851 = vunpack.c.l.b16 %v216
  %v852 = vunpack.c.l.b16 %v217
  %v853 = vunpack.c.l.b16 %v218
  %v854 = vunpack.c.l.b16 %v219
  %v855 = vunpack.c.l.b16 %v220
  %v856 = vunpack.c.l.b16 %v221
  %v857 = vunpack.c.l.b16 %v222
  %v858 = vunpack.c.l.b16 %v223
  %v859 = vunpack.c.l.b16 %v224
  %v860 = vunpack.c.l.b16 %v225
  %v861 = vunpack.c.l.b16 %v226
  %v862 = vunpack.c.l.b16 %v227
  %v863 = vunpack.c.l.b16 %v228
  %v864 = vunpack.c.l.b16 %v229
  %v865 = vunpack.c.l.b16 %v230
  %v866 = vunpack.c.l.b16 %v231
  %v867 = vunpack.c.l.b16 %v232
  %v868 = vunpack.c.l.b16 %v233
  %v869 = vunpack.c.l.b16 %v234
  %v870 = vunpack.c.l.b16 %v235
  %v871 = vunpack.c.l.b16 %v236
  %v872 = vunpack.c.l.b16 %v237
  %v873 = vunpack.c.l.b16 %v238
  %v874 = vunpack.c.l.b16 %v239
  %v875 = vunpack.c.l.b16 %v240
  %v876 = vunpack.c.l.b16 %v241
  %v877 = vunpack.c.l.b16 %v242
  %v878 = vunpack.c.l.b16 %v243
  %v879 = vunpack.c.l.b16 %v244
  %v880 = vunpack.c.l.b16 %v245
  %v881 = vunpack.c.l.b16 %v246
  %v882 = vunpack.c.l.b16 %v247
  %v883 = vunpack.c.l.b16 %v248
  %v884 = vunpack.c.l.b16 %v249
  %v885 = vunpack.c.l.b16 %v250
  %v886 = vunpack.c.l.b16 %v251
  %v887 = vunpack.c.l.b16 %v252
  %v888 = vunpack.c.l.b16 %v253
  %v889 = vunpack.c.l.b16 %v254
  %v890 = vunpack.c.l.b16 %v255
  %v891 = vunpack.c.l.b16 %v256
  %v892 = vunpack.c.l.b16 %v257
  %v893 = vunpack.c.l.b16 %v258
  %v894 = vunpack.c.l.b16 %v259
  %v895 = vunpack.c.l.b16 %v260
  %v896 = vunpack.c.l.b16 %v261
  %v897 = vunpack.c.l.b16 %v262
  %v898 = vunpack.c.l.b16 %v263
  %v899 = vunpack.c.l.b16 %v264
  %v900 = vunpack.c.l.b16 %v265
  %v901 = vunpack.c.l.b16 %v266
  %v902 = vunpack.c.l.b16 %v267
  %v903 = vunpack.c.l.b16 %v268
  %v904 = vunpack.c.l.b16 %v269
  %v905 = vunpack.c.l.b16 %v270
  %v906 = vunpack.c.l.b16 %v271
  %v907 = vunpack.c.l.b16 %v272
  %v908 = vunpack.c.l.b16 %v273
  %v909 = vunpack.c.l.b16 %v274
  %v910 = vunpack.c.l.b16 %v275
  %v911 = vunpack.c.l.b16 %v276
  %v912 = vunpack.c.l.b16 %v277
  %v913 = vunpack.c.l.b16 %v278
  %v914 = vpack.c.b16 %v659, %v658
  %v915 = vpack.c.b16 %v661, %v660
  %v916 = vpack.c.b16 %v663, %v662
  %v917 = vpack.c.b16 %v665, %v664
  %v918 = vpack.c.b16 %v667, %v666
  %v919 = vpack.c.b16 %v669, %v668
  %v920 = vpack.c.b16 %v671, %v670
  %v921 = vpack.c.b16 %v673, %v672
  %v922 = vpack.c.b16 %v675, %v674
  %v923 = vpack.c.b16 %v677, %v676
  %v924 = vpack.c.b16 %v679, %v678
  %v925 = vpack.c.b16 %v681, %v680
  %v926 = vpack.c.b16 %v683, %v682
  %v927 = vpack.c.b16 %v685, %v684
  %v928 = vpack.c.b16 %v687, %v686
  %v929 = vpack.c.b16 %v689, %v688
  %v930 = vpack.c.b16 %v691, %v690
  %v931 = vpack.c.b16 %v693, %v692
  %v932 = vpack.c.b16 %v695, %v694
  %v933 = vpack.c.b16 %v697, %v696
  %v934 = vpack.c.b16 %v699, %v698
  %v935 = vpack.c.b16 %v701, %v700
  %v936 = vpack.c.b16 %v703, %v702
  %v937 = vpack.c.b16 %v705, %v704
  %v938 = vpack.c.b16 %v707, %v706
  %v939 = vpack.c.b16 %v709, %v708
  %v940 = vpack.c.b16 %v711, %v710
  %v941 = vpack.c.b16 %v713, %v712
  %v942 = vpack.c.b16 %v715, %v714
  %v943 = vpack.c.b16 %v717, %v716
  %v944 = vpack.c.b16 %v719, %v718
  %v945 = vpack.c.b16 %v721, %v720
  %v946 = vpack.c.b16 %v723, %v722
  %v947 = vpack.c.b16 %v725, %v724
  %v948 = vpack.c.b16 %v727, %v726
  %v949 = vpack.c.b16 %v729, %v728
  %v950 = vpack.c.b16 %v731, %v730
  %v951 = vpack.c.b16 %v733, %v732
  %v952 = vpack.c.b16 %v735, %v734
  %v953 = vpack.c.b16 %v737, %v736
  %v954 = vpack.c.b16 %v739, %v738
  %v955 = vpack.c.b16 %v741, %v740
  %v956 = vpack.c.b16 %v743, %v742
  %v957 = vpack.c.b16 %v745, %v744
  %v958 = vpack.c.b16 %v747, %v746
  %v959 = vpack.c.b16 %v749, %v748
  %v960 = vpack.c.b16 %v751, %v750
  %v961 = vpack.c.b16 %v753, %v752
  %v962 = vpack.c.b16 %v755, %v754
  %v963 = vpack.c.b16 %v757, %v756
  %v964 = vpack.c.b16 %v759, %v758
  %v965 = vpack.c.b16 %v761, %v760
  %v966 = vpack.c.b16 %v763, %v762
  %v967 = vpack.c.b16 %v765, %v764
  %v968 = vpack.c.b16 %v767, %v766
  %v969 = vpack.c.b16 %v769, %v768
  %v970 = vpack.c.b16 %v771, %v770
  %v971 = vpack.c.b16 %v773, %v772
  %v972 = vpack.c.b16 %v775, %v774
  %v973 = vpack.c.b16 %v777, %v776
  %v974 = vpack.c.b16 %v779, %v778
  %v975 = vpack.c.b16 %v781, %v780
  %v976 = vpack.c.b16 %v783, %v782
  %v977 = vpack.c.b16 %v785, %v784
  %v978 = vpack.c.b16 %v787, %v786
  %v979 = vpack.c.b16 %v789, %v788
  %v980 = vpack.c.b16 %v791, %v790
  %v981 = vpack.c.b16 %v793, %v792
  %v982 = vpack.c.b16 %v795, %v794
  %v983 = vpack.c.b16 %v797, %v796
  %v984 = vpack.c.b16 %v799, %v798
  %v985 = vpack.c.b16 %v801, %v800
  %v986 = vpack.c.b16 %v803, %v802
  %v987 = vpack.c.b16 %v805, %v804
  %v988 = vpack.c.b16 %v807, %v806
  %v989 = vpack.c.b16 %v809, %v808
  %v990 = vpack.c.b16 %v811, %v810
  %v991 = vpack.c.b16 %v813, %v812
  %v992 = vpack.c.b16 %v815, %v814
  %v993 = vpack.c.b16 %v817, %v816
  %v994 = vpack.c.b16 %v819, %v818
  %v995 = vpack.c.b16 %v821, %v820
  %v996 = vpack.c.b16 %v823, %v822
  %v997 = vpack.c.b16 %v825, %v824
  %v998 = vpack.c.b16 %v827, %v826
  %v999 = vpack.c.b16 %v829, %v828
  %v1000 = vpack.c.b16 %v831, %v830
  %v1001 = vpack.c.b16 %v833, %v832
  %v1002 = vpack.c.b16 %v835, %v834
  %v1003 = vpack.c.b16 %v837, %v836
  %v1004 = vpack.c.b16 %v839, %v838
  %v1005 = vpack.c.b16 %v841, %v840
  %v1006 = vpack.c.b16 %v843, %v842
  %v1007 = vpack.c.b16 %v845, %v844
  %v1008 = vpack.c.b16 %v847, %v846
  %v1009 = vpack.c.b16 %v849, %v848
  %v1010 = vpack.c.b16 %v851, %v850
  %v1011 = vpack.c.b16 %v853, %v852
  %v1012 = vpack.c.b16 %v855, %v854
  %v1013 = vpack.c.b16 %v857, %v856
  %v1014 = vpack.c.b16 %v859, %v858
  %v1015 = vpack.c.b16 %v861, %v860
  %v1016 = vpack.c.b16 %v863, %v862
  %v1017 = vpack.c.b16 %v865, %v864
  %v1018 = vpack.c.b16 %v867, %v866
  %v1019 = vpack.c.b16 %v869, %v868
  %v1020 = vpack.c.b16 %v871, %v870
  %v1021 = vpack.c.b16 %v873, %v872
  %v1022 = vpack.c.b16 %v875, %v874
  %v1023 = vpack.c.b16 %v877, %v876
  %v1024 = vpack.c.b16 %v879, %v878
  %v1025 = vpack.c.b16 %v881, %v880
  %v1026 = vpack.c.b16 %v883, %v882
  %v1027 = vpack.c.b16 %v885, %v884
  %v1028 = vpack.c.b16 %v887, %v886
  %v1029 = vpack.c.b16 %v889, %v888
  %v1030 = vpack.c.b16 %v891, %v890
  %v1031 = vpack.c.b16 %v893, %v892
  %v1032 = vpack.c.b16 %v895, %v894
  %v1033 = vpack.c.b16 %v897, %v896
  %v1034 = vpack.c.b16 %v899, %v898
  %v1035 = vpack.c.b16 %v901, %v900
  %v1036 = vpack.c.b16 %v903, %v902
  %v1037 = vpack.c.b16 %v905, %v904
  %v1038 = vpack.c.b16 %v907, %v906
  %v1039 = vpack.c.b16 %v909, %v908
  %v1040 = vpack.c.b16 %v911, %v910
  %v1041 = vpack.c.b16 %v913, %v912
  %1170 = vmatprep.subr.bf16.mxu0 0
  %1171 = vmatpush1.bf16.msra.mxu0 %v914
  %1172 = vmatprep.subr.bf16.mxu0 0
  %1173 = vmatpush1.bf16.msra.mxu0 %v915
  %1174 = vmatprep.subr.bf16.mxu0 0
  %1175 = vmatpush1.bf16.msra.mxu0 %v916
  %1176 = vmatprep.subr.bf16.mxu0 0
  %1177 = vmatpush1.bf16.msra.mxu0 %v917
  %1178 = vmatprep.subr.bf16.mxu0 0
  %1179 = vmatpush1.bf16.msra.mxu0 %v918
  %1180 = vmatprep.subr.bf16.mxu0 0
  %1181 = vmatpush1.bf16.msra.mxu0 %v919
  %1182 = vmatprep.subr.bf16.mxu0 0
  %1183 = vmatpush1.bf16.msra.mxu0 %v920
  %1184 = vmatprep.subr.bf16.mxu0 0
  %1185 = vmatpush1.bf16.msra.mxu0 %v921
  %1186 = vmatprep.subr.bf16.mxu0 0
  %1187 = vmatpush1.bf16.msra.mxu0 %v922
  %1188 = vmatprep.subr.bf16.mxu0 0
  %1189 = vmatpush1.bf16.msra.mxu0 %v923
  %1190 = vmatprep.subr.bf16.mxu0 0
  %1191 = vmatpush1.bf16.msra.mxu0 %v924
  %1192 = vmatprep.subr.bf16.mxu0 0
  %1193 = vmatpush1.bf16.msra.mxu0 %v925
  %1194 = vmatprep.subr.bf16.mxu0 0
  %1195 = vmatpush1.bf16.msra.mxu0 %v926
  %1196 = vmatprep.subr.bf16.mxu0 0
  %1197 = vmatpush1.bf16.msra.mxu0 %v927
  %1198 = vmatprep.subr.bf16.mxu0 0
  %1199 = vmatpush1.bf16.msra.mxu0 %v928
  %1200 = vmatprep.subr.bf16.mxu0 0
  %1201 = vmatpush1.bf16.msra.mxu0 %v929
  %1202 = vmatprep.mubr.bf16.mxu0 %v325
  %1203 = vmatmul.mubr.bf16.gmra.mrb[0].mxu0 %v311
  %v1204 = vpop.f32.mrb[0].mxu0
  %v1205 = vadd.f32 %v284, %v1204
  %v1206 = vpop.f32.mrb[0].mxu0
  %v1207 = vpop.f32.mrb[0].mxu0
  %v1208 = vpop.f32.mrb[0].mxu0
  %1209 = vdwg.mxu0
  %1210 = vmatprep.subr.bf16.mxu0 0
  %1211 = vmatpush1.bf16.msra.mxu0 %v930
  %1212 = vmatprep.subr.bf16.mxu0 0
  %1213 = vmatpush1.bf16.msra.mxu0 %v931
  %1214 = vmatprep.subr.bf16.mxu0 0
  %1215 = vmatpush1.bf16.msra.mxu0 %v932
  %1216 = vmatprep.subr.bf16.mxu0 0
  %1217 = vmatpush1.bf16.msra.mxu0 %v933
  %1218 = vmatprep.subr.bf16.mxu0 0
  %1219 = vmatpush1.bf16.msra.mxu0 %v934
  %1220 = vmatprep.subr.bf16.mxu0 0
  %1221 = vmatpush1.bf16.msra.mxu0 %v935
  %1222 = vmatprep.subr.bf16.mxu0 0
  %1223 = vmatpush1.bf16.msra.mxu0 %v936
  %1224 = vmatprep.subr.bf16.mxu0 0
  %1225 = vmatpush1.bf16.msra.mxu0 %v937
  %1226 = vmatprep.subr.bf16.mxu0 0
  %1227 = vmatpush1.bf16.msra.mxu0 %v938
  %1228 = vmatprep.subr.bf16.mxu0 0
  %1229 = vmatpush1.bf16.msra.mxu0 %v939
  %1230 = vmatprep.subr.bf16.mxu0 0
  %1231 = vmatpush1.bf16.msra.mxu0 %v940
  %1232 = vmatprep.subr.bf16.mxu0 0
  %1233 = vmatpush1.bf16.msra.mxu0 %v941
  %1234 = vmatprep.subr.bf16.mxu0 0
  %1235 = vmatpush1.bf16.msra.mxu0 %v942
  %1236 = vmatprep.subr.bf16.mxu0 0
  %1237 = vmatpush1.bf16.msra.mxu0 %v943
  %1238 = vmatprep.subr.bf16.mxu0 0
  %1239 = vmatpush1.bf16.msra.mxu0 %v944
  %1240 = vmatprep.subr.bf16.mxu0 0
  %1241 = vmatpush1.bf16.msra.mxu0 %v945
  %1242 = vmatprep.mubr.bf16.mxu0 %v335
  %1243 = vmatmul.mubr.bf16.gmra.mrb[0].mxu0 %v333
  %v1244 = vpop.f32.mrb[0].mxu0
  %v1245 = vadd.f32 %v1205, %v1244
  %v1246 = vpop.f32.mrb[0].mxu0
  %v1247 = vpop.f32.mrb[0].mxu0
  %v1248 = vpop.f32.mrb[0].mxu0
  %1249 = vdwg.mxu0
  %1250 = vmatprep.subr.bf16.mxu0 0
  %1251 = vmatpush1.bf16.msra.mxu0 %v946
  %1252 = vmatprep.subr.bf16.mxu0 0
  %1253 = vmatpush1.bf16.msra.mxu0 %v947
  %1254 = vmatprep.subr.bf16.mxu0 0
  %1255 = vmatpush1.bf16.msra.mxu0 %v948
  %1256 = vmatprep.subr.bf16.mxu0 0
  %1257 = vmatpush1.bf16.msra.mxu0 %v949
  %1258 = vmatprep.subr.bf16.mxu0 0
  %1259 = vmatpush1.bf16.msra.mxu0 %v950
  %1260 = vmatprep.subr.bf16.mxu0 0
  %1261 = vmatpush1.bf16.msra.mxu0 %v951
  %1262 = vmatprep.subr.bf16.mxu0 0
  %1263 = vmatpush1.bf16.msra.mxu0 %v952
  %1264 = vmatprep.subr.bf16.mxu0 0
  %1265 = vmatpush1.bf16.msra.mxu0 %v953
  %1266 = vmatprep.subr.bf16.mxu0 0
  %1267 = vmatpush1.bf16.msra.mxu0 %v954
  %1268 = vmatprep.subr.bf16.mxu0 0
  %1269 = vmatpush1.bf16.msra.mxu0 %v955
  %1270 = vmatprep.subr.bf16.mxu0 0
  %1271 = vmatpush1.bf16.msra.mxu0 %v956
  %1272 = vmatprep.subr.bf16.mxu0 0
  %1273 = vmatpush1.bf16.msra.mxu0 %v957
  %1274 = vmatprep.subr.bf16.mxu0 0
  %1275 = vmatpush1.bf16.msra.mxu0 %v958
  %1276 = vmatprep.subr.bf16.mxu0 0
  %1277 = vmatpush1.bf16.msra.mxu0 %v959
  %1278 = vmatprep.subr.bf16.mxu0 0
  %1279 = vmatpush1.bf16.msra.mxu0 %v960
  %1280 = vmatprep.subr.bf16.mxu0 0
  %1281 = vmatpush1.bf16.msra.mxu0 %v961
  %1282 = vmatprep.mubr.bf16.mxu0 %v332
  %1283 = vmatmul.mubr.bf16.gmra.mrb[0].mxu0 %v318
  %v1284 = vpop.f32.mrb[0].mxu0
  %v1285 = vadd.f32 %v1245, %v1284
  %v1286 = vpop.f32.mrb[0].mxu0
  %v1287 = vpop.f32.mrb[0].mxu0
  %v1288 = vpop.f32.mrb[0].mxu0
  %1289 = vdwg.mxu0
  %1290 = vmatprep.subr.bf16.mxu0 0
  %1291 = vmatpush1.bf16.msra.mxu0 %v962
  %1292 = vmatprep.subr.bf16.mxu0 0
  %1293 = vmatpush1.bf16.msra.mxu0 %v963
  %1294 = vmatprep.subr.bf16.mxu0 0
  %1295 = vmatpush1.bf16.msra.mxu0 %v964
  %1296 = vmatprep.subr.bf16.mxu0 0
  %1297 = vmatpush1.bf16.msra.mxu0 %v965
  %1298 = vmatprep.subr.bf16.mxu0 0
  %1299 = vmatpush1.bf16.msra.mxu0 %v966
  %1300 = vmatprep.subr.bf16.mxu0 0
  %1301 = vmatpush1.bf16.msra.mxu0 %v967
  %1302 = vmatprep.subr.bf16.mxu0 0
  %1303 = vmatpush1.bf16.msra.mxu0 %v968
  %1304 = vmatprep.subr.bf16.mxu0 0
  %1305 = vmatpush1.bf16.msra.mxu0 %v969
  %1306 = vmatprep.subr.bf16.mxu0 0
  %1307 = vmatpush1.bf16.msra.mxu0 %v970
  %1308 = vmatprep.subr.bf16.mxu0 0
  %1309 = vmatpush1.bf16.msra.mxu0 %v971
  %1310 = vmatprep.subr.bf16.mxu0 0
  %1311 = vmatpush1.bf16.msra.mxu0 %v972
  %1312 = vmatprep.subr.bf16.mxu0 0
  %1313 = vmatpush1.bf16.msra.mxu0 %v973
  %1314 = vmatprep.subr.bf16.mxu0 0
  %1315 = vmatpush1.bf16.msra.mxu0 %v974
  %1316 = vmatprep.subr.bf16.mxu0 0
  %1317 = vmatpush1.bf16.msra.mxu0 %v975
  %1318 = vmatprep.subr.bf16.mxu0 0
  %1319 = vmatpush1.bf16.msra.mxu0 %v976
  %1320 = vmatprep.subr.bf16.mxu0 0
  %1321 = vmatpush1.bf16.msra.mxu0 %v977
  %1322 = vmatprep.mubr.bf16.mxu0 %v336
  %1323 = vmatmul.mubr.bf16.gmra.mrb[0].mxu0 %v334
  %v1324 = vpop.f32.mrb[0].mxu0
  %v1325 = vadd.f32 %v1285, %v1324
  %v1326 = vpop.f32.mrb[0].mxu0
  %v1327 = vpop.f32.mrb[0].mxu0
  %v1328 = vpop.f32.mrb[0].mxu0
  %1329 = vdwg.mxu0
  %1330 = vmatprep.subr.bf16.mxu0 0
  %1331 = vmatpush1.bf16.msra.mxu0 %v978
  %1332 = vmatprep.subr.bf16.mxu0 0
  %1333 = vmatpush1.bf16.msra.mxu0 %v979
  %1334 = vmatprep.subr.bf16.mxu0 0
  %1335 = vmatpush1.bf16.msra.mxu0 %v980
  %1336 = vmatprep.subr.bf16.mxu0 0
  %1337 = vmatpush1.bf16.msra.mxu0 %v981
  %1338 = vmatprep.subr.bf16.mxu0 0
  %1339 = vmatpush1.bf16.msra.mxu0 %v982
  %1340 = vmatprep.subr.bf16.mxu0 0
  %1341 = vmatpush1.bf16.msra.mxu0 %v983
  %1342 = vmatprep.subr.bf16.mxu0 0
  %1343 = vmatpush1.bf16.msra.mxu0 %v984
  %1344 = vmatprep.subr.bf16.mxu0 0
  %1345 = vmatpush1.bf16.msra.mxu0 %v985
  %1346 = vmatprep.subr.bf16.mxu0 0
  %1347 = vmatpush1.bf16.msra.mxu0 %v986
  %1348 = vmatprep.subr.bf16.mxu0 0
  %1349 = vmatpush1.bf16.msra.mxu0 %v987
  %1350 = vmatprep.subr.bf16.mxu0 0
  %1351 = vmatpush1.bf16.msra.mxu0 %v988
  %1352 = vmatprep.subr.bf16.mxu0 0
  %1353 = vmatpush1.bf16.msra.mxu0 %v989
  %1354 = vmatprep.subr.bf16.mxu0 0
  %1355 = vmatpush1.bf16.msra.mxu0 %v990
  %1356 = vmatprep.subr.bf16.mxu0 0
  %1357 = vmatpush1.bf16.msra.mxu0 %v991
  %1358 = vmatprep.subr.bf16.mxu0 0
  %1359 = vmatpush1.bf16.msra.mxu0 %v992
  %1360 = vmatprep.subr.bf16.mxu0 0
  %1361 = vmatpush1.bf16.msra.mxu0 %v993
  %1362 = vmatprep.mubr.bf16.mxu0 %v374
  %1363 = vmatmul.mubr.bf16.gmra.mrb[0].mxu0 %v360
  %v1364 = vpop.f32.mrb[0].mxu0
  %v1365 = vadd.f32 %v1325, %v1364
  %v1366 = vpop.f32.mrb[0].mxu0
  %v1367 = vpop.f32.mrb[0].mxu0
  %v1368 = vpop.f32.mrb[0].mxu0
  %1369 = vdwg.mxu0
  %1370 = vmatprep.subr.bf16.mxu0 0
  %1371 = vmatpush1.bf16.msra.mxu0 %v994
  %1372 = vmatprep.subr.bf16.mxu0 0
  %1373 = vmatpush1.bf16.msra.mxu0 %v995
  %1374 = vmatprep.subr.bf16.mxu0 0
  %1375 = vmatpush1.bf16.msra.mxu0 %v996
  %1376 = vmatprep.subr.bf16.mxu0 0
  %1377 = vmatpush1.bf16.msra.mxu0 %v997
  %1378 = vmatprep.subr.bf16.mxu0 0
  %1379 = vmatpush1.bf16.msra.mxu0 %v998
  %1380 = vmatprep.subr.bf16.mxu0 0
  %1381 = vmatpush1.bf16.msra.mxu0 %v999
  %1382 = vmatprep.subr.bf16.mxu0 0
  %1383 = vmatpush1.bf16.msra.mxu0 %v1000
  %1384 = vmatprep.subr.bf16.mxu0 0
  %1385 = vmatpush1.bf16.msra.mxu0 %v1001
  %1386 = vmatprep.subr.bf16.mxu0 0
  %1387 = vmatpush1.bf16.msra.mxu0 %v1002
  %1388 = vmatprep.subr.bf16.mxu0 0
  %1389 = vmatpush1.bf16.msra.mxu0 %v1003
  %1390 = vmatprep.subr.bf16.mxu0 0
  %1391 = vmatpush1.bf16.msra.mxu0 %v1004
  %1392 = vmatprep.subr.bf16.mxu0 0
  %1393 = vmatpush1.bf16.msra.mxu0 %v1005
  %1394 = vmatprep.subr.bf16.mxu0 0
  %1395 = vmatpush1.bf16.msra.mxu0 %v1006
  %1396 = vmatprep.subr.bf16.mxu0 0
  %1397 = vmatpush1.bf16.msra.mxu0 %v1007
  %1398 = vmatprep.subr.bf16.mxu0 0
  %1399 = vmatpush1.bf16.msra.mxu0 %v1008
  %1400 = vmatprep.subr.bf16.mxu0 0
  %1401 = vmatpush1.bf16.msra.mxu0 %v1009
  %1402 = vmatprep.mubr.bf16.mxu0 %v384
  %1403 = vmatmul.mubr.bf16.gmra.mrb[0].mxu0 %v382
  %v1404 = vpop.f32.mrb[0].mxu0
  %v1405 = vadd.f32 %v1365, %v1404
  %v1406 = vpop.f32.mrb[0].mxu0
  %v1407 = vpop.f32.mrb[0].mxu0
  %v1408 = vpop.f32.mrb[0].mxu0
  %1409 = vdwg.mxu0
  %1410 = vmatprep.subr.bf16.mxu0 0
  %1411 = vmatpush1.bf16.msra.mxu0 %v1010
  %1412 = vmatprep.subr.bf16.mxu0 0
  %1413 = vmatpush1.bf16.msra.mxu0 %v1011
  %1414 = vmatprep.subr.bf16.mxu0 0
  %1415 = vmatpush1.bf16.msra.mxu0 %v1012
  %1416 = vmatprep.subr.bf16.mxu0 0
  %1417 = vmatpush1.bf16.msra.mxu0 %v1013
  %1418 = vmatprep.subr.bf16.mxu0 0
  %1419 = vmatpush1.bf16.msra.mxu0 %v1014
  %1420 = vmatprep.subr.bf16.mxu0 0
  %1421 = vmatpush1.bf16.msra.mxu0 %v1015
  %1422 = vmatprep.subr.bf16.mxu0 0
  %1423 = vmatpush1.bf16.msra.mxu0 %v1016
  %1424 = vmatprep.subr.bf16.mxu0 0
  %1425 = vmatpush1.bf16.msra.mxu0 %v1017
  %1426 = vmatprep.subr.bf16.mxu0 0
  %1427 = vmatpush1.bf16.msra.mxu0 %v1018
  %1428 = vmatprep.subr.bf16.mxu0 0
  %1429 = vmatpush1.bf16.msra.mxu0 %v1019
  %1430 = vmatprep.subr.bf16.mxu0 0
  %1431 = vmatpush1.bf16.msra.mxu0 %v1020
  %1432 = vmatprep.subr.bf16.mxu0 0
  %1433 = vmatpush1.bf16.msra.mxu0 %v1021
  %1434 = vmatprep.subr.bf16.mxu0 0
  %1435 = vmatpush1.bf16.msra.mxu0 %v1022
  %1436 = vmatprep.subr.bf16.mxu0 0
  %1437 = vmatpush1.bf16.msra.mxu0 %v1023
  %1438 = vmatprep.subr.bf16.mxu0 0
  %1439 = vmatpush1.bf16.msra.mxu0 %v1024
  %1440 = vmatprep.subr.bf16.mxu0 0
  %1441 = vmatpush1.bf16.msra.mxu0 %v1025
  %1442 = vmatprep.mubr.bf16.mxu0 %v381
  %1443 = vmatmul.mubr.bf16.gmra.mrb[0].mxu0 %v367
  %v1444 = vpop.f32.mrb[0].mxu0
  %v1445 = vadd.f32 %v1405, %v1444
  %v1446 = vpop.f32.mrb[0].mxu0
  %v1447 = vpop.f32.mrb[0].mxu0
  %v1448 = vpop.f32.mrb[0].mxu0
  %1449 = vdwg.mxu0
  %1450 = vmatprep.subr.bf16.mxu0 0
  %1451 = vmatpush1.bf16.msra.mxu0 %v1026
  %1452 = vmatprep.subr.bf16.mxu0 0
  %1453 = vmatpush1.bf16.msra.mxu0 %v1027
  %1454 = vmatprep.subr.bf16.mxu0 0
  %1455 = vmatpush1.bf16.msra.mxu0 %v1028
  %1456 = vmatprep.subr.bf16.mxu0 0
  %1457 = vmatpush1.bf16.msra.mxu0 %v1029
  %1458 = vmatprep.subr.bf16.mxu0 0
  %1459 = vmatpush1.bf16.msra.mxu0 %v1030
  %1460 = vmatprep.subr.bf16.mxu0 0
  %1461 = vmatpush1.bf16.msra.mxu0 %v1031
  %1462 = vmatprep.subr.bf16.mxu0 0
  %1463 = vmatpush1.bf16.msra.mxu0 %v1032
  %1464 = vmatprep.subr.bf16.mxu0 0
  %1465 = vmatpush1.bf16.msra.mxu0 %v1033
  %1466 = vmatprep.subr.bf16.mxu0 0
  %1467 = vmatpush1.bf16.msra.mxu0 %v1034
  %1468 = vmatprep.subr.bf16.mxu0 0
  %1469 = vmatpush1.bf16.msra.mxu0 %v1035
  %1470 = vmatprep.subr.bf16.mxu0 0
  %1471 = vmatpush1.bf16.msra.mxu0 %v1036
  %1472 = vmatprep.subr.bf16.mxu0 0
  %1473 = vmatpush1.bf16.msra.mxu0 %v1037
  %1474 = vmatprep.subr.bf16.mxu0 0
  %1475 = vmatpush1.bf16.msra.mxu0 %v1038
  %1476 = vmatprep.subr.bf16.mxu0 0
  %1477 = vmatpush1.bf16.msra.mxu0 %v1039
  %1478 = vmatprep.subr.bf16.mxu0 0
  %1479 = vmatpush1.bf16.msra.mxu0 %v1040
  %1480 = vmatprep.subr.bf16.mxu0 0
  %1481 = vmatpush1.bf16.msra.mxu0 %v1041
  %1482 = vmatprep.mubr.bf16.mxu0 %v385
  %1483 = vmatmul.mubr.bf16.gmra.mrb[0].mxu0 %v383
  %v1484 = vpop.f32.mrb[0].mxu0
  %v1485 = vadd.f32 %v1445, %v1484
  %v1486 = vpop.f32.mrb[0].mxu0
  %v1487 = vpop.f32.mrb[0].mxu0
  %v1488 = vpop.f32.mrb[0].mxu0
  %1489 = vdwg.mxu0
  %vm1490 = vcmp.ge.f32.partialorder %v1485, 0.0
  %v1491 = vmul.f32 %v1485, 0.2
  %v1492 = vsel %vm1490, %v1485, %v1491
  %v1493 = vpack.c.bf16 %v1492, %v1492
  %v1494 = vld [vmem:[%s3] sm:$0xff]
  %v1495 = vld [vmem:[%s3 + $0x8] sm:$0xff]
  %v1496 = vld [vmem:[%s3 + $0x10] sm:$0xff]
  %v1497 = vld [vmem:[%s3 + $0x18] sm:$0xff]
  %v1498 = vld [vmem:[%s3 + $0x20] sm:$0xff]
  %v1499 = vld [vmem:[%s3 + $0x28] sm:$0xff]
  %v1500 = vld [vmem:[%s3 + $0x30] sm:$0xff]
  %v1501 = vld [vmem:[%s3 + $0x38] sm:$0xff]
  %v1502 = vld [vmem:[%s4] sm:$0x3]
  %v1504 = vlaneseq
  %v1505 = vshrl.u32 %v1504, 7
  %v1506 = vsub.s32 0, %v1505
  %v1507 = vrot.slane %v1502, %v1506
  %v1508 = vlaneseq
  %v1509 = vshrl.u32 %v1508, 7
  %v1510 = vsub.s32 1, %v1509
  %v1511 = vrot.slane %v1502, %v1510
  %v1522 = vunpack.c.l.b16 %v1494
  %v1523 = vunpack.c.h.b16 %v1494
  %v1524 = vunpack.c.l.b16 %v1495
  %v1525 = vunpack.c.h.b16 %v1495
  %v1526 = vunpack.c.l.b16 %v1496
  %v1527 = vunpack.c.h.b16 %v1496
  %v1528 = vunpack.c.l.b16 %v1497
  %v1529 = vunpack.c.h.b16 %v1497
  %v1530 = vunpack.c.l.b16 %v1498
  %v1531 = vunpack.c.h.b16 %v1498
  %v1532 = vunpack.c.l.b16 %v1499
  %v1533 = vunpack.c.h.b16 %v1499
  %v1534 = vunpack.c.l.b16 %v1500
  %v1535 = vunpack.c.h.b16 %v1500
  %v1536 = vunpack.c.l.b16 %v1501
  %v1537 = vunpack.c.h.b16 %v1501
  %v1538 = vpack.c.b16 %v1524, %v1522
  %v1539 = vpack.c.b16 %v1525, %v1523
  %v1540 = vpack.c.b16 %v1528, %v1526
  %v1541 = vpack.c.b16 %v1529, %v1527
  %v1542 = vpack.c.b16 %v1532, %v1530
  %v1543 = vpack.c.b16 %v1533, %v1531
  %v1544 = vpack.c.b16 %v1536, %v1534
  %v1545 = vpack.c.b16 %v1537, %v1535
  %vm1554 = vcmask 523264
  %v1556 = vsel %vm1554, %v1493, 0
  %1558 = vmatprep.subr.bf16.mxu0 %v1539
  %1559 = vmatpush1.bf16.msra.mxu0 %v1538
  %1560 = vmatprep.subr.bf16.mxu0 %v1541
  %1561 = vmatpush1.bf16.msra.mxu0 %v1540
  %1562 = vmatprep.subr.bf16.mxu0 %v1543
  %1563 = vmatpush1.bf16.msra.mxu0 %v1542
  %1564 = vmatprep.subr.bf16.mxu0 %v1545
  %1565 = vmatpush1.bf16.msra.mxu0 %v1544
  %1566 = vmatprep.subr.bf16.mxu0 0
  %1567 = vmatpush1.bf16.msra.mxu0 0
  %1568 = vmatprep.subr.bf16.mxu0 0
  %1569 = vmatpush1.bf16.msra.mxu0 0
  %1570 = vmatprep.subr.bf16.mxu0 0
  %1571 = vmatpush1.bf16.msra.mxu0 0
  %1572 = vmatprep.subr.bf16.mxu0 0
  %1573 = vmatpush1.bf16.msra.mxu0 0
  %1574 = vmatprep.subr.bf16.mxu0 0
  %1575 = vmatpush1.bf16.msra.mxu0 0
  %1576 = vmatprep.subr.bf16.mxu0 0
  %1577 = vmatpush1.bf16.msra.mxu0 0
  %1578 = vmatprep.subr.bf16.mxu0 0
  %1579 = vmatpush1.bf16.msra.mxu0 0
  %1580 = vmatprep.subr.bf16.mxu0 0
  %1581 = vmatpush1.bf16.msra.mxu0 0
  %1582 = vmatprep.subr.bf16.mxu0 0
  %1583 = vmatpush1.bf16.msra.mxu0 0
  %1584 = vmatprep.subr.bf16.mxu0 0
  %1585 = vmatpush1.bf16.msra.mxu0 0
  %1586 = vmatprep.subr.bf16.mxu0 0
  %1587 = vmatpush1.bf16.msra.mxu0 0
  %1588 = vmatprep.subr.bf16.mxu0 0
  %1589 = vmatpush1.bf16.msra.mxu0 0
  %1590 = vmatprep.mubr.bf16.mxu0 0
  %1591 = vmatmul.mubr.bf16.gmra.mrb[0].mxu0 %v1556
  %v1592 = vpop.f32.mrb[0].mxu0
  %v1593 = vadd.f32 %v1507, %v1592
  %v1594 = vpop.f32.mrb[0].mxu0
  %v1595 = vadd.f32 %v1511, %v1594
  %v1596 = vpop.f32.mrb[0].mxu0
  %v1597 = vpop.f32.mrb[0].mxu0
  %1598 = vdwg.mxu0
  %v1599 = vpack.c.bf16 %v1593, %v1593
  %v1600 = vpack.c.bf16 %v1595, %v1595
  %v1603 = vcombine.low %v1599, %v1600
  %v1605 = vunpack.c.l.s4 1966171168
  %v1606 = vunpack.c.0.s8 %v1605
  %v1607 = vlaneseq
  %v1608 = vshrl.u32 %v1607, 7
  %v1609 = vsub.s32 %v1606, %v1608
  %v1610 = vrot.slane %v1603, %v1609
  %v1612 = vunpack.c.l.s4 1966171168
  %v1613 = vunpack.c.0.s8 %v1612
  %v1614 = vlaneseq
  %v1615 = vshrl.u32 %v1614, 7
  %v1616 = vsub.s32 %v1613, %v1615
  %v1617 = vrot.slane %v1610, %v1616
  %1619 = vst [vmem:[%s5] sm:$0x3] %v1617
  // Predicated region
  $region22: #{autoencoder_forward.8} parent=0 // pred_check
    _
  $region23: #{autoencoder_forward.8} parent=0 // pred_check_branch
    %1621 = sbr.rel (0) target = $region25
  $region24: #{autoencoder_forward.8} parent=0 // pred_region
    _
  $region25: #{autoencoder_forward.8} parent=0 // pred_fallthru
    _
  // Predicated region
  $region26: #{autoencoder_forward.8} parent=0 // pred_check
    _
  $region27: #{autoencoder_forward.8} parent=0 // pred_check_branch
    %1623 = sbr.rel (0) target = $region29
  $region28: #{autoencoder_forward.8} parent=0 // pred_region
    _
  $region29: #{autoencoder_forward.8} parent=0 // pred_fallthru
    _

// kernel: autoencoder_forward.9
$region0: #{autoencoder_forward.9}
  #allocation0 [shape = 'u32[]', space=smem, size = 0x4, offset = 0x4, fixed_abs, tag = 'smem constant byte address 0x4 - core index']
  #allocation1 [shape = 'u32[144,128]{1,0:T(1,128)}', space=vmem, size = 0x12000, scoped, tag = 'internal scratch']
  %s0 = inlined_call_operand.vmem [shape: bf16[2,256], index: 0, kind: input, shape index: {}]
  %s1 = inlined_call_operand.vmem [shape: bf16[256,64], index: 1, kind: input, shape index: {}]
  %s2 = inlined_call_operand.vmem [shape: f32[1,64], index: 2, kind: input, shape index: {}]
  %s3 = inlined_call_operand.vmem [shape: bf16[64,2048], index: 3, kind: input, shape index: {}]
  %s4 = inlined_call_operand.vmem [shape: f32[1,2048], index: 4, kind: input, shape index: {}]
  %s5 = inlined_call_operand.vmem [shape: bf16[2,2048], index: 5, kind: output, shape index: {}]
  %s6 = sld [smem:[#allocation0]]
  $region30: #{autoencoder_forward.9} parent=0
    _
  %s8 = ssub.s32 1, %s6
  %s9 = scalar_select 0, %s8, %s6
  // Predicated region
  $region2: #{autoencoder_forward.9} parent=0 // pred_check
    _
  $region3: #{autoencoder_forward.9} parent=0 // pred_check_branch
    %11 = sbr.rel (0) target = $region5
  $region4: #{autoencoder_forward.9} parent=0 // pred_region
    _
  $region5: #{autoencoder_forward.9} parent=0 // pred_fallthru
    _
  // Predicated region
  $region6: #{autoencoder_forward.9} parent=0 // pred_check
    _
  $region7: #{autoencoder_forward.9} parent=0 // pred_check_branch
    %13 = sbr.rel (0) target = $region9
  $region8: #{autoencoder_forward.9} parent=0 // pred_region
    _
  $region9: #{autoencoder_forward.9} parent=0 // pred_fallthru
    _
  // Predicated region
  $region10: #{autoencoder_forward.9} parent=0 // pred_check
    _
  $region11: #{autoencoder_forward.9} parent=0 // pred_check_branch
    %15 = sbr.rel (0) target = $region13
  $region12: #{autoencoder_forward.9} parent=0 // pred_region
    _
  $region13: #{autoencoder_forward.9} parent=0 // pred_fallthru
    _
  // Predicated region
  $region14: #{autoencoder_forward.9} parent=0 // pred_check
    _
  $region15: #{autoencoder_forward.9} parent=0 // pred_check_branch
    %17 = sbr.rel (0) target = $region17
  $region16: #{autoencoder_forward.9} parent=0 // pred_region
    _
  $region17: #{autoencoder_forward.9} parent=0 // pred_fallthru
    _
  // Predicated region
  $region18: #{autoencoder_forward.9} parent=0 // pred_check
    _
  $region19: #{autoencoder_forward.9} parent=0 // pred_check_branch
    %19 = sbr.rel (0) target = $region21
  $region20: #{autoencoder_forward.9} parent=0 // pred_region
    _
  $region21: #{autoencoder_forward.9} parent=0 // pred_fallthru
    _
  %v21 = vld [vmem:[%s0] sm:$0x3]
  %v22 = vld [vmem:[%s1] sm:$0xf]
  %v23 = vld [vmem:[%s1 + $0x4] sm:$0xf]
  %v24 = vld [vmem:[%s1 + $0x8] sm:$0xf]
  %v25 = vld [vmem:[%s1 + $0xc] sm:$0xf]
  %v26 = vld [vmem:[%s1 + $0x10] sm:$0xf]
  %v27 = vld [vmem:[%s1 + $0x14] sm:$0xf]
  %v28 = vld [vmem:[%s1 + $0x18] sm:$0xf]
  %v29 = vld [vmem:[%s1 + $0x1c] sm:$0xf]
  %v30 = vld [vmem:[%s1 + $0x20] sm:$0xf]
  %v31 = vld [vmem:[%s1 + $0x24] sm:$0xf]
  %v32 = vld [vmem:[%s1 + $0x28] sm:$0xf]
  %v33 = vld [vmem:[%s1 + $0x2c] sm:$0xf]
  %v34 = vld [vmem:[%s1 + $0x30] sm:$0xf]
  %v35 = vld [vmem:[%s1 + $0x34] sm:$0xf]
  %v36 = vld [vmem:[%s1 + $0x38] sm:$0xf]
  %v37 = vld [vmem:[%s1 + $0x3c] sm:$0xf]
  %v38 = vld [vmem:[%s1 + $0x40] sm:$0xf]
  %v39 = vld [vmem:[%s1 + $0x44] sm:$0xf]
  %v40 = vld [vmem:[%s1 + $0x48] sm:$0xf]
  %v41 = vld [vmem:[%s1 + $0x4c] sm:$0xf]
  %v42 = vld [vmem:[%s1 + $0x50] sm:$0xf]
  %v43 = vld [vmem:[%s1 + $0x54] sm:$0xf]
  %v44 = vld [vmem:[%s1 + $0x58] sm:$0xf]
  %v45 = vld [vmem:[%s1 + $0x5c] sm:$0xf]
  %v46 = vld [vmem:[%s1 + $0x60] sm:$0xf]
  %v47 = vld [vmem:[%s1 + $0x64] sm:$0xf]
  %v48 = vld [vmem:[%s1 + $0x68] sm:$0xf]
  %v49 = vld [vmem:[%s1 + $0x6c] sm:$0xf]
  %v50 = vld [vmem:[%s1 + $0x70] sm:$0xf]
  %v51 = vld [vmem:[%s1 + $0x74] sm:$0xf]
  %v52 = vld [vmem:[%s1 + $0x78] sm:$0xf]
  %v53 = vld [vmem:[%s1 + $0x7c] sm:$0xf]
  %v54 = vld [vmem:[%s2] sm:$0x1]
  %v56 = vlaneseq
  %v57 = vshrl.u32 %v56, 7
  %v58 = vsub.s32 0, %v57
  %v59 = vrot.slane %v54, %v58
  %v63 = vunpack.c.l.s4 1966171168
  %v64 = vunpack.c.0.s8 %v63
  %v65 = vlaneseq
  %v66 = vshrl.u32 %v65, 7
  %v67 = vsub.s32 %v64, %v66
  %v68 = vrot.slane %v21, %v67
  %v69 = vcombine.high %v68, %v68
  %v71 = vunpack.c.l.s4 1966171168
  %v72 = vunpack.c.0.s8 %v71
  %v73 = vlaneseq
  %v74 = vshrl.u32 %v73, 7
  %v75 = vsub.s32 %v72, %v74
  %v76 = vrot.slane %v68, %v75
  %v78 = vunpack.c.l.s4 1966171168
  %v79 = vunpack.c.0.s8 %v78
  %v80 = vlaneseq
  %v81 = vshrl.u32 %v80, 7
  %v82 = vsub.s32 %v79, %v81
  %v83 = vrot.slane %v69, %v82
  %v118 = vunpack.c.l.b16 %v22
  %v119 = vunpack.c.l.b16 %v23
  %v120 = vunpack.c.l.b16 %v24
  %v121 = vunpack.c.l.b16 %v25
  %v122 = vunpack.c.l.b16 %v26
  %v123 = vunpack.c.l.b16 %v27
  %v124 = vunpack.c.l.b16 %v28
  %v125 = vunpack.c.l.b16 %v29
  %v126 = vunpack.c.l.b16 %v30
  %v127 = vunpack.c.l.b16 %v31
  %v128 = vunpack.c.l.b16 %v32
  %v129 = vunpack.c.l.b16 %v33
  %v130 = vunpack.c.l.b16 %v34
  %v131 = vunpack.c.l.b16 %v35
  %v132 = vunpack.c.l.b16 %v36
  %v133 = vunpack.c.l.b16 %v37
  %v134 = vunpack.c.l.b16 %v38
  %v135 = vunpack.c.l.b16 %v39
  %v136 = vunpack.c.l.b16 %v40
  %v137 = vunpack.c.l.b16 %v41
  %v138 = vunpack.c.l.b16 %v42
  %v139 = vunpack.c.l.b16 %v43
  %v140 = vunpack.c.l.b16 %v44
  %v141 = vunpack.c.l.b16 %v45
  %v142 = vunpack.c.l.b16 %v46
  %v143 = vunpack.c.l.b16 %v47
  %v144 = vunpack.c.l.b16 %v48
  %v145 = vunpack.c.l.b16 %v49
  %v146 = vunpack.c.l.b16 %v50
  %v147 = vunpack.c.l.b16 %v51
  %v148 = vunpack.c.l.b16 %v52
  %v149 = vunpack.c.l.b16 %v53
  %v150 = vpack.c.b16 %v119, %v118
  %v151 = vpack.c.b16 %v121, %v120
  %v152 = vpack.c.b16 %v123, %v122
  %v153 = vpack.c.b16 %v125, %v124
  %v154 = vpack.c.b16 %v127, %v126
  %v155 = vpack.c.b16 %v129, %v128
  %v156 = vpack.c.b16 %v131, %v130
  %v157 = vpack.c.b16 %v133, %v132
  %v158 = vpack.c.b16 %v135, %v134
  %v159 = vpack.c.b16 %v137, %v136
  %v160 = vpack.c.b16 %v139, %v138
  %v161 = vpack.c.b16 %v141, %v140
  %v162 = vpack.c.b16 %v143, %v142
  %v163 = vpack.c.b16 %v145, %v144
  %v164 = vpack.c.b16 %v147, %v146
  %v165 = vpack.c.b16 %v149, %v148
  %182 = vmatprep.subr.bf16.mxu0 0
  %183 = vmatpush1.bf16.msra.mxu0 %v150
  %184 = vmatprep.subr.bf16.mxu0 0
  %185 = vmatpush1.bf16.msra.mxu0 %v151
  %186 = vmatprep.subr.bf16.mxu0 0
  %187 = vmatpush1.bf16.msra.mxu0 %v152
  %188 = vmatprep.subr.bf16.mxu0 0
  %189 = vmatpush1.bf16.msra.mxu0 %v153
  %190 = vmatprep.subr.bf16.mxu0 0
  %191 = vmatpush1.bf16.msra.mxu0 %v154
  %192 = vmatprep.subr.bf16.mxu0 0
  %193 = vmatpush1.bf16.msra.mxu0 %v155
  %194 = vmatprep.subr.bf16.mxu0 0
  %195 = vmatpush1.bf16.msra.mxu0 %v156
  %196 = vmatprep.subr.bf16.mxu0 0
  %197 = vmatpush1.bf16.msra.mxu0 %v157
  %198 = vmatprep.subr.bf16.mxu0 0
  %199 = vmatpush1.bf16.msra.mxu0 %v158
  %200 = vmatprep.subr.bf16.mxu0 0
  %201 = vmatpush1.bf16.msra.mxu0 %v159
  %202 = vmatprep.subr.bf16.mxu0 0
  %203 = vmatpush1.bf16.msra.mxu0 %v160
  %204 = vmatprep.subr.bf16.mxu0 0
  %205 = vmatpush1.bf16.msra.mxu0 %v161
  %206 = vmatprep.subr.bf16.mxu0 0
  %207 = vmatpush1.bf16.msra.mxu0 %v162
  %208 = vmatprep.subr.bf16.mxu0 0
  %209 = vmatpush1.bf16.msra.mxu0 %v163
  %210 = vmatprep.subr.bf16.mxu0 0
  %211 = vmatpush1.bf16.msra.mxu0 %v164
  %212 = vmatprep.subr.bf16.mxu0 0
  %213 = vmatpush1.bf16.msra.mxu0 %v165
  %214 = vmatprep.mubr.bf16.mxu0 %v83
  %215 = vmatmul.mubr.bf16.gmra.mrb[0].mxu0 %v76
  %v216 = vpop.f32.mrb[0].mxu0
  %v217 = vadd.f32 %v59, %v216
  %v218 = vpop.f32.mrb[0].mxu0
  %v219 = vpop.f32.mrb[0].mxu0
  %v220 = vpop.f32.mrb[0].mxu0
  %221 = vdwg.mxu0
  %vm222 = vcmp.ge.f32.partialorder %v217, 0.0
  %v223 = vmul.f32 %v217, 0.2
  %v224 = vsel %vm222, %v217, %v223
  %v225 = vpack.c.bf16 %v224, %v224
  %v226 = vld [vmem:[%s3] sm:$0xff]
  %v227 = vld [vmem:[%s3 + $0x8] sm:$0xff]
  %v228 = vld [vmem:[%s3 + $0x10] sm:$0xff]
  %v229 = vld [vmem:[%s3 + $0x18] sm:$0xff]
  %v230 = vld [vmem:[%s3 + $0x20] sm:$0xff]
  %v231 = vld [vmem:[%s3 + $0x28] sm:$0xff]
  %v232 = vld [vmem:[%s3 + $0x30] sm:$0xff]
  %v233 = vld [vmem:[%s3 + $0x38] sm:$0xff]
  %v234 = vld [vmem:[%s3 + $0x40] sm:$0xff]
  %v235 = vld [vmem:[%s3 + $0x48] sm:$0xff]
  %v236 = vld [vmem:[%s3 + $0x50] sm:$0xff]
  %v237 = vld [vmem:[%s3 + $0x58] sm:$0xff]
  %v238 = vld [vmem:[%s3 + $0x60] sm:$0xff]
  %v239 = vld [vmem:[%s3 + $0x68] sm:$0xff]
  %v240 = vld [vmem:[%s3 + $0x70] sm:$0xff]
  %v241 = vld [vmem:[%s3 + $0x78] sm:$0xff]
  %v242 = vld [vmem:[%s3 + $0x80] sm:$0xff]
  %v243 = vld [vmem:[%s3 + $0x88] sm:$0xff]
  %v244 = vld [vmem:[%s3 + $0x90] sm:$0xff]
  %v245 = vld [vmem:[%s3 + $0x98] sm:$0xff]
  %v246 = vld [vmem:[%s3 + $0xa0] sm:$0xff]
  %v247 = vld [vmem:[%s3 + $0xa8] sm:$0xff]
  %v248 = vld [vmem:[%s3 + $0xb0] sm:$0xff]
  %v249 = vld [vmem:[%s3 + $0xb8] sm:$0xff]
  %v250 = vld [vmem:[%s3 + $0xc0] sm:$0xff]
  %v251 = vld [vmem:[%s3 + $0xc8] sm:$0xff]
  %v252 = vld [vmem:[%s3 + $0xd0] sm:$0xff]
  %v253 = vld [vmem:[%s3 + $0xd8] sm:$0xff]
  %v254 = vld [vmem:[%s3 + $0xe0] sm:$0xff]
  %v255 = vld [vmem:[%s3 + $0xe8] sm:$0xff]
  %v256 = vld [vmem:[%s3 + $0xf0] sm:$0xff]
  %v257 = vld [vmem:[%s3 + $0xf8] sm:$0xff]
  %v258 = vld [vmem:[%s3 + $0x100] sm:$0xff]
  %v259 = vld [vmem:[%s3 + $0x108] sm:$0xff]
  %v260 = vld [vmem:[%s3 + $0x110] sm:$0xff]
  %v261 = vld [vmem:[%s3 + $0x118] sm:$0xff]
  %v262 = vld [vmem:[%s3 + $0x120] sm:$0xff]
  %v263 = vld [vmem:[%s3 + $0x128] sm:$0xff]
  %v264 = vld [vmem:[%s3 + $0x130] sm:$0xff]
  %v265 = vld [vmem:[%s3 + $0x138] sm:$0xff]
  %v266 = vld [vmem:[%s3 + $0x140] sm:$0xff]
  %v267 = vld [vmem:[%s3 + $0x148] sm:$0xff]
  %v268 = vld [vmem:[%s3 + $0x150] sm:$0xff]
  %v269 = vld [vmem:[%s3 + $0x158] sm:$0xff]
  %v270 = vld [vmem:[%s3 + $0x160] sm:$0xff]
  %v271 = vld [vmem:[%s3 + $0x168] sm:$0xff]
  %v272 = vld [vmem:[%s3 + $0x170] sm:$0xff]
  %v273 = vld [vmem:[%s3 + $0x178] sm:$0xff]
  %v274 = vld [vmem:[%s3 + $0x180] sm:$0xff]
  %v275 = vld [vmem:[%s3 + $0x188] sm:$0xff]
  %v276 = vld [vmem:[%s3 + $0x190] sm:$0xff]
  %v277 = vld [vmem:[%s3 + $0x198] sm:$0xff]
  %v278 = vld [vmem:[%s3 + $0x1a0] sm:$0xff]
  %v279 = vld [vmem:[%s3 + $0x1a8] sm:$0xff]
  %v280 = vld [vmem:[%s3 + $0x1b0] sm:$0xff]
  %v281 = vld [vmem:[%s3 + $0x1b8] sm:$0xff]
  %v282 = vld [vmem:[%s3 + $0x1c0] sm:$0xff]
  %v283 = vld [vmem:[%s3 + $0x1c8] sm:$0xff]
  %v284 = vld [vmem:[%s3 + $0x1d0] sm:$0xff]
  %v285 = vld [vmem:[%s3 + $0x1d8] sm:$0xff]
  %v286 = vld [vmem:[%s3 + $0x1e0] sm:$0xff]
  %v287 = vld [vmem:[%s3 + $0x1e8] sm:$0xff]
  %v288 = vld [vmem:[%s3 + $0x1f0] sm:$0xff]
  %v289 = vld [vmem:[%s3 + $0x1f8] sm:$0xff]
  %v290 = vld [vmem:[%s4] sm:$0xff]
  %v291 = vld [vmem:[%s4 + $0x8] sm:$0xff]
  %v294 = vlaneseq
  %v295 = vshrl.u32 %v294, 7
  %v296 = vsub.s32 0, %v295
  %v297 = vrot.slane %v290, %v296
  %v298 = vlaneseq
  %v299 = vshrl.u32 %v298, 7
  %v300 = vsub.s32 1, %v299
  %v301 = vrot.slane %v290, %v300
  %v302 = vlaneseq
  %v303 = vshrl.u32 %v302, 7
  %v304 = vsub.s32 2, %v303
  %v305 = vrot.slane %v290, %v304
  %v306 = vlaneseq
  %v307 = vshrl.u32 %v306, 7
  %v308 = vsub.s32 3, %v307
  %v309 = vrot.slane %v290, %v308
  %v310 = vlaneseq
  %v311 = vshrl.u32 %v310, 7
  %v312 = vsub.s32 4, %v311
  %v313 = vrot.slane %v290, %v312
  %v314 = vlaneseq
  %v315 = vshrl.u32 %v314, 7
  %v316 = vsub.s32 5, %v315
  %v317 = vrot.slane %v290, %v316
  %v318 = vlaneseq
  %v319 = vshrl.u32 %v318, 7
  %v320 = vsub.s32 6, %v319
  %v321 = vrot.slane %v290, %v320
  %v322 = vlaneseq
  %v323 = vshrl.u32 %v322, 7
  %v324 = vsub.s32 7, %v323
  %v325 = vrot.slane %v290, %v324
  %v326 = vlaneseq
  %v327 = vshrl.u32 %v326, 7
  %v328 = vsub.s32 0, %v327
  %v329 = vrot.slane %v291, %v328
  %v330 = vlaneseq
  %v331 = vshrl.u32 %v330, 7
  %v332 = vsub.s32 1, %v331
  %v333 = vrot.slane %v291, %v332
  %v334 = vlaneseq
  %v335 = vshrl.u32 %v334, 7
  %v336 = vsub.s32 2, %v335
  %v337 = vrot.slane %v291, %v336
  %v338 = vlaneseq
  %v339 = vshrl.u32 %v338, 7
  %v340 = vsub.s32 3, %v339
  %v341 = vrot.slane %v291, %v340
  %v342 = vlaneseq
  %v343 = vshrl.u32 %v342, 7
  %v344 = vsub.s32 4, %v343
  %v345 = vrot.slane %v291, %v344
  %v346 = vlaneseq
  %v347 = vshrl.u32 %v346, 7
  %v348 = vsub.s32 5, %v347
  %v349 = vrot.slane %v291, %v348
  %v350 = vlaneseq
  %v351 = vshrl.u32 %v350, 7
  %v352 = vsub.s32 6, %v351
  %v353 = vrot.slane %v291, %v352
  %v354 = vlaneseq
  %v355 = vshrl.u32 %v354, 7
  %v356 = vsub.s32 7, %v355
  %v357 = vrot.slane %v291, %v356
  %v438 = vunpack.c.l.b16 %v226
  %v439 = vunpack.c.h.b16 %v226
  %v440 = vunpack.c.l.b16 %v227
  %v441 = vunpack.c.h.b16 %v227
  %v442 = vunpack.c.l.b16 %v228
  %v443 = vunpack.c.h.b16 %v228
  %v444 = vunpack.c.l.b16 %v229
  %v445 = vunpack.c.h.b16 %v229
  %v446 = vunpack.c.l.b16 %v230
  %v447 = vunpack.c.h.b16 %v230
  %v448 = vunpack.c.l.b16 %v231
  %v449 = vunpack.c.h.b16 %v231
  %v450 = vunpack.c.l.b16 %v232
  %v451 = vunpack.c.h.b16 %v232
  %v452 = vunpack.c.l.b16 %v233
  %v453 = vunpack.c.h.b16 %v233
  %v454 = vunpack.c.l.b16 %v234
  %v455 = vunpack.c.h.b16 %v234
  %v456 = vunpack.c.l.b16 %v235
  %v457 = vunpack.c.h.b16 %v235
  %v458 = vunpack.c.l.b16 %v236
  %v459 = vunpack.c.h.b16 %v236
  %v460 = vunpack.c.l.b16 %v237
  %v461 = vunpack.c.h.b16 %v237
  %v462 = vunpack.c.l.b16 %v238
  %v463 = vunpack.c.h.b16 %v238
  %v464 = vunpack.c.l.b16 %v239
  %v465 = vunpack.c.h.b16 %v239
  %v466 = vunpack.c.l.b16 %v240
  %v467 = vunpack.c.h.b16 %v240
  %v468 = vunpack.c.l.b16 %v241
  %v469 = vunpack.c.h.b16 %v241
  %v470 = vunpack.c.l.b16 %v242
  %v471 = vunpack.c.h.b16 %v242
  %v472 = vunpack.c.l.b16 %v243
  %v473 = vunpack.c.h.b16 %v243
  %v474 = vunpack.c.l.b16 %v244
  %v475 = vunpack.c.h.b16 %v244
  %v476 = vunpack.c.l.b16 %v245
  %v477 = vunpack.c.h.b16 %v245
  %v478 = vunpack.c.l.b16 %v246
  %v479 = vunpack.c.h.b16 %v246
  %v480 = vunpack.c.l.b16 %v247
  %v481 = vunpack.c.h.b16 %v247
  %v482 = vunpack.c.l.b16 %v248
  %v483 = vunpack.c.h.b16 %v248
  %v484 = vunpack.c.l.b16 %v249
  %v485 = vunpack.c.h.b16 %v249
  %v486 = vunpack.c.l.b16 %v250
  %v487 = vunpack.c.h.b16 %v250
  %v488 = vunpack.c.l.b16 %v251
  %v489 = vunpack.c.h.b16 %v251
  %v490 = vunpack.c.l.b16 %v252
  %v491 = vunpack.c.h.b16 %v252
  %v492 = vunpack.c.l.b16 %v253
  %v493 = vunpack.c.h.b16 %v253
  %v494 = vunpack.c.l.b16 %v254
  %v495 = vunpack.c.h.b16 %v254
  %v496 = vunpack.c.l.b16 %v255
  %v497 = vunpack.c.h.b16 %v255
  %v498 = vunpack.c.l.b16 %v256
  %v499 = vunpack.c.h.b16 %v256
  %v500 = vunpack.c.l.b16 %v257
  %v501 = vunpack.c.h.b16 %v257
  %v502 = vunpack.c.l.b16 %v258
  %v503 = vunpack.c.h.b16 %v258
  %v504 = vunpack.c.l.b16 %v259
  %v505 = vunpack.c.h.b16 %v259
  %v506 = vunpack.c.l.b16 %v260
  %v507 = vunpack.c.h.b16 %v260
  %v508 = vunpack.c.l.b16 %v261
  %v509 = vunpack.c.h.b16 %v261
  %v510 = vunpack.c.l.b16 %v262
  %v511 = vunpack.c.h.b16 %v262
  %v512 = vunpack.c.l.b16 %v263
  %v513 = vunpack.c.h.b16 %v263
  %v514 = vunpack.c.l.b16 %v264
  %v515 = vunpack.c.h.b16 %v264
  %v516 = vunpack.c.l.b16 %v265
  %v517 = vunpack.c.h.b16 %v265
  %v518 = vunpack.c.l.b16 %v266
  %v519 = vunpack.c.h.b16 %v266
  %v520 = vunpack.c.l.b16 %v267
  %v521 = vunpack.c.h.b16 %v267
  %v522 = vunpack.c.l.b16 %v268
  %v523 = vunpack.c.h.b16 %v268
  %v524 = vunpack.c.l.b16 %v269
  %v525 = vunpack.c.h.b16 %v269
  %v526 = vunpack.c.l.b16 %v270
  %v527 = vunpack.c.h.b16 %v270
  %v528 = vunpack.c.l.b16 %v271
  %v529 = vunpack.c.h.b16 %v271
  %v530 = vunpack.c.l.b16 %v272
  %v531 = vunpack.c.h.b16 %v272
  %v532 = vunpack.c.l.b16 %v273
  %v533 = vunpack.c.h.b16 %v273
  %v534 = vunpack.c.l.b16 %v274
  %v535 = vunpack.c.h.b16 %v274
  %v536 = vunpack.c.l.b16 %v275
  %v537 = vunpack.c.h.b16 %v275
  %v538 = vunpack.c.l.b16 %v276
  %v539 = vunpack.c.h.b16 %v276
  %v540 = vunpack.c.l.b16 %v277
  %v541 = vunpack.c.h.b16 %v277
  %v542 = vunpack.c.l.b16 %v278
  %v543 = vunpack.c.h.b16 %v278
  %v544 = vunpack.c.l.b16 %v279
  %v545 = vunpack.c.h.b16 %v279
  %v546 = vunpack.c.l.b16 %v280
  %v547 = vunpack.c.h.b16 %v280
  %v548 = vunpack.c.l.b16 %v281
  %v549 = vunpack.c.h.b16 %v281
  %v550 = vunpack.c.l.b16 %v282
  %v551 = vunpack.c.h.b16 %v282
  %v552 = vunpack.c.l.b16 %v283
  %v553 = vunpack.c.h.b16 %v283
  %v554 = vunpack.c.l.b16 %v284
  %v555 = vunpack.c.h.b16 %v284
  %v556 = vunpack.c.l.b16 %v285
  %v557 = vunpack.c.h.b16 %v285
  %v558 = vunpack.c.l.b16 %v286
  %v559 = vunpack.c.h.b16 %v286
  %v560 = vunpack.c.l.b16 %v287
  %v561 = vunpack.c.h.b16 %v287
  %v562 = vunpack.c.l.b16 %v288
  %v563 = vunpack.c.h.b16 %v288
  %v564 = vunpack.c.l.b16 %v289
  %v565 = vunpack.c.h.b16 %v289
  %v566 = vpack.c.b16 %v454, %v438
  %v567 = vpack.c.b16 %v455, %v439
  %v568 = vpack.c.b16 %v456, %v440
  %v569 = vpack.c.b16 %v457, %v441
  %v570 = vpack.c.b16 %v458, %v442
  %v571 = vpack.c.b16 %v459, %v443
  %v572 = vpack.c.b16 %v460, %v444
  %v573 = vpack.c.b16 %v461, %v445
  %v574 = vpack.c.b16 %v462, %v446
  %v575 = vpack.c.b16 %v463, %v447
  %v576 = vpack.c.b16 %v464, %v448
  %v577 = vpack.c.b16 %v465, %v449
  %v578 = vpack.c.b16 %v466, %v450
  %v579 = vpack.c.b16 %v467, %v451
  %v580 = vpack.c.b16 %v468, %v452
  %v581 = vpack.c.b16 %v469, %v453
  %v582 = vpack.c.b16 %v486, %v470
  %v583 = vpack.c.b16 %v487, %v471
  %v584 = vpack.c.b16 %v488, %v472
  %v585 = vpack.c.b16 %v489, %v473
  %v586 = vpack.c.b16 %v490, %v474
  %v587 = vpack.c.b16 %v491, %v475
  %v588 = vpack.c.b16 %v492, %v476
  %v589 = vpack.c.b16 %v493, %v477
  %v590 = vpack.c.b16 %v494, %v478
  %v591 = vpack.c.b16 %v495, %v479
  %v592 = vpack.c.b16 %v496, %v480
  %v593 = vpack.c.b16 %v497, %v481
  %v594 = vpack.c.b16 %v498, %v482
  %v595 = vpack.c.b16 %v499, %v483
  %v596 = vpack.c.b16 %v500, %v484
  %v597 = vpack.c.b16 %v501, %v485
  %v598 = vpack.c.b16 %v518, %v502
  %v599 = vpack.c.b16 %v519, %v503
  %v600 = vpack.c.b16 %v520, %v504
  %v601 = vpack.c.b16 %v521, %v505
  %v602 = vpack.c.b16 %v522, %v506
  %v603 = vpack.c.b16 %v523, %v507
  %v604 = vpack.c.b16 %v524, %v508
  %v605 = vpack.c.b16 %v525, %v509
  %v606 = vpack.c.b16 %v526, %v510
  %v607 = vpack.c.b16 %v527, %v511
  %v608 = vpack.c.b16 %v528, %v512
  %v609 = vpack.c.b16 %v529, %v513
  %v610 = vpack.c.b16 %v530, %v514
  %v611 = vpack.c.b16 %v531, %v515
  %v612 = vpack.c.b16 %v532, %v516
  %v613 = vpack.c.b16 %v533, %v517
  %v614 = vpack.c.b16 %v550, %v534
  %v615 = vpack.c.b16 %v551, %v535
  %v616 = vpack.c.b16 %v552, %v536
  %v617 = vpack.c.b16 %v553, %v537
  %v618 = vpack.c.b16 %v554, %v538
  %v619 = vpack.c.b16 %v555, %v539
  %v620 = vpack.c.b16 %v556, %v540
  %v621 = vpack.c.b16 %v557, %v541
  %v622 = vpack.c.b16 %v558, %v542
  %v623 = vpack.c.b16 %v559, %v543
  %v624 = vpack.c.b16 %v560, %v544
  %v625 = vpack.c.b16 %v561, %v545
  %v626 = vpack.c.b16 %v562, %v546
  %v627 = vpack.c.b16 %v563, %v547
  %v628 = vpack.c.b16 %v564, %v548
  %v629 = vpack.c.b16 %v565, %v549
  %vm694 = vcmask 523264
  %v696 = vsel %vm694, %v225, 0
  %698 = vmatprep.subr.bf16.mxu0 %v567
  %699 = vmatpush1.bf16.msra.mxu0 %v566
  %700 = vmatprep.subr.bf16.mxu0 %v583
  %701 = vmatpush1.bf16.msra.mxu0 %v582
  %702 = vmatprep.subr.bf16.mxu0 %v599
  %703 = vmatpush1.bf16.msra.mxu0 %v598
  %704 = vmatprep.subr.bf16.mxu0 %v615
  %705 = vmatpush1.bf16.msra.mxu0 %v614
  %706 = vmatprep.subr.bf16.mxu0 0
  %707 = vmatpush1.bf16.msra.mxu0 0
  %708 = vmatprep.subr.bf16.mxu0 0
  %709 = vmatpush1.bf16.msra.mxu0 0
  %710 = vmatprep.subr.bf16.mxu0 0
  %711 = vmatpush1.bf16.msra.mxu0 0
  %712 = vmatprep.subr.bf16.mxu0 0
  %713 = vmatpush1.bf16.msra.mxu0 0
  %714 = vmatprep.subr.bf16.mxu0 0
  %715 = vmatpush1.bf16.msra.mxu0 0
  %716 = vmatprep.subr.bf16.mxu0 0
  %717 = vmatpush1.bf16.msra.mxu0 0
  %718 = vmatprep.subr.bf16.mxu0 0
  %719 = vmatpush1.bf16.msra.mxu0 0
  %720 = vmatprep.subr.bf16.mxu0 0
  %721 = vmatpush1.bf16.msra.mxu0 0
  %722 = vmatprep.subr.bf16.mxu0 0
  %723 = vmatpush1.bf16.msra.mxu0 0
  %724 = vmatprep.subr.bf16.mxu0 0
  %725 = vmatpush1.bf16.msra.mxu0 0
  %726 = vmatprep.subr.bf16.mxu0 0
  %727 = vmatpush1.bf16.msra.mxu0 0
  %728 = vmatprep.subr.bf16.mxu0 0
  %729 = vmatpush1.bf16.msra.mxu0 0
  %730 = vmatprep.mubr.bf16.mxu0 0
  %731 = vmatmul.mubr.bf16.gmra.mrb[0].mxu0 %v696
  %v732 = vpop.f32.mrb[0].mxu0
  %v733 = vadd.f32 %v297, %v732
  %v734 = vpop.f32.mrb[0].mxu0
  %v735 = vadd.f32 %v301, %v734
  %v736 = vpop.f32.mrb[0].mxu0
  %v737 = vpop.f32.mrb[0].mxu0
  %738 = vdwg.mxu0
  %739 = vmatprep.subr.bf16.mxu0 %v569
  %740 = vmatpush1.bf16.msra.mxu0 %v568
  %741 = vmatprep.subr.bf16.mxu0 %v585
  %742 = vmatpush1.bf16.msra.mxu0 %v584
  %743 = vmatprep.subr.bf16.mxu0 %v601
  %744 = vmatpush1.bf16.msra.mxu0 %v600
  %745 = vmatprep.subr.bf16.mxu0 %v617
  %746 = vmatpush1.bf16.msra.mxu0 %v616
  %747 = vmatprep.subr.bf16.mxu0 0
  %748 = vmatpush1.bf16.msra.mxu0 0
  %749 = vmatprep.subr.bf16.mxu0 0
  %750 = vmatpush1.bf16.msra.mxu0 0
  %751 = vmatprep.subr.bf16.mxu0 0
  %752 = vmatpush1.bf16.msra.mxu0 0
  %753 = vmatprep.subr.bf16.mxu0 0
  %754 = vmatpush1.bf16.msra.mxu0 0
  %755 = vmatprep.subr.bf16.mxu0 0
  %756 = vmatpush1.bf16.msra.mxu0 0
  %757 = vmatprep.subr.bf16.mxu0 0
  %758 = vmatpush1.bf16.msra.mxu0 0
  %759 = vmatprep.subr.bf16.mxu0 0
  %760 = vmatpush1.bf16.msra.mxu0 0
  %761 = vmatprep.subr.bf16.mxu0 0
  %762 = vmatpush1.bf16.msra.mxu0 0
  %763 = vmatprep.subr.bf16.mxu0 0
  %764 = vmatpush1.bf16.msra.mxu0 0
  %765 = vmatprep.subr.bf16.mxu0 0
  %766 = vmatpush1.bf16.msra.mxu0 0
  %767 = vmatprep.subr.bf16.mxu0 0
  %768 = vmatpush1.bf16.msra.mxu0 0
  %769 = vmatprep.subr.bf16.mxu0 0
  %770 = vmatpush1.bf16.msra.mxu0 0
  %771 = vmatprep.mubr.bf16.mxu0 0
  %772 = vmatmul.mubr.bf16.gmra.mrb[0].mxu0 %v696
  %v773 = vpop.f32.mrb[0].mxu0
  %v774 = vadd.f32 %v305, %v773
  %v775 = vpop.f32.mrb[0].mxu0
  %v776 = vadd.f32 %v309, %v775
  %v777 = vpop.f32.mrb[0].mxu0
  %v778 = vpop.f32.mrb[0].mxu0
  %779 = vdwg.mxu0
  %780 = vmatprep.subr.bf16.mxu0 %v571
  %781 = vmatpush1.bf16.msra.mxu0 %v570
  %782 = vmatprep.subr.bf16.mxu0 %v587
  %783 = vmatpush1.bf16.msra.mxu0 %v586
  %784 = vmatprep.subr.bf16.mxu0 %v603
  %785 = vmatpush1.bf16.msra.mxu0 %v602
  %786 = vmatprep.subr.bf16.mxu0 %v619
  %787 = vmatpush1.bf16.msra.mxu0 %v618
  %788 = vmatprep.subr.bf16.mxu0 0
  %789 = vmatpush1.bf16.msra.mxu0 0
  %790 = vmatprep.subr.bf16.mxu0 0
  %791 = vmatpush1.bf16.msra.mxu0 0
  %792 = vmatprep.subr.bf16.mxu0 0
  %793 = vmatpush1.bf16.msra.mxu0 0
  %794 = vmatprep.subr.bf16.mxu0 0
  %795 = vmatpush1.bf16.msra.mxu0 0
  %796 = vmatprep.subr.bf16.mxu0 0
  %797 = vmatpush1.bf16.msra.mxu0 0
  %798 = vmatprep.subr.bf16.mxu0 0
  %799 = vmatpush1.bf16.msra.mxu0 0
  %800 = vmatprep.subr.bf16.mxu0 0
  %801 = vmatpush1.bf16.msra.mxu0 0
  %802 = vmatprep.subr.bf16.mxu0 0
  %803 = vmatpush1.bf16.msra.mxu0 0
  %804 = vmatprep.subr.bf16.mxu0 0
  %805 = vmatpush1.bf16.msra.mxu0 0
  %806 = vmatprep.subr.bf16.mxu0 0
  %807 = vmatpush1.bf16.msra.mxu0 0
  %808 = vmatprep.subr.bf16.mxu0 0
  %809 = vmatpush1.bf16.msra.mxu0 0
  %810 = vmatprep.subr.bf16.mxu0 0
  %811 = vmatpush1.bf16.msra.mxu0 0
  %812 = vmatprep.mubr.bf16.mxu0 0
  %813 = vmatmul.mubr.bf16.gmra.mrb[0].mxu0 %v696
  %v814 = vpop.f32.mrb[0].mxu0
  %v815 = vadd.f32 %v313, %v814
  %v816 = vpop.f32.mrb[0].mxu0
  %v817 = vadd.f32 %v317, %v816
  %v818 = vpop.f32.mrb[0].mxu0
  %v819 = vpop.f32.mrb[0].mxu0
  %820 = vdwg.mxu0
  %821 = vmatprep.subr.bf16.mxu0 %v573
  %822 = vmatpush1.bf16.msra.mxu0 %v572
  %823 = vmatprep.subr.bf16.mxu0 %v589
  %824 = vmatpush1.bf16.msra.mxu0 %v588
  %825 = vmatprep.subr.bf16.mxu0 %v605
  %826 = vmatpush1.bf16.msra.mxu0 %v604
  %827 = vmatprep.subr.bf16.mxu0 %v621
  %828 = vmatpush1.bf16.msra.mxu0 %v620
  %829 = vmatprep.subr.bf16.mxu0 0
  %830 = vmatpush1.bf16.msra.mxu0 0
  %831 = vmatprep.subr.bf16.mxu0 0
  %832 = vmatpush1.bf16.msra.mxu0 0
  %833 = vmatprep.subr.bf16.mxu0 0
  %834 = vmatpush1.bf16.msra.mxu0 0
  %835 = vmatprep.subr.bf16.mxu0 0
  %836 = vmatpush1.bf16.msra.mxu0 0
  %837 = vmatprep.subr.bf16.mxu0 0
  %838 = vmatpush1.bf16.msra.mxu0 0
  %839 = vmatprep.subr.bf16.mxu0 0
  %840 = vmatpush1.bf16.msra.mxu0 0
  %841 = vmatprep.subr.bf16.mxu0 0
  %842 = vmatpush1.bf16.msra.mxu0 0
  %843 = vmatprep.subr.bf16.mxu0 0
  %844 = vmatpush1.bf16.msra.mxu0 0
  %845 = vmatprep.subr.bf16.mxu0 0
  %846 = vmatpush1.bf16.msra.mxu0 0
  %847 = vmatprep.subr.bf16.mxu0 0
  %848 = vmatpush1.bf16.msra.mxu0 0
  %849 = vmatprep.subr.bf16.mxu0 0
  %850 = vmatpush1.bf16.msra.mxu0 0
  %851 = vmatprep.subr.bf16.mxu0 0
  %852 = vmatpush1.bf16.msra.mxu0 0
  %853 = vmatprep.mubr.bf16.mxu0 0
  %854 = vmatmul.mubr.bf16.gmra.mrb[0].mxu0 %v696
  %v855 = vpop.f32.mrb[0].mxu0
  %v856 = vadd.f32 %v321, %v855
  %v857 = vpop.f32.mrb[0].mxu0
  %v858 = vadd.f32 %v325, %v857
  %v859 = vpop.f32.mrb[0].mxu0
  %v860 = vpop.f32.mrb[0].mxu0
  %861 = vdwg.mxu0
  %862 = vmatprep.subr.bf16.mxu0 %v575
  %863 = vmatpush1.bf16.msra.mxu0 %v574
  %864 = vmatprep.subr.bf16.mxu0 %v591
  %865 = vmatpush1.bf16.msra.mxu0 %v590
  %866 = vmatprep.subr.bf16.mxu0 %v607
  %867 = vmatpush1.bf16.msra.mxu0 %v606
  %868 = vmatprep.subr.bf16.mxu0 %v623
  %869 = vmatpush1.bf16.msra.mxu0 %v622
  %870 = vmatprep.subr.bf16.mxu0 0
  %871 = vmatpush1.bf16.msra.mxu0 0
  %872 = vmatprep.subr.bf16.mxu0 0
  %873 = vmatpush1.bf16.msra.mxu0 0
  %874 = vmatprep.subr.bf16.mxu0 0
  %875 = vmatpush1.bf16.msra.mxu0 0
  %876 = vmatprep.subr.bf16.mxu0 0
  %877 = vmatpush1.bf16.msra.mxu0 0
  %878 = vmatprep.subr.bf16.mxu0 0
  %879 = vmatpush1.bf16.msra.mxu0 0
  %880 = vmatprep.subr.bf16.mxu0 0
  %881 = vmatpush1.bf16.msra.mxu0 0
  %882 = vmatprep.subr.bf16.mxu0 0
  %883 = vmatpush1.bf16.msra.mxu0 0
  %884 = vmatprep.subr.bf16.mxu0 0
  %885 = vmatpush1.bf16.msra.mxu0 0
  %886 = vmatprep.subr.bf16.mxu0 0
  %887 = vmatpush1.bf16.msra.mxu0 0
  %888 = vmatprep.subr.bf16.mxu0 0
  %889 = vmatpush1.bf16.msra.mxu0 0
  %890 = vmatprep.subr.bf16.mxu0 0
  %891 = vmatpush1.bf16.msra.mxu0 0
  %892 = vmatprep.subr.bf16.mxu0 0
  %893 = vmatpush1.bf16.msra.mxu0 0
  %894 = vmatprep.mubr.bf16.mxu0 0
  %895 = vmatmul.mubr.bf16.gmra.mrb[0].mxu0 %v696
  %v896 = vpop.f32.mrb[0].mxu0
  %v897 = vadd.f32 %v329, %v896
  %v898 = vpop.f32.mrb[0].mxu0
  %v899 = vadd.f32 %v333, %v898
  %v900 = vpop.f32.mrb[0].mxu0
  %v901 = vpop.f32.mrb[0].mxu0
  %902 = vdwg.mxu0
  %903 = vmatprep.subr.bf16.mxu0 %v577
  %904 = vmatpush1.bf16.msra.mxu0 %v576
  %905 = vmatprep.subr.bf16.mxu0 %v593
  %906 = vmatpush1.bf16.msra.mxu0 %v592
  %907 = vmatprep.subr.bf16.mxu0 %v609
  %908 = vmatpush1.bf16.msra.mxu0 %v608
  %909 = vmatprep.subr.bf16.mxu0 %v625
  %910 = vmatpush1.bf16.msra.mxu0 %v624
  %911 = vmatprep.subr.bf16.mxu0 0
  %912 = vmatpush1.bf16.msra.mxu0 0
  %913 = vmatprep.subr.bf16.mxu0 0
  %914 = vmatpush1.bf16.msra.mxu0 0
  %915 = vmatprep.subr.bf16.mxu0 0
  %916 = vmatpush1.bf16.msra.mxu0 0
  %917 = vmatprep.subr.bf16.mxu0 0
  %918 = vmatpush1.bf16.msra.mxu0 0
  %919 = vmatprep.subr.bf16.mxu0 0
  %920 = vmatpush1.bf16.msra.mxu0 0
  %921 = vmatprep.subr.bf16.mxu0 0
  %922 = vmatpush1.bf16.msra.mxu0 0
  %923 = vmatprep.subr.bf16.mxu0 0
  %924 = vmatpush1.bf16.msra.mxu0 0
  %925 = vmatprep.subr.bf16.mxu0 0
  %926 = vmatpush1.bf16.msra.mxu0 0
  %927 = vmatprep.subr.bf16.mxu0 0
  %928 = vmatpush1.bf16.msra.mxu0 0
  %929 = vmatprep.subr.bf16.mxu0 0
  %930 = vmatpush1.bf16.msra.mxu0 0
  %931 = vmatprep.subr.bf16.mxu0 0
  %932 = vmatpush1.bf16.msra.mxu0 0
  %933 = vmatprep.subr.bf16.mxu0 0
  %934 = vmatpush1.bf16.msra.mxu0 0
  %935 = vmatprep.mubr.bf16.mxu0 0
  %936 = vmatmul.mubr.bf16.gmra.mrb[0].mxu0 %v696
  %v937 = vpop.f32.mrb[0].mxu0
  %v938 = vadd.f32 %v337, %v937
  %v939 = vpop.f32.mrb[0].mxu0
  %v940 = vadd.f32 %v341, %v939
  %v941 = vpop.f32.mrb[0].mxu0
  %v942 = vpop.f32.mrb[0].mxu0
  %943 = vdwg.mxu0
  %944 = vmatprep.subr.bf16.mxu0 %v579
  %945 = vmatpush1.bf16.msra.mxu0 %v578
  %946 = vmatprep.subr.bf16.mxu0 %v595
  %947 = vmatpush1.bf16.msra.mxu0 %v594
  %948 = vmatprep.subr.bf16.mxu0 %v611
  %949 = vmatpush1.bf16.msra.mxu0 %v610
  %950 = vmatprep.subr.bf16.mxu0 %v627
  %951 = vmatpush1.bf16.msra.mxu0 %v626
  %952 = vmatprep.subr.bf16.mxu0 0
  %953 = vmatpush1.bf16.msra.mxu0 0
  %954 = vmatprep.subr.bf16.mxu0 0
  %955 = vmatpush1.bf16.msra.mxu0 0
  %956 = vmatprep.subr.bf16.mxu0 0
  %957 = vmatpush1.bf16.msra.mxu0 0
  %958 = vmatprep.subr.bf16.mxu0 0
  %959 = vmatpush1.bf16.msra.mxu0 0
  %960 = vmatprep.subr.bf16.mxu0 0
  %961 = vmatpush1.bf16.msra.mxu0 0
  %962 = vmatprep.subr.bf16.mxu0 0
  %963 = vmatpush1.bf16.msra.mxu0 0
  %964 = vmatprep.subr.bf16.mxu0 0
  %965 = vmatpush1.bf16.msra.mxu0 0
  %966 = vmatprep.subr.bf16.mxu0 0
  %967 = vmatpush1.bf16.msra.mxu0 0
  %968 = vmatprep.subr.bf16.mxu0 0
  %969 = vmatpush1.bf16.msra.mxu0 0
  %970 = vmatprep.subr.bf16.mxu0 0
  %971 = vmatpush1.bf16.msra.mxu0 0
  %972 = vmatprep.subr.bf16.mxu0 0
  %973 = vmatpush1.bf16.msra.mxu0 0
  %974 = vmatprep.subr.bf16.mxu0 0
  %975 = vmatpush1.bf16.msra.mxu0 0
  %976 = vmatprep.mubr.bf16.mxu0 0
  %977 = vmatmul.mubr.bf16.gmra.mrb[0].mxu0 %v696
  %v978 = vpop.f32.mrb[0].mxu0
  %v979 = vadd.f32 %v345, %v978
  %v980 = vpop.f32.mrb[0].mxu0
  %v981 = vadd.f32 %v349, %v980
  %v982 = vpop.f32.mrb[0].mxu0
  %v983 = vpop.f32.mrb[0].mxu0
  %984 = vdwg.mxu0
  %985 = vmatprep.subr.bf16.mxu0 %v581
  %986 = vmatpush1.bf16.msra.mxu0 %v580
  %987 = vmatprep.subr.bf16.mxu0 %v597
  %988 = vmatpush1.bf16.msra.mxu0 %v596
  %989 = vmatprep.subr.bf16.mxu0 %v613
  %990 = vmatpush1.bf16.msra.mxu0 %v612
  %991 = vmatprep.subr.bf16.mxu0 %v629
  %992 = vmatpush1.bf16.msra.mxu0 %v628
  %993 = vmatprep.subr.bf16.mxu0 0
  %994 = vmatpush1.bf16.msra.mxu0 0
  %995 = vmatprep.subr.bf16.mxu0 0
  %996 = vmatpush1.bf16.msra.mxu0 0
  %997 = vmatprep.subr.bf16.mxu0 0
  %998 = vmatpush1.bf16.msra.mxu0 0
  %999 = vmatprep.subr.bf16.mxu0 0
  %1000 = vmatpush1.bf16.msra.mxu0 0
  %1001 = vmatprep.subr.bf16.mxu0 0
  %1002 = vmatpush1.bf16.msra.mxu0 0
  %1003 = vmatprep.subr.bf16.mxu0 0
  %1004 = vmatpush1.bf16.msra.mxu0 0
  %1005 = vmatprep.subr.bf16.mxu0 0
  %1006 = vmatpush1.bf16.msra.mxu0 0
  %1007 = vmatprep.subr.bf16.mxu0 0
  %1008 = vmatpush1.bf16.msra.mxu0 0
  %1009 = vmatprep.subr.bf16.mxu0 0
  %1010 = vmatpush1.bf16.msra.mxu0 0
  %1011 = vmatprep.subr.bf16.mxu0 0
  %1012 = vmatpush1.bf16.msra.mxu0 0
  %1013 = vmatprep.subr.bf16.mxu0 0
  %1014 = vmatpush1.bf16.msra.mxu0 0
  %1015 = vmatprep.subr.bf16.mxu0 0
  %1016 = vmatpush1.bf16.msra.mxu0 0
  %1017 = vmatprep.mubr.bf16.mxu0 0
  %1018 = vmatmul.mubr.bf16.gmra.mrb[0].mxu0 %v696
  %v1019 = vpop.f32.mrb[0].mxu0
  %v1020 = vadd.f32 %v353, %v1019
  %v1021 = vpop.f32.mrb[0].mxu0
  %v1022 = vadd.f32 %v357, %v1021
  %v1023 = vpop.f32.mrb[0].mxu0
  %v1024 = vpop.f32.mrb[0].mxu0
  %1025 = vdwg.mxu0
  %vm1026 = vcmp.ge.f32.partialorder %v733, 0.0
  %vm1027 = vcmp.ge.f32.partialorder %v735, 0.0
  %vm1028 = vcmp.ge.f32.partialorder %v774, 0.0
  %vm1029 = vcmp.ge.f32.partialorder %v776, 0.0
  %vm1030 = vcmp.ge.f32.partialorder %v815, 0.0
  %vm1031 = vcmp.ge.f32.partialorder %v817, 0.0
  %vm1032 = vcmp.ge.f32.partialorder %v856, 0.0
  %vm1033 = vcmp.ge.f32.partialorder %v858, 0.0
  %vm1034 = vcmp.ge.f32.partialorder %v897, 0.0
  %vm1035 = vcmp.ge.f32.partialorder %v899, 0.0
  %vm1036 = vcmp.ge.f32.partialorder %v938, 0.0
  %vm1037 = vcmp.ge.f32.partialorder %v940, 0.0
  %vm1038 = vcmp.ge.f32.partialorder %v979, 0.0
  %vm1039 = vcmp.ge.f32.partialorder %v981, 0.0
  %vm1040 = vcmp.ge.f32.partialorder %v1020, 0.0
  %vm1041 = vcmp.ge.f32.partialorder %v1022, 0.0
  %v1042 = vmul.f32 %v733, 0.2
  %v1043 = vmul.f32 %v735, 0.2
  %v1044 = vmul.f32 %v774, 0.2
  %v1045 = vmul.f32 %v776, 0.2
  %v1046 = vmul.f32 %v815, 0.2
  %v1047 = vmul.f32 %v817, 0.2
  %v1048 = vmul.f32 %v856, 0.2
  %v1049 = vmul.f32 %v858, 0.2
  %v1050 = vmul.f32 %v897, 0.2
  %v1051 = vmul.f32 %v899, 0.2
  %v1052 = vmul.f32 %v938, 0.2
  %v1053 = vmul.f32 %v940, 0.2
  %v1054 = vmul.f32 %v979, 0.2
  %v1055 = vmul.f32 %v981, 0.2
  %v1056 = vmul.f32 %v1020, 0.2
  %v1057 = vmul.f32 %v1022, 0.2
  %v1058 = vsel %vm1026, %v733, %v1042
  %v1059 = vsel %vm1027, %v735, %v1043
  %v1060 = vsel %vm1028, %v774, %v1044
  %v1061 = vsel %vm1029, %v776, %v1045
  %v1062 = vsel %vm1030, %v815, %v1046
  %v1063 = vsel %vm1031, %v817, %v1047
  %v1064 = vsel %vm1032, %v856, %v1048
  %v1065 = vsel %vm1033, %v858, %v1049
  %v1066 = vsel %vm1034, %v897, %v1050
  %v1067 = vsel %vm1035, %v899, %v1051
  %v1068 = vsel %vm1036, %v938, %v1052
  %v1069 = vsel %vm1037, %v940, %v1053
  %v1070 = vsel %vm1038, %v979, %v1054
  %v1071 = vsel %vm1039, %v981, %v1055
  %v1072 = vsel %vm1040, %v1020, %v1056
  %v1073 = vsel %vm1041, %v1022, %v1057
  %v1074 = vpack.c.bf16 %v1058, %v1058
  %v1075 = vpack.c.bf16 %v1059, %v1059
  %v1076 = vpack.c.bf16 %v1060, %v1060
  %v1077 = vpack.c.bf16 %v1061, %v1061
  %v1078 = vpack.c.bf16 %v1062, %v1062
  %v1079 = vpack.c.bf16 %v1063, %v1063
  %v1080 = vpack.c.bf16 %v1064, %v1064
  %v1081 = vpack.c.bf16 %v1065, %v1065
  %v1082 = vpack.c.bf16 %v1066, %v1066
  %v1083 = vpack.c.bf16 %v1067, %v1067
  %v1084 = vpack.c.bf16 %v1068, %v1068
  %v1085 = vpack.c.bf16 %v1069, %v1069
  %v1086 = vpack.c.bf16 %v1070, %v1070
  %v1087 = vpack.c.bf16 %v1071, %v1071
  %v1088 = vpack.c.bf16 %v1072, %v1072
  %v1089 = vpack.c.bf16 %v1073, %v1073
  %v1106 = vcombine.low %v1074, %v1075
  %v1107 = vcombine.low %v1076, %v1077
  %v1108 = vcombine.low %v1078, %v1079
  %v1109 = vcombine.low %v1080, %v1081
  %v1111 = vunpack.c.l.s4 1966171168
  %v1112 = vunpack.c.0.s8 %v1111
  %v1113 = vlaneseq
  %v1114 = vshrl.u32 %v1113, 7
  %v1115 = vsub.s32 %v1112, %v1114
  %v1116 = vrot.slane %v1106, %v1115
  %v1118 = vunpack.c.l.s4 1966171168
  %v1119 = vunpack.c.0.s8 %v1118
  %v1120 = vlaneseq
  %v1121 = vshrl.u32 %v1120, 7
  %v1122 = vsub.s32 %v1119, %v1121
  %v1123 = vrot.slane %v1107, %v1122
  %v1125 = vunpack.c.l.s4 1966171168
  %v1126 = vunpack.c.0.s8 %v1125
  %v1127 = vlaneseq
  %v1128 = vshrl.u32 %v1127, 7
  %v1129 = vsub.s32 %v1126, %v1128
  %v1130 = vrot.slane %v1108, %v1129
  %v1132 = vunpack.c.l.s4 1966171168
  %v1133 = vunpack.c.0.s8 %v1132
  %v1134 = vlaneseq
  %v1135 = vshrl.u32 %v1134, 7
  %v1136 = vsub.s32 %v1133, %v1135
  %v1137 = vrot.slane %v1109, %v1136
  %v1138 = vcombine.low %v1116, %v1123
  %v1139 = vcombine.low %v1130, %v1137
  %v1141 = vunpack.c.l.s4 1966171168
  %v1142 = vunpack.c.0.s8 %v1141
  %v1143 = vlaneseq
  %v1144 = vshrl.u32 %v1143, 7
  %v1145 = vsub.s32 %v1142, %v1144
  %v1146 = vrot.slane %v1138, %v1145
  %v1148 = vunpack.c.l.s4 1966171168
  %v1149 = vunpack.c.0.s8 %v1148
  %v1150 = vlaneseq
  %v1151 = vshrl.u32 %v1150, 7
  %v1152 = vsub.s32 %v1149, %v1151
  %v1153 = vrot.slane %v1139, %v1152
  %v1154 = vcombine.low %v1146, %v1153
  %v1155 = vcombine.low %v1082, %v1083
  %v1156 = vcombine.low %v1084, %v1085
  %v1157 = vcombine.low %v1086, %v1087
  %v1158 = vcombine.low %v1088, %v1089
  %v1160 = vunpack.c.l.s4 1966171168
  %v1161 = vunpack.c.0.s8 %v1160
  %v1162 = vlaneseq
  %v1163 = vshrl.u32 %v1162, 7
  %v1164 = vsub.s32 %v1161, %v1163
  %v1165 = vrot.slane %v1155, %v1164
  %v1167 = vunpack.c.l.s4 1966171168
  %v1168 = vunpack.c.0.s8 %v1167
  %v1169 = vlaneseq
  %v1170 = vshrl.u32 %v1169, 7
  %v1171 = vsub.s32 %v1168, %v1170
  %v1172 = vrot.slane %v1156, %v1171
  %v1174 = vunpack.c.l.s4 1966171168
  %v1175 = vunpack.c.0.s8 %v1174
  %v1176 = vlaneseq
  %v1177 = vshrl.u32 %v1176, 7
  %v1178 = vsub.s32 %v1175, %v1177
  %v1179 = vrot.slane %v1157, %v1178
  %v1181 = vunpack.c.l.s4 1966171168
  %v1182 = vunpack.c.0.s8 %v1181
  %v1183 = vlaneseq
  %v1184 = vshrl.u32 %v1183, 7
  %v1185 = vsub.s32 %v1182, %v1184
  %v1186 = vrot.slane %v1158, %v1185
  %v1187 = vcombine.low %v1165, %v1172
  %v1188 = vcombine.low %v1179, %v1186
  %v1190 = vunpack.c.l.s4 1966171168
  %v1191 = vunpack.c.0.s8 %v1190
  %v1192 = vlaneseq
  %v1193 = vshrl.u32 %v1192, 7
  %v1194 = vsub.s32 %v1191, %v1193
  %v1195 = vrot.slane %v1187, %v1194
  %v1197 = vunpack.c.l.s4 1966171168
  %v1198 = vunpack.c.0.s8 %v1197
  %v1199 = vlaneseq
  %v1200 = vshrl.u32 %v1199, 7
  %v1201 = vsub.s32 %v1198, %v1200
  %v1202 = vrot.slane %v1188, %v1201
  %v1203 = vcombine.low %v1195, %v1202
  %1206 = vst [vmem:[%s5] sm:$0xff] %v1154
  %1207 = vst [vmem:[%s5 + $0x8] sm:$0xff] %v1203
  // Predicated region
  $region22: #{autoencoder_forward.9} parent=0 // pred_check
    _
  $region23: #{autoencoder_forward.9} parent=0 // pred_check_branch
    %1209 = sbr.rel (0) target = $region25
  $region24: #{autoencoder_forward.9} parent=0 // pred_region
    _
  $region25: #{autoencoder_forward.9} parent=0 // pred_fallthru
    _
  // Predicated region
  $region26: #{autoencoder_forward.9} parent=0 // pred_check
    _
  $region27: #{autoencoder_forward.9} parent=0 // pred_check_branch
    %1211 = sbr.rel (0) target = $region29
  $region28: #{autoencoder_forward.9} parent=0 // pred_region
    _
  $region29: #{autoencoder_forward.9} parent=0 // pred_fallthru
    _

// kernel: autoencoder_forward.10
$region0: #{autoencoder_forward.10}
  #allocation0 [shape = 'u32[]', space=smem, size = 0x4, offset = 0x4, fixed_abs, tag = 'smem constant byte address 0x4 - core index']
  #allocation1 [shape = 'u32[144,128]{1,0:T(1,128)}', space=vmem, size = 0x12000, scoped, tag = 'internal scratch']
  %s0 = inlined_call_operand.vmem [shape: bf16[128,128], index: 0, kind: input, shape index: {}]
  %s1 = inlined_call_operand.vmem [shape: bf16[128,64], index: 1, kind: input, shape index: {}]
  %s2 = inlined_call_operand.vmem [shape: f32[1,64], index: 2, kind: input, shape index: {}]
  %s3 = inlined_call_operand.vmem [shape: bf16[128,64], index: 3, kind: output, shape index: {}]
  %s4 = sld [smem:[#allocation0]]
  $region45: #{autoencoder_forward.10} parent=0
    _
  %s6 = ssub.s32 1, %s4
  %s7 = scalar_select 0, %s6, %s4
  loop: start=0, step=1, limit=4
  $region2: #{autoencoder_forward.10} parent=0 // loop_pre_header
    _
  $region3: #{autoencoder_forward.10} parent=0 // loop_header
    %s9 = sphi 0, %s13
    %p10 = scmp.ge.s32.totalorder %s9, 4
    %s19 = sphi 0, %s21
    %s22 = sphi 0, %s19
    %s23 = sphi 0, %s22
    %s39 = sphi 0, %s23
    %s43 = sphi 0, %s43
    %s45 = sphi 0, %s43
    %s46 = sphi 0, %s45
    %s60 = sphi 0, %s46
    %s64 = sphi 0, %s64
    %s66 = sphi 0, %s64
    %s67 = sphi 0, %s66
    %s81 = sphi 0, %s67
    %s87 = sphi 0, %s89
    %s90 = sphi 0, %s87
    %s91 = sphi 0, %s90
    %s107 = sphi 0, %s91
  $region4: #{autoencoder_forward.10} parent=0 // loop_header_branch
    %12 = sbr.rel (%p10) target = $region8
  $region5: #{autoencoder_forward.10} parent=0 // loop_body
    %s14 = ssub.s32 %s9, 1
    %s15 = ssub.s32 %s9, 2
    %s16 = sadd.s32 %s9, 1
    %s17 = ssub.s32 %s9, %s16
    %p18 = scmp.eq.s32.totalorder %s17, 0
    %s20 = sadd.s32 %s19, 1
    %s21 = scalar_select %p18, %s19, %s20
    %p24 = pneg %p18
    %p25 = scmp.eq.s32.totalorder %s9, 1
    %p26 = por %p24, %p25
    %p27 = scmp.ne.s32.totalorder %s19, %s22
    %p28 = scmp.eq.s32.totalorder %s9, 0
    %p29 = por %p27, %p28
    %p30 = scmp.ne.s32.totalorder %s19, %s22
    %p31 = scmp.eq.s32.totalorder %s14, 1
    %p32 = por %p30, %p31
    %p33 = scmp.ne.s32.totalorder %s22, %s23
    %p34 = scmp.eq.s32.totalorder %s14, 0
    %p35 = por %p33, %p34
    %p36 = scmp.ne.s32.totalorder %s22, %s23
    %p37 = scmp.eq.s32.totalorder %s15, 1
    %p38 = por %p36, %p37
    %p40 = scmp.ne.s32.totalorder %s23, %s39
    %p41 = scmp.eq.s32.totalorder %s15, 0
    %p42 = por %p40, %p41
    %s44 = sadd.s32 %s43, 1
    %p47 = scmp.eq.s32.totalorder %s9, 1
    %p48 = scmp.ne.s32.totalorder %s43, %s45
    %p49 = scmp.eq.s32.totalorder %s9, 0
    %p50 = por %p48, %p49
    %p51 = scmp.ne.s32.totalorder %s43, %s45
    %p52 = scmp.eq.s32.totalorder %s14, 1
    %p53 = por %p51, %p52
    %p54 = scmp.ne.s32.totalorder %s45, %s46
    %p55 = scmp.eq.s32.totalorder %s14, 0
    %p56 = por %p54, %p55
    %p57 = scmp.ne.s32.totalorder %s45, %s46
    %p58 = scmp.eq.s32.totalorder %s15, 1
    %p59 = por %p57, %p58
    %p61 = scmp.ne.s32.totalorder %s46, %s60
    %p62 = scmp.eq.s32.totalorder %s15, 0
    %p63 = por %p61, %p62
    %s65 = sadd.s32 %s64, 1
    %p68 = scmp.eq.s32.totalorder %s9, 1
    %p69 = scmp.ne.s32.totalorder %s64, %s66
    %p70 = scmp.eq.s32.totalorder %s9, 0
    %p71 = por %p69, %p70
    %p72 = scmp.ne.s32.totalorder %s64, %s66
    %p73 = scmp.eq.s32.totalorder %s14, 1
    %p74 = por %p72, %p73
    %p75 = scmp.ne.s32.totalorder %s66, %s67
    %p76 = scmp.eq.s32.totalorder %s14, 0
    %p77 = por %p75, %p76
    %p78 = scmp.ne.s32.totalorder %s66, %s67
    %p79 = scmp.eq.s32.totalorder %s15, 1
    %p80 = por %p78, %p79
    %p82 = scmp.ne.s32.totalorder %s67, %s81
    %p83 = scmp.eq.s32.totalorder %s15, 0
    %p84 = por %p82, %p83
    %s85 = ssub.s32 %s9, %s16
    %p86 = scmp.eq.s32.totalorder %s85, 0
    %s88 = sadd.s32 %s87, 1
    %s89 = scalar_select %p86, %s87, %s88
    %p92 = pneg %p86
    %p93 = scmp.eq.s32.totalorder %s9, 1
    %p94 = por %p92, %p93
    %p95 = scmp.ne.s32.totalorder %s87, %s90
    %p96 = scmp.eq.s32.totalorder %s9, 0
    %p97 = por %p95, %p96
    %p98 = scmp.ne.s32.totalorder %s87, %s90
    %p99 = scmp.eq.s32.totalorder %s14, 1
    %p100 = por %p98, %p99
    %p101 = scmp.ne.s32.totalorder %s90, %s91
    %p102 = scmp.eq.s32.totalorder %s14, 0
    %p103 = por %p101, %p102
    %p104 = scmp.ne.s32.totalorder %s90, %s91
    %p105 = scmp.eq.s32.totalorder %s15, 1
    %p106 = por %p104, %p105
    %p108 = scmp.ne.s32.totalorder %s91, %s107
    %p109 = scmp.eq.s32.totalorder %s15, 0
    %p110 = por %p108, %p109
    %p111 = scmp.le.s32.totalorder 1, %s9
    %p112 = scmp.lt.s32.totalorder %s9, 3
    %p113 = pnand %p111, %p112
    %p114 = pneg %p113
    // Predicated region
    $region9: #{autoencoder_forward.10} parent=5 // pred_check
      _
    $region10: #{autoencoder_forward.10} parent=5 // pred_check_branch
      %116 = sbr.rel (%p113) target = $region12
    $region11: #{autoencoder_forward.10} parent=5 // pred_region
      %s117 = ssub.s32 %s9, 1
      // Predicated region
      $region13: #{autoencoder_forward.10} parent=11 // pred_check
        %p118 = pneg %p56
      $region14: #{autoencoder_forward.10} parent=11 // pred_check_branch
        %120 = sbr.rel (%p118) target = $region16
      $region15: #{autoencoder_forward.10} parent=11 // pred_region
        _
      $region16: #{autoencoder_forward.10} parent=11 // pred_fallthru
        _
      // Predicated region
      $region17: #{autoencoder_forward.10} parent=11 // pred_check
        %p121 = pneg %p77
      $region18: #{autoencoder_forward.10} parent=11 // pred_check_branch
        %123 = sbr.rel (%p121) target = $region20
      $region19: #{autoencoder_forward.10} parent=11 // pred_region
        _
      $region20: #{autoencoder_forward.10} parent=11 // pred_fallthru
        _
    $region12: #{autoencoder_forward.10} parent=5 // pred_fallthru
      _
    %p124 = scmp.lt.s32.totalorder %s9, 2
    // Predicated region
    $region21: #{autoencoder_forward.10} parent=5 // pred_check
      %p125 = pneg %p124
    $region22: #{autoencoder_forward.10} parent=5 // pred_check_branch
      %127 = sbr.rel (%p125) target = $region24
    $region23: #{autoencoder_forward.10} parent=5 // pred_region
      // Predicated region
      $region25: #{autoencoder_forward.10} parent=23 // pred_check
        %p128 = pneg %p29
      $region26: #{autoencoder_forward.10} parent=23 // pred_check_branch
        %130 = sbr.rel (%p128) target = $region28
      $region27: #{autoencoder_forward.10} parent=23 // pred_region
        %s131 = smul.u32 8, %s9
        %p132 = scmp.lt.s32.totalorder %s131, 15
        %s133 = scalar_select %p132, %s131, 15
        %s134 = smul.addr %s133, 4
        %s135 = scalar_lea.vmem %s0, %s134
        %s136 = smul.u32 8, %s9
      $region28: #{autoencoder_forward.10} parent=23 // pred_fallthru
        _
    $region24: #{autoencoder_forward.10} parent=5 // pred_fallthru
      _
    %p137 = scmp.le.s32.totalorder 1, %s9
    %p138 = scmp.lt.s32.totalorder %s9, 3
    %p139 = pnand %p137, %p138
    %p140 = pneg %p139
    // Predicated region
    $region29: #{autoencoder_forward.10} parent=5 // pred_check
      _
    $region30: #{autoencoder_forward.10} parent=5 // pred_check_branch
      %142 = sbr.rel (%p139) target = $region32
    $region31: #{autoencoder_forward.10} parent=5 // pred_region
      %s143 = ssub.s32 %s9, 1
      %s144 = smul.u32 8, %s14
      %p145 = scmp.lt.s32.totalorder %s144, 15
      %s146 = scalar_select %p145, %s144, 15
      %s147 = smul.addr %s146, 4
      %s148 = scalar_lea.vmem %s0, %s147
      %p149 = pneg %p35
      %p150 = pneg %p32
      %p151 = pneg %p56
      %p152 = pneg %p53
      %p153 = pneg %p77
      %p154 = pneg %p74
      %p155 = pneg %p103
      %p156 = pneg %p100
      %s157 = smul.u32 8, %s14
      %p158 = scmp.lt.s32.totalorder %s157, 15
      %s159 = scalar_select %p158, %s157, 15
      %s160 = smul.addr %s159, 4
      %s161 = scalar_lea.vmem %s3, %s160
      %s162 = smul.u32 8, %s14
      %p163 = scmp.lt.s32.totalorder %s162, 15
      %s164 = scalar_select %p163, %s162, 15
      %s165 = smul.addr %s164, 4
      %s166 = scalar_lea.vmem %s0, %s165
      %s167 = smul.u32 8, %s14
      %s168 = smul.u32 8, %s14
      %p169 = scmp.lt.s32.totalorder %s168, 15
      %s170 = scalar_select %p169, %s168, 15
      %s171 = smul.addr %s170, 4
      %s172 = scalar_lea.vmem %s3, %s171
      %s173 = smul.u32 8, %s14
      %v175 = vld [vmem:[%s166] sm:$0xf]
      %v176 = vld [vmem:[%s166 + $0x4] sm:$0xf]
      %v177 = vld [vmem:[%s166 + $0x8] sm:$0xf]
      %v178 = vld [vmem:[%s166 + $0xc] sm:$0xf]
      %v179 = vld [vmem:[%s166 + $0x10] sm:$0xf]
      %v180 = vld [vmem:[%s166 + $0x14] sm:$0xf]
      %v181 = vld [vmem:[%s166 + $0x18] sm:$0xf]
      %v182 = vld [vmem:[%s166 + $0x1c] sm:$0xf]
      %v183 = vld [vmem:[%s1] sm:$0xf]
      %v184 = vld [vmem:[%s1 + $0x4] sm:$0xf]
      %v185 = vld [vmem:[%s1 + $0x8] sm:$0xf]
      %v186 = vld [vmem:[%s1 + $0xc] sm:$0xf]
      %v187 = vld [vmem:[%s1 + $0x10] sm:$0xf]
      %v188 = vld [vmem:[%s1 + $0x14] sm:$0xf]
      %v189 = vld [vmem:[%s1 + $0x18] sm:$0xf]
      %v190 = vld [vmem:[%s1 + $0x1c] sm:$0xf]
      %v191 = vld [vmem:[%s1 + $0x20] sm:$0xf]
      %v192 = vld [vmem:[%s1 + $0x24] sm:$0xf]
      %v193 = vld [vmem:[%s1 + $0x28] sm:$0xf]
      %v194 = vld [vmem:[%s1 + $0x2c] sm:$0xf]
      %v195 = vld [vmem:[%s1 + $0x30] sm:$0xf]
      %v196 = vld [vmem:[%s1 + $0x34] sm:$0xf]
      %v197 = vld [vmem:[%s1 + $0x38] sm:$0xf]
      %v198 = vld [vmem:[%s1 + $0x3c] sm:$0xf]
      %v199 = vld [vmem:[%s2] sm:$0x1]
      %v201 = vlaneseq
      %v202 = vshrl.u32 %v201, 7
      %v203 = vsub.s32 0, %v202
      %v204 = vrot.slane %v199, %v203
      %v214 = vunpack.c.l.b16 %v175
      %v215 = vunpack.c.l.b16 %v176
      %v216 = vunpack.c.l.b16 %v177
      %v217 = vunpack.c.l.b16 %v178
      %v218 = vunpack.c.l.b16 %v179
      %v219 = vunpack.c.l.b16 %v180
      %v220 = vunpack.c.l.b16 %v181
      %v221 = vunpack.c.l.b16 %v182
      %v222 = vpack.c.b16 %v215, %v214
      %v223 = vpack.c.b16 %v217, %v216
      %v224 = vpack.c.b16 %v219, %v218
      %v225 = vpack.c.b16 %v221, %v220
      %v246 = vunpack.c.l.b16 %v183
      %v247 = vunpack.c.l.b16 %v184
      %v248 = vunpack.c.l.b16 %v185
      %v249 = vunpack.c.l.b16 %v186
      %v250 = vunpack.c.l.b16 %v187
      %v251 = vunpack.c.l.b16 %v188
      %v252 = vunpack.c.l.b16 %v189
      %v253 = vunpack.c.l.b16 %v190
      %v254 = vunpack.c.l.b16 %v191
      %v255 = vunpack.c.l.b16 %v192
      %v256 = vunpack.c.l.b16 %v193
      %v257 = vunpack.c.l.b16 %v194
      %v258 = vunpack.c.l.b16 %v195
      %v259 = vunpack.c.l.b16 %v196
      %v260 = vunpack.c.l.b16 %v197
      %v261 = vunpack.c.l.b16 %v198
      %v262 = vpack.c.b16 %v247, %v246
      %v263 = vpack.c.b16 %v249, %v248
      %v264 = vpack.c.b16 %v251, %v250
      %v265 = vpack.c.b16 %v253, %v252
      %v266 = vpack.c.b16 %v255, %v254
      %v267 = vpack.c.b16 %v257, %v256
      %v268 = vpack.c.b16 %v259, %v258
      %v269 = vpack.c.b16 %v261, %v260
      %278 = vmatprep.subr.bf16.mxu0 0
      %279 = vmatpush1.bf16.msra.mxu0 %v262
      %280 = vmatprep.subr.bf16.mxu0 0
      %281 = vmatpush1.bf16.msra.mxu0 %v263
      %282 = vmatprep.subr.bf16.mxu0 0
      %283 = vmatpush1.bf16.msra.mxu0 %v264
      %284 = vmatprep.subr.bf16.mxu0 0
      %285 = vmatpush1.bf16.msra.mxu0 %v265
      %286 = vmatprep.subr.bf16.mxu0 0
      %287 = vmatpush1.bf16.msra.mxu0 %v266
      %288 = vmatprep.subr.bf16.mxu0 0
      %289 = vmatpush1.bf16.msra.mxu0 %v267
      %290 = vmatprep.subr.bf16.mxu0 0
      %291 = vmatpush1.bf16.msra.mxu0 %v268
      %292 = vmatprep.subr.bf16.mxu0 0
      %293 = vmatpush1.bf16.msra.mxu0 %v269
      %294 = vmatprep.subr.bf16.mxu0 0
      %295 = vmatpush1.bf16.msra.mxu0 0
      %296 = vmatprep.subr.bf16.mxu0 0
      %297 = vmatpush1.bf16.msra.mxu0 0
      %298 = vmatprep.subr.bf16.mxu0 0
      %299 = vmatpush1.bf16.msra.mxu0 0
      %300 = vmatprep.subr.bf16.mxu0 0
      %301 = vmatpush1.bf16.msra.mxu0 0
      %302 = vmatprep.subr.bf16.mxu0 0
      %303 = vmatpush1.bf16.msra.mxu0 0
      %304 = vmatprep.subr.bf16.mxu0 0
      %305 = vmatpush1.bf16.msra.mxu0 0
      %306 = vmatprep.subr.bf16.mxu0 0
      %307 = vmatpush1.bf16.msra.mxu0 0
      %308 = vmatprep.subr.bf16.mxu0 0
      %309 = vmatpush1.bf16.msra.mxu0 0
      %310 = vmatprep.mubr.bf16.mxu0 0
      %311 = vmatmul.mubr.bf16.gmra.mrb[0].mxu0 %v222
      %v312 = vpop.f32.mrb[0].mxu0
      %v313 = vadd.f32 %v204, %v312
      %v314 = vpop.f32.mrb[0].mxu0
      %v315 = vpop.f32.mrb[0].mxu0
      %v316 = vadd.f32 %v204, %v315
      %v317 = vpop.f32.mrb[0].mxu0
      %318 = vmatprep.mubr.bf16.mxu0 0
      %319 = vmatmul.mubr.bf16.gmra.mrb[0].mxu0 %v223
      %v320 = vpop.f32.mrb[0].mxu0
      %v321 = vadd.f32 %v204, %v320
      %v322 = vpop.f32.mrb[0].mxu0
      %v323 = vpop.f32.mrb[0].mxu0
      %v324 = vadd.f32 %v204, %v323
      %v325 = vpop.f32.mrb[0].mxu0
      %326 = vmatprep.mubr.bf16.mxu0 0
      %327 = vmatmul.mubr.bf16.gmra.mrb[0].mxu0 %v224
      %v328 = vpop.f32.mrb[0].mxu0
      %v329 = vadd.f32 %v204, %v328
      %v330 = vpop.f32.mrb[0].mxu0
      %v331 = vpop.f32.mrb[0].mxu0
      %v332 = vadd.f32 %v204, %v331
      %v333 = vpop.f32.mrb[0].mxu0
      %334 = vmatprep.mubr.bf16.mxu0 0
      %335 = vmatmul.mubr.bf16.gmra.mrb[0].mxu0 %v225
      %v336 = vpop.f32.mrb[0].mxu0
      %v337 = vadd.f32 %v204, %v336
      %v338 = vpop.f32.mrb[0].mxu0
      %v339 = vpop.f32.mrb[0].mxu0
      %v340 = vadd.f32 %v204, %v339
      %v341 = vpop.f32.mrb[0].mxu0
      %342 = vdwg.mxu0
      %vm343 = vcmp.ge.f32.partialorder %v313, 0.0
      %vm344 = vcmp.ge.f32.partialorder %v316, 0.0
      %vm345 = vcmp.ge.f32.partialorder %v321, 0.0
      %vm346 = vcmp.ge.f32.partialorder %v324, 0.0
      %vm347 = vcmp.ge.f32.partialorder %v329, 0.0
      %vm348 = vcmp.ge.f32.partialorder %v332, 0.0
      %vm349 = vcmp.ge.f32.partialorder %v337, 0.0
      %vm350 = vcmp.ge.f32.partialorder %v340, 0.0
      %v351 = vmul.f32 %v313, 0.2
      %v352 = vmul.f32 %v316, 0.2
      %v353 = vmul.f32 %v321, 0.2
      %v354 = vmul.f32 %v324, 0.2
      %v355 = vmul.f32 %v329, 0.2
      %v356 = vmul.f32 %v332, 0.2
      %v357 = vmul.f32 %v337, 0.2
      %v358 = vmul.f32 %v340, 0.2
      %v359 = vsel %vm343, %v313, %v351
      %v360 = vsel %vm344, %v316, %v352
      %v361 = vsel %vm345, %v321, %v353
      %v362 = vsel %vm346, %v324, %v354
      %v363 = vsel %vm347, %v329, %v355
      %v364 = vsel %vm348, %v332, %v356
      %v365 = vsel %vm349, %v337, %v357
      %v366 = vsel %vm350, %v340, %v358
      %v367 = vpack.c.bf16 %v360, %v359
      %v368 = vpack.c.bf16 %v362, %v361
      %v369 = vpack.c.bf16 %v364, %v363
      %v370 = vpack.c.bf16 %v366, %v365
      %v375 = vunpack.c.l.b16 %v367
      %v376 = vunpack.c.h.b16 %v367
      %v377 = vunpack.c.l.b16 %v368
      %v378 = vunpack.c.h.b16 %v368
      %v379 = vunpack.c.l.b16 %v369
      %v380 = vunpack.c.h.b16 %v369
      %v381 = vunpack.c.l.b16 %v370
      %v382 = vunpack.c.h.b16 %v370
      %v383 = vpack.c.b16 %v375, %v375
      %v384 = vpack.c.b16 %v376, %v376
      %v385 = vpack.c.b16 %v377, %v377
      %v386 = vpack.c.b16 %v378, %v378
      %v387 = vpack.c.b16 %v379, %v379
      %v388 = vpack.c.b16 %v380, %v380
      %v389 = vpack.c.b16 %v381, %v381
      %v390 = vpack.c.b16 %v382, %v382
      %vm399 = vcmask 519168
      %400 = vst.msk [vmem:[%s172] sm:$0xf] %vm399, %v383
      %401 = vst.msk [vmem:[%s172 + $0x4] sm:$0xf] %vm399, %v384
      %402 = vst.msk [vmem:[%s172 + $0x8] sm:$0xf] %vm399, %v385
      %403 = vst.msk [vmem:[%s172 + $0xc] sm:$0xf] %vm399, %v386
      %404 = vst.msk [vmem:[%s172 + $0x10] sm:$0xf] %vm399, %v387
      %405 = vst.msk [vmem:[%s172 + $0x14] sm:$0xf] %vm399, %v388
      %406 = vst.msk [vmem:[%s172 + $0x18] sm:$0xf] %vm399, %v389
      %407 = vst.msk [vmem:[%s172 + $0x1c] sm:$0xf] %vm399, %v390
      %s408 = smul.u32 8, %s14
      %p409 = scmp.lt.s32.totalorder %s408, 15
      %s410 = scalar_select %p409, %s408, 15
      %s411 = smul.addr %s410, 4
      %s412 = scalar_lea.vmem %s3, %s411
      // Predicated region
      $region33: #{autoencoder_forward.10} parent=31 // pred_check
        %p413 = pneg %p100
      $region34: #{autoencoder_forward.10} parent=31 // pred_check_branch
        %415 = sbr.rel (%p413) target = $region36
      $region35: #{autoencoder_forward.10} parent=31 // pred_region
        %s416 = smul.u32 8, %s14
      $region36: #{autoencoder_forward.10} parent=31 // pred_fallthru
        _
    $region32: #{autoencoder_forward.10} parent=5 // pred_fallthru
      _
    %p417 = scmp.le.s32.totalorder 2, %s9
    // Predicated region
    $region37: #{autoencoder_forward.10} parent=5 // pred_check
      %p418 = pneg %p417
    $region38: #{autoencoder_forward.10} parent=5 // pred_check_branch
      %420 = sbr.rel (%p418) target = $region40
    $region39: #{autoencoder_forward.10} parent=5 // pred_region
      %s421 = ssub.s32 %s9, 2
      // Predicated region
      $region41: #{autoencoder_forward.10} parent=39 // pred_check
        %p422 = pneg %p106
      $region42: #{autoencoder_forward.10} parent=39 // pred_check_branch
        %424 = sbr.rel (%p422) target = $region44
      $region43: #{autoencoder_forward.10} parent=39 // pred_region
        %s425 = smul.u32 8, %s15
        %p426 = scmp.lt.s32.totalorder %s425, 15
        %s427 = scalar_select %p426, %s425, 15
        %s428 = smul.addr %s427, 4
        %s429 = scalar_lea.vmem %s3, %s428
      $region44: #{autoencoder_forward.10} parent=39 // pred_fallthru
        _
    $region40: #{autoencoder_forward.10} parent=5 // pred_fallthru
      _
  $region6: #{autoencoder_forward.10} parent=0 // loop_footer
    %s13 = sadd.s32 1, %s9
  $region7: #{autoencoder_forward.10} parent=0 // loop_footer_branch
    %8 = sbr.rel target = $region3
  $region8: #{autoencoder_forward.10} parent=0 // loop_exit
    _

// kernel: autoencoder_forward.11
$region0: #{autoencoder_forward.11}
  #allocation0 [shape = 'u32[]', space=smem, size = 0x4, offset = 0x4, fixed_abs, tag = 'smem constant byte address 0x4 - core index']
  #allocation1 [shape = 'u32[144,128]{1,0:T(1,128)}', space=vmem, size = 0x12000, scoped, tag = 'internal scratch']
  %s0 = inlined_call_operand.vmem [shape: bf16[512,64], index: 0, kind: input, shape index: {}]
  %s1 = inlined_call_operand.vmem [shape: bf16[64,4], index: 1, kind: input, shape index: {}]
  %s2 = inlined_call_operand.vmem [shape: f32[1,4], index: 2, kind: input, shape index: {}]
  %s3 = inlined_call_operand.vmem [shape: f32[512,4], index: 3, kind: output, shape index: {}]
  %s4 = sld [smem:[#allocation0]]
  $region45: #{autoencoder_forward.11} parent=0
    _
  %s6 = ssub.s32 1, %s4
  %s7 = scalar_select 0, %s6, %s4
  loop: start=0, step=1, limit=4
  $region2: #{autoencoder_forward.11} parent=0 // loop_pre_header
    _
  $region3: #{autoencoder_forward.11} parent=0 // loop_header
    %s9 = sphi 0, %s13
    %p10 = scmp.ge.s32.totalorder %s9, 4
    %s19 = sphi 0, %s21
    %s22 = sphi 0, %s19
    %s23 = sphi 0, %s22
    %s39 = sphi 0, %s23
    %s43 = sphi 0, %s43
    %s45 = sphi 0, %s43
    %s46 = sphi 0, %s45
    %s60 = sphi 0, %s46
    %s64 = sphi 0, %s64
    %s66 = sphi 0, %s64
    %s67 = sphi 0, %s66
    %s81 = sphi 0, %s67
    %s87 = sphi 0, %s89
    %s90 = sphi 0, %s87
    %s91 = sphi 0, %s90
    %s107 = sphi 0, %s91
  $region4: #{autoencoder_forward.11} parent=0 // loop_header_branch
    %12 = sbr.rel (%p10) target = $region8
  $region5: #{autoencoder_forward.11} parent=0 // loop_body
    %s14 = ssub.s32 %s9, 1
    %s15 = ssub.s32 %s9, 2
    %s16 = sadd.s32 %s9, 1
    %s17 = ssub.s32 %s9, %s16
    %p18 = scmp.eq.s32.totalorder %s17, 0
    %s20 = sadd.s32 %s19, 1
    %s21 = scalar_select %p18, %s19, %s20
    %p24 = pneg %p18
    %p25 = scmp.eq.s32.totalorder %s9, 1
    %p26 = por %p24, %p25
    %p27 = scmp.ne.s32.totalorder %s19, %s22
    %p28 = scmp.eq.s32.totalorder %s9, 0
    %p29 = por %p27, %p28
    %p30 = scmp.ne.s32.totalorder %s19, %s22
    %p31 = scmp.eq.s32.totalorder %s14, 1
    %p32 = por %p30, %p31
    %p33 = scmp.ne.s32.totalorder %s22, %s23
    %p34 = scmp.eq.s32.totalorder %s14, 0
    %p35 = por %p33, %p34
    %p36 = scmp.ne.s32.totalorder %s22, %s23
    %p37 = scmp.eq.s32.totalorder %s15, 1
    %p38 = por %p36, %p37
    %p40 = scmp.ne.s32.totalorder %s23, %s39
    %p41 = scmp.eq.s32.totalorder %s15, 0
    %p42 = por %p40, %p41
    %s44 = sadd.s32 %s43, 1
    %p47 = scmp.eq.s32.totalorder %s9, 1
    %p48 = scmp.ne.s32.totalorder %s43, %s45
    %p49 = scmp.eq.s32.totalorder %s9, 0
    %p50 = por %p48, %p49
    %p51 = scmp.ne.s32.totalorder %s43, %s45
    %p52 = scmp.eq.s32.totalorder %s14, 1
    %p53 = por %p51, %p52
    %p54 = scmp.ne.s32.totalorder %s45, %s46
    %p55 = scmp.eq.s32.totalorder %s14, 0
    %p56 = por %p54, %p55
    %p57 = scmp.ne.s32.totalorder %s45, %s46
    %p58 = scmp.eq.s32.totalorder %s15, 1
    %p59 = por %p57, %p58
    %p61 = scmp.ne.s32.totalorder %s46, %s60
    %p62 = scmp.eq.s32.totalorder %s15, 0
    %p63 = por %p61, %p62
    %s65 = sadd.s32 %s64, 1
    %p68 = scmp.eq.s32.totalorder %s9, 1
    %p69 = scmp.ne.s32.totalorder %s64, %s66
    %p70 = scmp.eq.s32.totalorder %s9, 0
    %p71 = por %p69, %p70
    %p72 = scmp.ne.s32.totalorder %s64, %s66
    %p73 = scmp.eq.s32.totalorder %s14, 1
    %p74 = por %p72, %p73
    %p75 = scmp.ne.s32.totalorder %s66, %s67
    %p76 = scmp.eq.s32.totalorder %s14, 0
    %p77 = por %p75, %p76
    %p78 = scmp.ne.s32.totalorder %s66, %s67
    %p79 = scmp.eq.s32.totalorder %s15, 1
    %p80 = por %p78, %p79
    %p82 = scmp.ne.s32.totalorder %s67, %s81
    %p83 = scmp.eq.s32.totalorder %s15, 0
    %p84 = por %p82, %p83
    %s85 = ssub.s32 %s9, %s16
    %p86 = scmp.eq.s32.totalorder %s85, 0
    %s88 = sadd.s32 %s87, 1
    %s89 = scalar_select %p86, %s87, %s88
    %p92 = pneg %p86
    %p93 = scmp.eq.s32.totalorder %s9, 1
    %p94 = por %p92, %p93
    %p95 = scmp.ne.s32.totalorder %s87, %s90
    %p96 = scmp.eq.s32.totalorder %s9, 0
    %p97 = por %p95, %p96
    %p98 = scmp.ne.s32.totalorder %s87, %s90
    %p99 = scmp.eq.s32.totalorder %s14, 1
    %p100 = por %p98, %p99
    %p101 = scmp.ne.s32.totalorder %s90, %s91
    %p102 = scmp.eq.s32.totalorder %s14, 0
    %p103 = por %p101, %p102
    %p104 = scmp.ne.s32.totalorder %s90, %s91
    %p105 = scmp.eq.s32.totalorder %s15, 1
    %p106 = por %p104, %p105
    %p108 = scmp.ne.s32.totalorder %s91, %s107
    %p109 = scmp.eq.s32.totalorder %s15, 0
    %p110 = por %p108, %p109
    %p111 = scmp.le.s32.totalorder 1, %s9
    %p112 = scmp.lt.s32.totalorder %s9, 3
    %p113 = pnand %p111, %p112
    %p114 = pneg %p113
    // Predicated region
    $region9: #{autoencoder_forward.11} parent=5 // pred_check
      _
    $region10: #{autoencoder_forward.11} parent=5 // pred_check_branch
      %116 = sbr.rel (%p113) target = $region12
    $region11: #{autoencoder_forward.11} parent=5 // pred_region
      %s117 = ssub.s32 %s9, 1
      // Predicated region
      $region13: #{autoencoder_forward.11} parent=11 // pred_check
        %p118 = pneg %p56
      $region14: #{autoencoder_forward.11} parent=11 // pred_check_branch
        %120 = sbr.rel (%p118) target = $region16
      $region15: #{autoencoder_forward.11} parent=11 // pred_region
        _
      $region16: #{autoencoder_forward.11} parent=11 // pred_fallthru
        _
      // Predicated region
      $region17: #{autoencoder_forward.11} parent=11 // pred_check
        %p121 = pneg %p77
      $region18: #{autoencoder_forward.11} parent=11 // pred_check_branch
        %123 = sbr.rel (%p121) target = $region20
      $region19: #{autoencoder_forward.11} parent=11 // pred_region
        _
      $region20: #{autoencoder_forward.11} parent=11 // pred_fallthru
        _
    $region12: #{autoencoder_forward.11} parent=5 // pred_fallthru
      _
    %p124 = scmp.lt.s32.totalorder %s9, 2
    // Predicated region
    $region21: #{autoencoder_forward.11} parent=5 // pred_check
      %p125 = pneg %p124
    $region22: #{autoencoder_forward.11} parent=5 // pred_check_branch
      %127 = sbr.rel (%p125) target = $region24
    $region23: #{autoencoder_forward.11} parent=5 // pred_region
      // Predicated region
      $region25: #{autoencoder_forward.11} parent=23 // pred_check
        %p128 = pneg %p29
      $region26: #{autoencoder_forward.11} parent=23 // pred_check_branch
        %130 = sbr.rel (%p128) target = $region28
      $region27: #{autoencoder_forward.11} parent=23 // pred_region
        %s131 = smul.u32 32, %s9
        %p132 = scmp.lt.s32.totalorder %s131, 63
        %s133 = scalar_select %p132, %s131, 63
        %s134 = smul.addr %s133, 4
        %s135 = scalar_lea.vmem %s0, %s134
        %s136 = smul.u32 32, %s9
      $region28: #{autoencoder_forward.11} parent=23 // pred_fallthru
        _
    $region24: #{autoencoder_forward.11} parent=5 // pred_fallthru
      _
    %p137 = scmp.le.s32.totalorder 1, %s9
    %p138 = scmp.lt.s32.totalorder %s9, 3
    %p139 = pnand %p137, %p138
    %p140 = pneg %p139
    // Predicated region
    $region29: #{autoencoder_forward.11} parent=5 // pred_check
      _
    $region30: #{autoencoder_forward.11} parent=5 // pred_check_branch
      %142 = sbr.rel (%p139) target = $region32
    $region31: #{autoencoder_forward.11} parent=5 // pred_region
      %s143 = ssub.s32 %s9, 1
      %s144 = smul.u32 32, %s14
      %p145 = scmp.lt.s32.totalorder %s144, 63
      %s146 = scalar_select %p145, %s144, 63
      %s147 = smul.addr %s146, 4
      %s148 = scalar_lea.vmem %s0, %s147
      %p149 = pneg %p35
      %p150 = pneg %p32
      %p151 = pneg %p56
      %p152 = pneg %p53
      %p153 = pneg %p77
      %p154 = pneg %p74
      %p155 = pneg %p103
      %p156 = pneg %p100
      %s157 = smul.u32 32, %s14
      %p158 = scmp.lt.s32.totalorder %s157, 63
      %s159 = scalar_select %p158, %s157, 63
      %s160 = smul.addr %s159, 8
      %s161 = scalar_lea.vmem %s3, %s160
      %s162 = smul.u32 32, %s14
      %p163 = scmp.lt.s32.totalorder %s162, 63
      %s164 = scalar_select %p163, %s162, 63
      %s165 = smul.addr %s164, 4
      %s166 = scalar_lea.vmem %s0, %s165
      %s167 = smul.u32 32, %s14
      %s168 = smul.u32 32, %s14
      %p169 = scmp.lt.s32.totalorder %s168, 63
      %s170 = scalar_select %p169, %s168, 63
      %s171 = smul.addr %s170, 8
      %s172 = scalar_lea.vmem %s3, %s171
      %s173 = smul.u32 32, %s14
      %v175 = vld [vmem:[%s166] sm:$0xf]
      %v176 = vld [vmem:[%s166 + $0x4] sm:$0xf]
      %v177 = vld [vmem:[%s166 + $0x8] sm:$0xf]
      %v178 = vld [vmem:[%s166 + $0xc] sm:$0xf]
      %v179 = vld [vmem:[%s166 + $0x10] sm:$0xf]
      %v180 = vld [vmem:[%s166 + $0x14] sm:$0xf]
      %v181 = vld [vmem:[%s166 + $0x18] sm:$0xf]
      %v182 = vld [vmem:[%s166 + $0x1c] sm:$0xf]
      %v183 = vld [vmem:[%s166 + $0x20] sm:$0xf]
      %v184 = vld [vmem:[%s166 + $0x24] sm:$0xf]
      %v185 = vld [vmem:[%s166 + $0x28] sm:$0xf]
      %v186 = vld [vmem:[%s166 + $0x2c] sm:$0xf]
      %v187 = vld [vmem:[%s166 + $0x30] sm:$0xf]
      %v188 = vld [vmem:[%s166 + $0x34] sm:$0xf]
      %v189 = vld [vmem:[%s166 + $0x38] sm:$0xf]
      %v190 = vld [vmem:[%s166 + $0x3c] sm:$0xf]
      %v191 = vld [vmem:[%s166 + $0x40] sm:$0xf]
      %v192 = vld [vmem:[%s166 + $0x44] sm:$0xf]
      %v193 = vld [vmem:[%s166 + $0x48] sm:$0xf]
      %v194 = vld [vmem:[%s166 + $0x4c] sm:$0xf]
      %v195 = vld [vmem:[%s166 + $0x50] sm:$0xf]
      %v196 = vld [vmem:[%s166 + $0x54] sm:$0xf]
      %v197 = vld [vmem:[%s166 + $0x58] sm:$0xf]
      %v198 = vld [vmem:[%s166 + $0x5c] sm:$0xf]
      %v199 = vld [vmem:[%s166 + $0x60] sm:$0xf]
      %v200 = vld [vmem:[%s166 + $0x64] sm:$0xf]
      %v201 = vld [vmem:[%s166 + $0x68] sm:$0xf]
      %v202 = vld [vmem:[%s166 + $0x6c] sm:$0xf]
      %v203 = vld [vmem:[%s166 + $0x70] sm:$0xf]
      %v204 = vld [vmem:[%s166 + $0x74] sm:$0xf]
      %v205 = vld [vmem:[%s166 + $0x78] sm:$0xf]
      %v206 = vld [vmem:[%s166 + $0x7c] sm:$0xf]
      %v207 = vld [vmem:[%s1] sm:$0xf]
      %v208 = vld [vmem:[%s1 + $0x4] sm:$0xf]
      %v209 = vld [vmem:[%s1 + $0x8] sm:$0xf]
      %v210 = vld [vmem:[%s1 + $0xc] sm:$0xf]
      %v211 = vld [vmem:[%s1 + $0x10] sm:$0xf]
      %v212 = vld [vmem:[%s1 + $0x14] sm:$0xf]
      %v213 = vld [vmem:[%s1 + $0x18] sm:$0xf]
      %v214 = vld [vmem:[%s1 + $0x1c] sm:$0xf]
      %v215 = vld [vmem:[%s2] sm:$0x1]
      %v217 = vlaneseq
      %v218 = vshrl.u32 %v217, 7
      %v219 = vsub.s32 0, %v218
      %v220 = vrot.slane %v215, %v219
      %v254 = vunpack.c.l.b16 %v175
      %v255 = vunpack.c.l.b16 %v176
      %v256 = vunpack.c.l.b16 %v177
      %v257 = vunpack.c.l.b16 %v178
      %v258 = vunpack.c.l.b16 %v179
      %v259 = vunpack.c.l.b16 %v180
      %v260 = vunpack.c.l.b16 %v181
      %v261 = vunpack.c.l.b16 %v182
      %v262 = vunpack.c.l.b16 %v183
      %v263 = vunpack.c.l.b16 %v184
      %v264 = vunpack.c.l.b16 %v185
      %v265 = vunpack.c.l.b16 %v186
      %v266 = vunpack.c.l.b16 %v187
      %v267 = vunpack.c.l.b16 %v188
      %v268 = vunpack.c.l.b16 %v189
      %v269 = vunpack.c.l.b16 %v190
      %v270 = vunpack.c.l.b16 %v191
      %v271 = vunpack.c.l.b16 %v192
      %v272 = vunpack.c.l.b16 %v193
      %v273 = vunpack.c.l.b16 %v194
      %v274 = vunpack.c.l.b16 %v195
      %v275 = vunpack.c.l.b16 %v196
      %v276 = vunpack.c.l.b16 %v197
      %v277 = vunpack.c.l.b16 %v198
      %v278 = vunpack.c.l.b16 %v199
      %v279 = vunpack.c.l.b16 %v200
      %v280 = vunpack.c.l.b16 %v201
      %v281 = vunpack.c.l.b16 %v202
      %v282 = vunpack.c.l.b16 %v203
      %v283 = vunpack.c.l.b16 %v204
      %v284 = vunpack.c.l.b16 %v205
      %v285 = vunpack.c.l.b16 %v206
      %v286 = vpack.c.b16 %v255, %v254
      %v287 = vpack.c.b16 %v257, %v256
      %v288 = vpack.c.b16 %v259, %v258
      %v289 = vpack.c.b16 %v261, %v260
      %v290 = vpack.c.b16 %v263, %v262
      %v291 = vpack.c.b16 %v265, %v264
      %v292 = vpack.c.b16 %v267, %v266
      %v293 = vpack.c.b16 %v269, %v268
      %v294 = vpack.c.b16 %v271, %v270
      %v295 = vpack.c.b16 %v273, %v272
      %v296 = vpack.c.b16 %v275, %v274
      %v297 = vpack.c.b16 %v277, %v276
      %v298 = vpack.c.b16 %v279, %v278
      %v299 = vpack.c.b16 %v281, %v280
      %v300 = vpack.c.b16 %v283, %v282
      %v301 = vpack.c.b16 %v285, %v284
      %v310 = vunpack.c.l.b16 %v207
      %v311 = vunpack.c.l.b16 %v208
      %v312 = vunpack.c.l.b16 %v209
      %v313 = vunpack.c.l.b16 %v210
      %v314 = vunpack.c.l.b16 %v211
      %v315 = vunpack.c.l.b16 %v212
      %v316 = vunpack.c.l.b16 %v213
      %v317 = vunpack.c.l.b16 %v214
      %v318 = vpack.c.b16 %v311, %v310
      %v319 = vpack.c.b16 %v313, %v312
      %v320 = vpack.c.b16 %v315, %v314
      %v321 = vpack.c.b16 %v317, %v316
      %vm326 = vcmask 523264
      %v328 = vsel %vm326, %v286, 0
      %v331 = vsel %vm326, %v287, 0
      %v334 = vsel %vm326, %v288, 0
      %v337 = vsel %vm326, %v289, 0
      %v340 = vsel %vm326, %v290, 0
      %v343 = vsel %vm326, %v291, 0
      %v346 = vsel %vm326, %v292, 0
      %v349 = vsel %vm326, %v293, 0
      %v352 = vsel %vm326, %v294, 0
      %v355 = vsel %vm326, %v295, 0
      %v358 = vsel %vm326, %v296, 0
      %v361 = vsel %vm326, %v297, 0
      %v364 = vsel %vm326, %v298, 0
      %v367 = vsel %vm326, %v299, 0
      %v370 = vsel %vm326, %v300, 0
      %v373 = vsel %vm326, %v301, 0
      %375 = vmatprep.subr.bf16.mxu0 0
      %376 = vmatpush1.bf16.msra.mxu0 %v318
      %377 = vmatprep.subr.bf16.mxu0 0
      %378 = vmatpush1.bf16.msra.mxu0 %v319
      %379 = vmatprep.subr.bf16.mxu0 0
      %380 = vmatpush1.bf16.msra.mxu0 %v320
      %381 = vmatprep.subr.bf16.mxu0 0
      %382 = vmatpush1.bf16.msra.mxu0 %v321
      %383 = vmatprep.subr.bf16.mxu0 0
      %384 = vmatpush1.bf16.msra.mxu0 0
      %385 = vmatprep.subr.bf16.mxu0 0
      %386 = vmatpush1.bf16.msra.mxu0 0
      %387 = vmatprep.subr.bf16.mxu0 0
      %388 = vmatpush1.bf16.msra.mxu0 0
      %389 = vmatprep.subr.bf16.mxu0 0
      %390 = vmatpush1.bf16.msra.mxu0 0
      %391 = vmatprep.subr.bf16.mxu0 0
      %392 = vmatpush1.bf16.msra.mxu0 0
      %393 = vmatprep.subr.bf16.mxu0 0
      %394 = vmatpush1.bf16.msra.mxu0 0
      %395 = vmatprep.subr.bf16.mxu0 0
      %396 = vmatpush1.bf16.msra.mxu0 0
      %397 = vmatprep.subr.bf16.mxu0 0
      %398 = vmatpush1.bf16.msra.mxu0 0
      %399 = vmatprep.subr.bf16.mxu0 0
      %400 = vmatpush1.bf16.msra.mxu0 0
      %401 = vmatprep.subr.bf16.mxu0 0
      %402 = vmatpush1.bf16.msra.mxu0 0
      %403 = vmatprep.subr.bf16.mxu0 0
      %404 = vmatpush1.bf16.msra.mxu0 0
      %405 = vmatprep.subr.bf16.mxu0 0
      %406 = vmatpush1.bf16.msra.mxu0 0
      %407 = vmatprep.mubr.bf16.mxu0 0
      %408 = vmatmul.mubr.bf16.gmra.mrb[0].mxu0 %v328
      %v409 = vpop.f32.mrb[0].mxu0
      %v410 = vadd.f32 %v220, %v409
      %v411 = vpop.f32.mrb[0].mxu0
      %v412 = vpop.f32.mrb[0].mxu0
      %v413 = vadd.f32 %v220, %v412
      %v414 = vpop.f32.mrb[0].mxu0
      %415 = vmatprep.mubr.bf16.mxu0 0
      %416 = vmatmul.mubr.bf16.gmra.mrb[0].mxu0 %v331
      %v417 = vpop.f32.mrb[0].mxu0
      %v418 = vadd.f32 %v220, %v417
      %v419 = vpop.f32.mrb[0].mxu0
      %v420 = vpop.f32.mrb[0].mxu0
      %v421 = vadd.f32 %v220, %v420
      %v422 = vpop.f32.mrb[0].mxu0
      %423 = vmatprep.mubr.bf16.mxu0 0
      %424 = vmatmul.mubr.bf16.gmra.mrb[0].mxu0 %v334
      %v425 = vpop.f32.mrb[0].mxu0
      %v426 = vadd.f32 %v220, %v425
      %v427 = vpop.f32.mrb[0].mxu0
      %v428 = vpop.f32.mrb[0].mxu0
      %v429 = vadd.f32 %v220, %v428
      %v430 = vpop.f32.mrb[0].mxu0
      %431 = vmatprep.mubr.bf16.mxu0 0
      %432 = vmatmul.mubr.bf16.gmra.mrb[0].mxu0 %v337
      %v433 = vpop.f32.mrb[0].mxu0
      %v434 = vadd.f32 %v220, %v433
      %v435 = vpop.f32.mrb[0].mxu0
      %v436 = vpop.f32.mrb[0].mxu0
      %v437 = vadd.f32 %v220, %v436
      %v438 = vpop.f32.mrb[0].mxu0
      %439 = vmatprep.mubr.bf16.mxu0 0
      %440 = vmatmul.mubr.bf16.gmra.mrb[0].mxu0 %v340
      %v441 = vpop.f32.mrb[0].mxu0
      %v442 = vadd.f32 %v220, %v441
      %v443 = vpop.f32.mrb[0].mxu0
      %v444 = vpop.f32.mrb[0].mxu0
      %v445 = vadd.f32 %v220, %v444
      %v446 = vpop.f32.mrb[0].mxu0
      %447 = vmatprep.mubr.bf16.mxu0 0
      %448 = vmatmul.mubr.bf16.gmra.mrb[0].mxu0 %v343
      %v449 = vpop.f32.mrb[0].mxu0
      %v450 = vadd.f32 %v220, %v449
      %v451 = vpop.f32.mrb[0].mxu0
      %v452 = vpop.f32.mrb[0].mxu0
      %v453 = vadd.f32 %v220, %v452
      %v454 = vpop.f32.mrb[0].mxu0
      %455 = vmatprep.mubr.bf16.mxu0 0
      %456 = vmatmul.mubr.bf16.gmra.mrb[0].mxu0 %v346
      %v457 = vpop.f32.mrb[0].mxu0
      %v458 = vadd.f32 %v220, %v457
      %v459 = vpop.f32.mrb[0].mxu0
      %v460 = vpop.f32.mrb[0].mxu0
      %v461 = vadd.f32 %v220, %v460
      %v462 = vpop.f32.mrb[0].mxu0
      %463 = vmatprep.mubr.bf16.mxu0 0
      %464 = vmatmul.mubr.bf16.gmra.mrb[0].mxu0 %v349
      %v465 = vpop.f32.mrb[0].mxu0
      %v466 = vadd.f32 %v220, %v465
      %v467 = vpop.f32.mrb[0].mxu0
      %v468 = vpop.f32.mrb[0].mxu0
      %v469 = vadd.f32 %v220, %v468
      %v470 = vpop.f32.mrb[0].mxu0
      %471 = vmatprep.mubr.bf16.mxu0 0
      %472 = vmatmul.mubr.bf16.gmra.mrb[0].mxu0 %v352
      %v473 = vpop.f32.mrb[0].mxu0
      %v474 = vadd.f32 %v220, %v473
      %v475 = vpop.f32.mrb[0].mxu0
      %v476 = vpop.f32.mrb[0].mxu0
      %v477 = vadd.f32 %v220, %v476
      %v478 = vpop.f32.mrb[0].mxu0
      %479 = vmatprep.mubr.bf16.mxu0 0
      %480 = vmatmul.mubr.bf16.gmra.mrb[0].mxu0 %v355
      %v481 = vpop.f32.mrb[0].mxu0
      %v482 = vadd.f32 %v220, %v481
      %v483 = vpop.f32.mrb[0].mxu0
      %v484 = vpop.f32.mrb[0].mxu0
      %v485 = vadd.f32 %v220, %v484
      %v486 = vpop.f32.mrb[0].mxu0
      %487 = vmatprep.mubr.bf16.mxu0 0
      %488 = vmatmul.mubr.bf16.gmra.mrb[0].mxu0 %v358
      %v489 = vpop.f32.mrb[0].mxu0
      %v490 = vadd.f32 %v220, %v489
      %v491 = vpop.f32.mrb[0].mxu0
      %v492 = vpop.f32.mrb[0].mxu0
      %v493 = vadd.f32 %v220, %v492
      %v494 = vpop.f32.mrb[0].mxu0
      %495 = vmatprep.mubr.bf16.mxu0 0
      %496 = vmatmul.mubr.bf16.gmra.mrb[0].mxu0 %v361
      %v497 = vpop.f32.mrb[0].mxu0
      %v498 = vadd.f32 %v220, %v497
      %v499 = vpop.f32.mrb[0].mxu0
      %v500 = vpop.f32.mrb[0].mxu0
      %v501 = vadd.f32 %v220, %v500
      %v502 = vpop.f32.mrb[0].mxu0
      %503 = vmatprep.mubr.bf16.mxu0 0
      %504 = vmatmul.mubr.bf16.gmra.mrb[0].mxu0 %v364
      %v505 = vpop.f32.mrb[0].mxu0
      %v506 = vadd.f32 %v220, %v505
      %v507 = vpop.f32.mrb[0].mxu0
      %v508 = vpop.f32.mrb[0].mxu0
      %v509 = vadd.f32 %v220, %v508
      %v510 = vpop.f32.mrb[0].mxu0
      %511 = vmatprep.mubr.bf16.mxu0 0
      %512 = vmatmul.mubr.bf16.gmra.mrb[0].mxu0 %v367
      %v513 = vpop.f32.mrb[0].mxu0
      %v514 = vadd.f32 %v220, %v513
      %v515 = vpop.f32.mrb[0].mxu0
      %v516 = vpop.f32.mrb[0].mxu0
      %v517 = vadd.f32 %v220, %v516
      %v518 = vpop.f32.mrb[0].mxu0
      %519 = vmatprep.mubr.bf16.mxu0 0
      %520 = vmatmul.mubr.bf16.gmra.mrb[0].mxu0 %v370
      %v521 = vpop.f32.mrb[0].mxu0
      %v522 = vadd.f32 %v220, %v521
      %v523 = vpop.f32.mrb[0].mxu0
      %v524 = vpop.f32.mrb[0].mxu0
      %v525 = vadd.f32 %v220, %v524
      %v526 = vpop.f32.mrb[0].mxu0
      %527 = vmatprep.mubr.bf16.mxu0 0
      %528 = vmatmul.mubr.bf16.gmra.mrb[0].mxu0 %v373
      %v529 = vpop.f32.mrb[0].mxu0
      %v530 = vadd.f32 %v220, %v529
      %v531 = vpop.f32.mrb[0].mxu0
      %v532 = vpop.f32.mrb[0].mxu0
      %v533 = vadd.f32 %v220, %v532
      %v534 = vpop.f32.mrb[0].mxu0
      %535 = vdwg.mxu0
      %v536 = vmax.f32 %v410, -30.0
      %v537 = vmax.f32 %v413, -30.0
      %v538 = vmax.f32 %v418, -30.0
      %v539 = vmax.f32 %v421, -30.0
      %v540 = vmax.f32 %v426, -30.0
      %v541 = vmax.f32 %v429, -30.0
      %v542 = vmax.f32 %v434, -30.0
      %v543 = vmax.f32 %v437, -30.0
      %v544 = vmax.f32 %v442, -30.0
      %v545 = vmax.f32 %v445, -30.0
      %v546 = vmax.f32 %v450, -30.0
      %v547 = vmax.f32 %v453, -30.0
      %v548 = vmax.f32 %v458, -30.0
      %v549 = vmax.f32 %v461, -30.0
      %v550 = vmax.f32 %v466, -30.0
      %v551 = vmax.f32 %v469, -30.0
      %v552 = vmax.f32 %v474, -30.0
      %v553 = vmax.f32 %v477, -30.0
      %v554 = vmax.f32 %v482, -30.0
      %v555 = vmax.f32 %v485, -30.0
      %v556 = vmax.f32 %v490, -30.0
      %v557 = vmax.f32 %v493, -30.0
      %v558 = vmax.f32 %v498, -30.0
      %v559 = vmax.f32 %v501, -30.0
      %v560 = vmax.f32 %v506, -30.0
      %v561 = vmax.f32 %v509, -30.0
      %v562 = vmax.f32 %v514, -30.0
      %v563 = vmax.f32 %v517, -30.0
      %v564 = vmax.f32 %v522, -30.0
      %v565 = vmax.f32 %v525, -30.0
      %v566 = vmax.f32 %v530, -30.0
      %v567 = vmax.f32 %v533, -30.0
      %v568 = vmin.f32 %v536, 30.0
      %v569 = vmin.f32 %v537, 30.0
      %v570 = vmin.f32 %v538, 30.0
      %v571 = vmin.f32 %v539, 30.0
      %v572 = vmin.f32 %v540, 30.0
      %v573 = vmin.f32 %v541, 30.0
      %v574 = vmin.f32 %v542, 30.0
      %v575 = vmin.f32 %v543, 30.0
      %v576 = vmin.f32 %v544, 30.0
      %v577 = vmin.f32 %v545, 30.0
      %v578 = vmin.f32 %v546, 30.0
      %v579 = vmin.f32 %v547, 30.0
      %v580 = vmin.f32 %v548, 30.0
      %v581 = vmin.f32 %v549, 30.0
      %v582 = vmin.f32 %v550, 30.0
      %v583 = vmin.f32 %v551, 30.0
      %v584 = vmin.f32 %v552, 30.0
      %v585 = vmin.f32 %v553, 30.0
      %v586 = vmin.f32 %v554, 30.0
      %v587 = vmin.f32 %v555, 30.0
      %v588 = vmin.f32 %v556, 30.0
      %v589 = vmin.f32 %v557, 30.0
      %v590 = vmin.f32 %v558, 30.0
      %v591 = vmin.f32 %v559, 30.0
      %v592 = vmin.f32 %v560, 30.0
      %v593 = vmin.f32 %v561, 30.0
      %v594 = vmin.f32 %v562, 30.0
      %v595 = vmin.f32 %v563, 30.0
      %v596 = vmin.f32 %v564, 30.0
      %v597 = vmin.f32 %v565, 30.0
      %v598 = vmin.f32 %v566, 30.0
      %v599 = vmin.f32 %v567, 30.0
      %v600 = vsub.f32 0.0, %v568
      %v601 = vsub.f32 0.0, %v569
      %v602 = vsub.f32 0.0, %v570
      %v603 = vsub.f32 0.0, %v571
      %v604 = vsub.f32 0.0, %v572
      %v605 = vsub.f32 0.0, %v573
      %v606 = vsub.f32 0.0, %v574
      %v607 = vsub.f32 0.0, %v575
      %v608 = vsub.f32 0.0, %v576
      %v609 = vsub.f32 0.0, %v577
      %v610 = vsub.f32 0.0, %v578
      %v611 = vsub.f32 0.0, %v579
      %v612 = vsub.f32 0.0, %v580
      %v613 = vsub.f32 0.0, %v581
      %v614 = vsub.f32 0.0, %v582
      %v615 = vsub.f32 0.0, %v583
      %v616 = vsub.f32 0.0, %v584
      %v617 = vsub.f32 0.0, %v585
      %v618 = vsub.f32 0.0, %v586
      %v619 = vsub.f32 0.0, %v587
      %v620 = vsub.f32 0.0, %v588
      %v621 = vsub.f32 0.0, %v589
      %v622 = vsub.f32 0.0, %v590
      %v623 = vsub.f32 0.0, %v591
      %v624 = vsub.f32 0.0, %v592
      %v625 = vsub.f32 0.0, %v593
      %v626 = vsub.f32 0.0, %v594
      %v627 = vsub.f32 0.0, %v595
      %v628 = vsub.f32 0.0, %v596
      %v629 = vsub.f32 0.0, %v597
      %v630 = vsub.f32 0.0, %v598
      %v631 = vsub.f32 0.0, %v599
      %v632 = vmul.f32 %v600, 1.442695
      %v633 = vpow.pop %v632
      %v634 = vmul.f32 %v601, 1.442695
      %v635 = vpow.pop %v634
      %v636 = vmul.f32 %v602, 1.442695
      %v637 = vpow.pop %v636
      %v638 = vmul.f32 %v603, 1.442695
      %v639 = vpow.pop %v638
      %v640 = vmul.f32 %v604, 1.442695
      %v641 = vpow.pop %v640
      %v642 = vmul.f32 %v605, 1.442695
      %v643 = vpow.pop %v642
      %v644 = vmul.f32 %v606, 1.442695
      %v645 = vpow.pop %v644
      %v646 = vmul.f32 %v607, 1.442695
      %v647 = vpow.pop %v646
      %v648 = vmul.f32 %v608, 1.442695
      %v649 = vpow.pop %v648
      %v650 = vmul.f32 %v609, 1.442695
      %v651 = vpow.pop %v650
      %v652 = vmul.f32 %v610, 1.442695
      %v653 = vpow.pop %v652
      %v654 = vmul.f32 %v611, 1.442695
      %v655 = vpow.pop %v654
      %v656 = vmul.f32 %v612, 1.442695
      %v657 = vpow.pop %v656
      %v658 = vmul.f32 %v613, 1.442695
      %v659 = vpow.pop %v658
      %v660 = vmul.f32 %v614, 1.442695
      %v661 = vpow.pop %v660
      %v662 = vmul.f32 %v615, 1.442695
      %v663 = vpow.pop %v662
      %v664 = vmul.f32 %v616, 1.442695
      %v665 = vpow.pop %v664
      %v666 = vmul.f32 %v617, 1.442695
      %v667 = vpow.pop %v666
      %v668 = vmul.f32 %v618, 1.442695
      %v669 = vpow.pop %v668
      %v670 = vmul.f32 %v619, 1.442695
      %v671 = vpow.pop %v670
      %v672 = vmul.f32 %v620, 1.442695
      %v673 = vpow.pop %v672
      %v674 = vmul.f32 %v621, 1.442695
      %v675 = vpow.pop %v674
      %v676 = vmul.f32 %v622, 1.442695
      %v677 = vpow.pop %v676
      %v678 = vmul.f32 %v623, 1.442695
      %v679 = vpow.pop %v678
      %v680 = vmul.f32 %v624, 1.442695
      %v681 = vpow.pop %v680
      %v682 = vmul.f32 %v625, 1.442695
      %v683 = vpow.pop %v682
      %v684 = vmul.f32 %v626, 1.442695
      %v685 = vpow.pop %v684
      %v686 = vmul.f32 %v627, 1.442695
      %v687 = vpow.pop %v686
      %v688 = vmul.f32 %v628, 1.442695
      %v689 = vpow.pop %v688
      %v690 = vmul.f32 %v629, 1.442695
      %v691 = vpow.pop %v690
      %v692 = vmul.f32 %v630, 1.442695
      %v693 = vpow.pop %v692
      %v694 = vmul.f32 %v631, 1.442695
      %v695 = vpow.pop %v694
      %v696 = vadd.f32 %v633, 1.0
      %v697 = vadd.f32 %v635, 1.0
      %v698 = vadd.f32 %v637, 1.0
      %v699 = vadd.f32 %v639, 1.0
      %v700 = vadd.f32 %v641, 1.0
      %v701 = vadd.f32 %v643, 1.0
      %v702 = vadd.f32 %v645, 1.0
      %v703 = vadd.f32 %v647, 1.0
      %v704 = vadd.f32 %v649, 1.0
      %v705 = vadd.f32 %v651, 1.0
      %v706 = vadd.f32 %v653, 1.0
      %v707 = vadd.f32 %v655, 1.0
      %v708 = vadd.f32 %v657, 1.0
      %v709 = vadd.f32 %v659, 1.0
      %v710 = vadd.f32 %v661, 1.0
      %v711 = vadd.f32 %v663, 1.0
      %v712 = vadd.f32 %v665, 1.0
      %v713 = vadd.f32 %v667, 1.0
      %v714 = vadd.f32 %v669, 1.0
      %v715 = vadd.f32 %v671, 1.0
      %v716 = vadd.f32 %v673, 1.0
      %v717 = vadd.f32 %v675, 1.0
      %v718 = vadd.f32 %v677, 1.0
      %v719 = vadd.f32 %v679, 1.0
      %v720 = vadd.f32 %v681, 1.0
      %v721 = vadd.f32 %v683, 1.0
      %v722 = vadd.f32 %v685, 1.0
      %v723 = vadd.f32 %v687, 1.0
      %v724 = vadd.f32 %v689, 1.0
      %v725 = vadd.f32 %v691, 1.0
      %v726 = vadd.f32 %v693, 1.0
      %v727 = vadd.f32 %v695, 1.0
      %v728 = vrcp.pop %v696
      %v729 = vrcp.pop %v697
      %v730 = vrcp.pop %v698
      %v731 = vrcp.pop %v699
      %v732 = vrcp.pop %v700
      %v733 = vrcp.pop %v701
      %v734 = vrcp.pop %v702
      %v735 = vrcp.pop %v703
      %v736 = vrcp.pop %v704
      %v737 = vrcp.pop %v705
      %v738 = vrcp.pop %v706
      %v739 = vrcp.pop %v707
      %v740 = vrcp.pop %v708
      %v741 = vrcp.pop %v709
      %v742 = vrcp.pop %v710
      %v743 = vrcp.pop %v711
      %v744 = vrcp.pop %v712
      %v745 = vrcp.pop %v713
      %v746 = vrcp.pop %v714
      %v747 = vrcp.pop %v715
      %v748 = vrcp.pop %v716
      %v749 = vrcp.pop %v717
      %v750 = vrcp.pop %v718
      %v751 = vrcp.pop %v719
      %v752 = vrcp.pop %v720
      %v753 = vrcp.pop %v721
      %v754 = vrcp.pop %v722
      %v755 = vrcp.pop %v723
      %v756 = vrcp.pop %v724
      %v757 = vrcp.pop %v725
      %v758 = vrcp.pop %v726
      %v759 = vrcp.pop %v727
      %v760 = vmax.f32 %v728, 0.0
      %v761 = vmax.f32 %v729, 0.0
      %v762 = vmax.f32 %v730, 0.0
      %v763 = vmax.f32 %v731, 0.0
      %v764 = vmax.f32 %v732, 0.0
      %v765 = vmax.f32 %v733, 0.0
      %v766 = vmax.f32 %v734, 0.0
      %v767 = vmax.f32 %v735, 0.0
      %v768 = vmax.f32 %v736, 0.0
      %v769 = vmax.f32 %v737, 0.0
      %v770 = vmax.f32 %v738, 0.0
      %v771 = vmax.f32 %v739, 0.0
      %v772 = vmax.f32 %v740, 0.0
      %v773 = vmax.f32 %v741, 0.0
      %v774 = vmax.f32 %v742, 0.0
      %v775 = vmax.f32 %v743, 0.0
      %v776 = vmax.f32 %v744, 0.0
      %v777 = vmax.f32 %v745, 0.0
      %v778 = vmax.f32 %v746, 0.0
      %v779 = vmax.f32 %v747, 0.0
      %v780 = vmax.f32 %v748, 0.0
      %v781 = vmax.f32 %v749, 0.0
      %v782 = vmax.f32 %v750, 0.0
      %v783 = vmax.f32 %v751, 0.0
      %v784 = vmax.f32 %v752, 0.0
      %v785 = vmax.f32 %v753, 0.0
      %v786 = vmax.f32 %v754, 0.0
      %v787 = vmax.f32 %v755, 0.0
      %v788 = vmax.f32 %v756, 0.0
      %v789 = vmax.f32 %v757, 0.0
      %v790 = vmax.f32 %v758, 0.0
      %v791 = vmax.f32 %v759, 0.0
      %v792 = vmin.f32 %v760, 1.0
      %v793 = vmin.f32 %v761, 1.0
      %v794 = vmin.f32 %v762, 1.0
      %v795 = vmin.f32 %v763, 1.0
      %v796 = vmin.f32 %v764, 1.0
      %v797 = vmin.f32 %v765, 1.0
      %v798 = vmin.f32 %v766, 1.0
      %v799 = vmin.f32 %v767, 1.0
      %v800 = vmin.f32 %v768, 1.0
      %v801 = vmin.f32 %v769, 1.0
      %v802 = vmin.f32 %v770, 1.0
      %v803 = vmin.f32 %v771, 1.0
      %v804 = vmin.f32 %v772, 1.0
      %v805 = vmin.f32 %v773, 1.0
      %v806 = vmin.f32 %v774, 1.0
      %v807 = vmin.f32 %v775, 1.0
      %v808 = vmin.f32 %v776, 1.0
      %v809 = vmin.f32 %v777, 1.0
      %v810 = vmin.f32 %v778, 1.0
      %v811 = vmin.f32 %v779, 1.0
      %v812 = vmin.f32 %v780, 1.0
      %v813 = vmin.f32 %v781, 1.0
      %v814 = vmin.f32 %v782, 1.0
      %v815 = vmin.f32 %v783, 1.0
      %v816 = vmin.f32 %v784, 1.0
      %v817 = vmin.f32 %v785, 1.0
      %v818 = vmin.f32 %v786, 1.0
      %v819 = vmin.f32 %v787, 1.0
      %v820 = vmin.f32 %v788, 1.0
      %v821 = vmin.f32 %v789, 1.0
      %v822 = vmin.f32 %v790, 1.0
      %v823 = vmin.f32 %v791, 1.0
      %vm824 = vcmask 31744
      %825 = vst.msk [vmem:[%s172] sm:$0xff] %vm824, %v792
      %826 = vst.msk [vmem:[%s172 + $0x8] sm:$0xff] %vm824, %v793
      %827 = vst.msk [vmem:[%s172 + $0x10] sm:$0xff] %vm824, %v794
      %828 = vst.msk [vmem:[%s172 + $0x18] sm:$0xff] %vm824, %v795
      %829 = vst.msk [vmem:[%s172 + $0x20] sm:$0xff] %vm824, %v796
      %830 = vst.msk [vmem:[%s172 + $0x28] sm:$0xff] %vm824, %v797
      %831 = vst.msk [vmem:[%s172 + $0x30] sm:$0xff] %vm824, %v798
      %832 = vst.msk [vmem:[%s172 + $0x38] sm:$0xff] %vm824, %v799
      %833 = vst.msk [vmem:[%s172 + $0x40] sm:$0xff] %vm824, %v800
      %834 = vst.msk [vmem:[%s172 + $0x48] sm:$0xff] %vm824, %v801
      %835 = vst.msk [vmem:[%s172 + $0x50] sm:$0xff] %vm824, %v802
      %836 = vst.msk [vmem:[%s172 + $0x58] sm:$0xff] %vm824, %v803
      %837 = vst.msk [vmem:[%s172 + $0x60] sm:$0xff] %vm824, %v804
      %838 = vst.msk [vmem:[%s172 + $0x68] sm:$0xff] %vm824, %v805
      %839 = vst.msk [vmem:[%s172 + $0x70] sm:$0xff] %vm824, %v806
      %840 = vst.msk [vmem:[%s172 + $0x78] sm:$0xff] %vm824, %v807
      %841 = vst.msk [vmem:[%s172 + $0x80] sm:$0xff] %vm824, %v808
      %842 = vst.msk [vmem:[%s172 + $0x88] sm:$0xff] %vm824, %v809
      %843 = vst.msk [vmem:[%s172 + $0x90] sm:$0xff] %vm824, %v810
      %844 = vst.msk [vmem:[%s172 + $0x98] sm:$0xff] %vm824, %v811
      %845 = vst.msk [vmem:[%s172 + $0xa0] sm:$0xff] %vm824, %v812
      %846 = vst.msk [vmem:[%s172 + $0xa8] sm:$0xff] %vm824, %v813
      %847 = vst.msk [vmem:[%s172 + $0xb0] sm:$0xff] %vm824, %v814
      %848 = vst.msk [vmem:[%s172 + $0xb8] sm:$0xff] %vm824, %v815
      %849 = vst.msk [vmem:[%s172 + $0xc0] sm:$0xff] %vm824, %v816
      %850 = vst.msk [vmem:[%s172 + $0xc8] sm:$0xff] %vm824, %v817
      %851 = vst.msk [vmem:[%s172 + $0xd0] sm:$0xff] %vm824, %v818
      %852 = vst.msk [vmem:[%s172 + $0xd8] sm:$0xff] %vm824, %v819
      %853 = vst.msk [vmem:[%s172 + $0xe0] sm:$0xff] %vm824, %v820
      %854 = vst.msk [vmem:[%s172 + $0xe8] sm:$0xff] %vm824, %v821
      %855 = vst.msk [vmem:[%s172 + $0xf0] sm:$0xff] %vm824, %v822
      %856 = vst.msk [vmem:[%s172 + $0xf8] sm:$0xff] %vm824, %v823
      %s857 = smul.u32 32, %s14
      %p858 = scmp.lt.s32.totalorder %s857, 63
      %s859 = scalar_select %p858, %s857, 63
      %s860 = smul.addr %s859, 8
      %s861 = scalar_lea.vmem %s3, %s860
      // Predicated region
      $region33: #{autoencoder_forward.11} parent=31 // pred_check
        %p862 = pneg %p100
      $region34: #{autoencoder_forward.11} parent=31 // pred_check_branch
        %864 = sbr.rel (%p862) target = $region36
      $region35: #{autoencoder_forward.11} parent=31 // pred_region
        %s865 = smul.u32 32, %s14
      $region36: #{autoencoder_forward.11} parent=31 // pred_fallthru
        _
    $region32: #{autoencoder_forward.11} parent=5 // pred_fallthru
      _
    %p866 = scmp.le.s32.totalorder 2, %s9
    // Predicated region
    $region37: #{autoencoder_forward.11} parent=5 // pred_check
      %p867 = pneg %p866
    $region38: #{autoencoder_forward.11} parent=5 // pred_check_branch
      %869 = sbr.rel (%p867) target = $region40
    $region39: #{autoencoder_forward.11} parent=5 // pred_region
      %s870 = ssub.s32 %s9, 2
      // Predicated region
      $region41: #{autoencoder_forward.11} parent=39 // pred_check
        %p871 = pneg %p106
      $region42: #{autoencoder_forward.11} parent=39 // pred_check_branch
        %873 = sbr.rel (%p871) target = $region44
      $region43: #{autoencoder_forward.11} parent=39 // pred_region
        %s874 = smul.u32 32, %s15
        %p875 = scmp.lt.s32.totalorder %s874, 63
        %s876 = scalar_select %p875, %s874, 63
        %s877 = smul.addr %s876, 8
        %s878 = scalar_lea.vmem %s3, %s877
      $region44: #{autoencoder_forward.11} parent=39 // pred_fallthru
        _
    $region40: #{autoencoder_forward.11} parent=5 // pred_fallthru
      _
  $region6: #{autoencoder_forward.11} parent=0 // loop_footer
    %s13 = sadd.s32 1, %s9
  $region7: #{autoencoder_forward.11} parent=0 // loop_footer_branch
    %8 = sbr.rel target = $region3
  $region8: #{autoencoder_forward.11} parent=0 // loop_exit
    _

</llo_original>
